<compile_context>
chip_gen: v7x
topology: tpu7x:2x2x1
jax: 0.10.0
libtpu: 0.0.40
codegen_flags: <defaults>
</compile_context>

<pallas_src>
import jax
import jax.numpy as jnp
from jax import lax
from jax.experimental import pallas as pl
from jax.experimental.pallas import tpu as pltpu
import numpy as np


_VMEM_LIMIT_BYTES = 64 * 1024 * 1024  # above default scoped limit on all gens,
                                      # within v7x's 64 MiB physical VMEM.


# ----------------------------------------------------------------------------
# Helpers
# ----------------------------------------------------------------------------
def _round_up(x, m):
    return ((x + m - 1) // m) * m


def _pick_time_block(T, max_tb=16):
    """Largest divisor of T that is <= max_tb (timesteps per grid step)."""
    for cand in range(min(T, max_tb), 0, -1):
        if T % cand == 0:
            return cand
    return 1


def _fuse_gate_weights(w):    # (3, A, H) gate-major [r, z, n] -> (A, 3H)
    return jnp.concatenate([w[0], w[1], w[2]], axis=-1)


def _fuse_gate_bias(b):       # (3, 1, H) -> (1, 3H)
    return jnp.concatenate([b[0], b[1], b[2]], axis=-1)


def _input_projection(x_tbi, wih_fused, bih_fused, mxu_dtype):
    """One large (T*B, I) x (I, 3H) matmul hoisted out of the recurrence."""
    T, B, I = x_tbi.shape
    g = jnp.dot(x_tbi.reshape(T * B, I).astype(mxu_dtype),
                wih_fused.astype(mxu_dtype),
                preferred_element_type=jnp.float32)
    return (g + bih_fused).reshape(T, B, -1)


# ----------------------------------------------------------------------------
# Pallas kernel: GRU recurrence over precomputed input gates.
# Grid iterates over time blocks of Tb steps; hidden state lives in VMEM
# scratch.  `reverse=True` runs the backward direction: blocks are visited in
# reversed order (via index_map) and steps within a block are iterated in
# reverse, while outputs are written at their forward-time positions.
# ----------------------------------------------------------------------------
def _make_gru_rec_kernel(tb, hidden, reverse):
    H = hidden
    order = tuple(range(tb - 1, -1, -1)) if reverse else tuple(range(tb))

    def kernel(gx_ref, whh_ref, bhh_ref, y_ref, h_state):
        @pl.when(pl.program_id(0) == 0)
        def _():
            h_state[...] = jnp.zeros_like(h_state)   # nn.GRU(hidden=None)

        h = h_state[...]                  # (B, H), f32
        for tt in order:                  # static unroll: Tb steps / grid step
            gx = gx_ref[tt]               # (B, 3H) = x @ Wih_fused + bih
            gh = jnp.dot(h.astype(whh_ref.dtype), whh_ref[...],
                         preferred_element_type=jnp.float32) + bhh_ref[...]
            r = jax.nn.sigmoid(gx[:, :H] + gh[:, :H])
            z = jax.nn.sigmoid(gx[:, H:2 * H] + gh[:, H:2 * H])
            n = jnp.tanh(gx[:, 2 * H:] + r * gh[:, 2 * H:])
            h = (1.0 - z) * n + z * h
            y_ref[tt] = h
        h_state[...] = h

    return kernel


def gru_recurrence(gates_tbg, whh_fused, bhh_fused, hidden, *, reverse,
                   time_block=None):
    """gates_tbg: (T, B, 3H) f32 (forward time order). Returns y: (T, B, H)
    hidden states in forward time order (also for the backward direction)."""
    T, B, G = gates_tbg.shape
    H = hidden
    tb = _pick_time_block(T) if time_block is None else time_block
    nb = T // tb

    if reverse:
        idx = lambda t: (nb - 1 - t, 0, 0)
    else:
        idx = lambda t: (t, 0, 0)

    grid_spec = pltpu.PrefetchScalarGridSpec(
        num_scalar_prefetch=0,
        grid=(nb,),
        in_specs=[
            pl.BlockSpec((tb, B, G), idx),
            pl.BlockSpec((H, G), lambda t: (0, 0)),
            pl.BlockSpec((1, G), lambda t: (0, 0)),
        ],
        out_specs=pl.BlockSpec((tb, B, H), idx),
        scratch_shapes=[pltpu.VMEM((B, H), jnp.float32)],
    )
    return pl.pallas_call(
        _make_gru_rec_kernel(tb, H, reverse),
        grid_spec=grid_spec,
        out_shape=jax.ShapeDtypeStruct((T, B, H), jnp.float32),
        compiler_params=pltpu.CompilerParams(
            dimension_semantics=("arbitrary",),
            vmem_limit_bytes=_VMEM_LIMIT_BYTES),
    )(gates_tbg, whh_fused, bhh_fused)


# ----------------------------------------------------------------------------
# Encoder: 2-layer bidirectional GRU.
# ----------------------------------------------------------------------------
def encoder_forward(inputs_bti, enc_params, *, mxu_dtype=jnp.float32):
    B, T, _ = inputs_bti.shape
    layer_in = jnp.transpose(inputs_bti, (1, 0, 2))      # time-major (T, B, I)
    h_finals = []
    y_f = y_b = None
    for layer in range(2):
        pf = enc_params[f"l{layer}_fwd"]
        pb = enc_params[f"l{layer}_bwd"]
        H = pf["whh"].shape[-1]
        y_dirs = []
        for params, reverse in ((pf, False), (pb, True)):
            wih = _fuse_gate_weights(params["wih"])
            bih = _fuse_gate_bias(params["bih"])
            whh = _fuse_gate_weights(params["whh"]).astype(mxu_dtype)
            bhh = _fuse_gate_bias(params["bhh"])
            gates = _input_projection(layer_in, wih, bih, mxu_dtype)
            y_dirs.append(gru_recurrence(gates, whh, bhh, H, reverse=reverse))
        y_f, y_b = y_dirs
        # Final hidden states: fwd at t = T-1, bwd at t = 0 (no per-step hT
        # writes needed since outputs are stored in forward-time order).
        h_finals += [y_f[T - 1], y_b[0]]
        layer_in = jnp.concatenate([y_f, y_b], axis=-1)
        # TODO(synk): nn.GRU inter-layer dropout (p=0.2, training mode) is
        # stochastic and omitted here.
    enc_y = jnp.transpose(y_f + y_b, (1, 0, 2))          # (B, T, H)
    c_hid = (h_finals[0] + h_finals[1] + h_finals[2] + h_finals[3]) / 4.0
    return enc_y, c_hid


# ----------------------------------------------------------------------------
# Pallas kernel: full decoder loop (fused embedding+input projection, GRUCell,
# fc, scheduled sampling).  Vocabulary padded to Vp = multiple of 128 so all
# per-step stores / one-hots are lane-dense; padded logits are -inf.  The grid
# iterates over blocks of Lb decoder steps (static unrolled).
# ----------------------------------------------------------------------------
def _make_decoder_kernel(hidden, start_token, lb):
    H = hidden

    def kernel(use_sample_ref, tok_ref, ew_ref, chid_ref, whh_ref, bhh_ref,
               wfc_ref, bfc_ref, pre_ref, h_state, oh_state):
        i = pl.program_id(0)
        B, Vp = oh_state.shape
        iota = lax.broadcasted_iota(jnp.int32, (B, Vp), 1)

        @pl.when(i == 0)
        def _():
            h_state[...] = chid_ref[...]
            oh_state[...] = (iota == start_token).astype(jnp.float32)

        mxu_dt = ew_ref.dtype
        onehot = oh_state[...]                     # (B, Vp)
        h = h_state[...]                           # (B, H)

        for tt in range(lb):                       # static unroll: Lb steps
            # Embedding fused with input projection: onehot @ (E@Wih + bih).
            gx = jnp.dot(onehot.astype(mxu_dt), ew_ref[...],
                         preferred_element_type=jnp.float32)
            gh = jnp.dot(h.astype(mxu_dt), whh_ref[...],
                         preferred_element_type=jnp.float32) + bhh_ref[...]
            r = jax.nn.sigmoid(gx[:, :H] + gh[:, :H])
            z = jax.nn.sigmoid(gx[:, H:2 * H] + gh[:, H:2 * H])
            n = jnp.tanh(gx[:, 2 * H:] + r * gh[:, 2 * H:])
            h = (1.0 - z) * n + z * h

            out = jnp.dot(h.astype(mxu_dt), wfc_ref[...],
                          preferred_element_type=jnp.float32) + bfc_ref[...]
            pre_ref[tt] = out                      # lane-dense (B, Vp) store

            # Scheduled sampling: argmax one-hot (first-max semantics, padded
            # lanes have -inf logits) vs teacher one-hot built from the token.
            mx = jnp.max(out, axis=-1, keepdims=True)
            idx = jnp.min(jnp.where(out == mx, iota, Vp), axis=-1,
                          keepdims=True)
            argmax_oh = (iota == idx).astype(jnp.float32)
            teacher_oh = (iota == tok_ref[tt]).astype(jnp.float32)   # (B,1) tok
            sel = (use_sample_ref[i * lb + tt] > 0).astype(jnp.float32)
            onehot = sel * argmax_oh + (1.0 - sel) * teacher_oh

        h_state[...] = h
        oh_state[...] = onehot

    return kernel


def decoder_forward(targets, c_hid, use_sample, params, *, mxu_dtype=jnp.float32):
    """targets: (B, L) int32, c_hid: (B, H). Returns pre: (B, L, V)."""
    B, L = targets.shape
    E = params["embedding"]
    V, H = E.shape
    Vp = _round_up(V, 128)
    pad = Vp - V

    wih = _fuse_gate_weights(params["dec_wih"])            # (H, 3H)
    bih = _fuse_gate_bias(params["dec_bih"])               # (1, 3H)
    whh = _fuse_gate_weights(params["dec_whh"]).astype(mxu_dtype)
    bhh = _fuse_gate_bias(params["dec_bhh"])

    # Fused embedding + decoder input projection (bih folded into the rows).
    ew = jnp.dot(E, wih, preferred_element_type=jnp.float32) + bih   # (V, 3H)
    ew = jnp.pad(ew, ((0, pad), (0, 0))).astype(mxu_dtype)           # (Vp, 3H)

    wfc = jnp.pad(params["fc_w"], ((0, 0), (0, pad))).astype(mxu_dtype)  # (H, Vp)
    bfc = jnp.pad(params["fc_b"], ((0, 0), (0, pad)),
                  constant_values=-1e30)                             # (1, Vp) f32

    # Teacher tokens, time-major, trailing singleton so the in-kernel one-hot
    # is a (B, Vp) iota compare (no (L, B, Vp) one-hot in HBM).
    tok_lb1 = jnp.transpose(targets, (1, 0))[:, :, None].astype(jnp.int32)

    lb = _pick_time_block(L, max_tb=8)
    nb = L // lb

    grid_spec = pltpu.PrefetchScalarGridSpec(
        num_scalar_prefetch=1,
        grid=(nb,),
        in_specs=[
            pl.BlockSpec((lb, B, 1), lambda i, us: (i, 0, 0)),
            pl.BlockSpec((Vp, 3 * H), lambda i, us: (0, 0)),
            pl.BlockSpec((B, H), lambda i, us: (0, 0)),
            pl.BlockSpec((H, 3 * H), lambda i, us: (0, 0)),
            pl.BlockSpec((1, 3 * H), lambda i, us: (0, 0)),
            pl.BlockSpec((H, Vp), lambda i, us: (0, 0)),
            pl.BlockSpec((1, Vp), lambda i, us: (0, 0)),
        ],
        out_specs=pl.BlockSpec((lb, B, Vp), lambda i, us: (i, 0, 0)),
        scratch_shapes=[pltpu.VMEM((B, H), jnp.float32),
                        pltpu.VMEM((B, Vp), jnp.float32)],
    )
    pre_lbv = pl.pallas_call(
        _make_decoder_kernel(H, V - 2, lb),     # start token = CLASS_LENGTH - 2
        grid_spec=grid_spec,
        out_shape=jax.ShapeDtypeStruct((L, B, Vp), jnp.float32),
        compiler_params=pltpu.CompilerParams(
            dimension_semantics=("arbitrary",),
            vmem_limit_bytes=_VMEM_LIMIT_BYTES),
    )(use_sample, tok_lb1, ew, c_hid, whh, bhh, wfc, bfc)
    return jnp.transpose(pre_lbv[:, :, :V], (1, 0, 2))     # (B, L, V)


def seq2seq_forward(inputs, targets, use_sample, enc_params, dec_params,
                    mxu_dtype=jnp.float32):
    enc_y, c_hid = encoder_forward(inputs, enc_params, mxu_dtype=mxu_dtype)
    # add_attention is None in the module, so enc_y is unused by the decoder.
    del enc_y
    return decoder_forward(targets, c_hid, use_sample, dec_params,
                           mxu_dtype=mxu_dtype)


# ----------------------------------------------------------------------------
# Pure-JAX reference (same math, no Pallas) used for a correctness check.
# ----------------------------------------------------------------------------
def _gru_cell_ref(x, h, wih, whh, bih, bhh):
    r = jax.nn.sigmoid(x @ wih[0] + bih[0] + h @ whh[0] + bhh[0])
    z = jax.nn.sigmoid(x @ wih[1] + bih[1] + h @ whh[1] + bhh[1])
    n = jnp.tanh(x @ wih[2] + bih[2] + r * (h @ whh[2] + bhh[2]))
    return (1.0 - z) * n + z * h


def _gru_seq_ref(x_tbi, h0, wih, whh, bih, bhh):
    h = h0
    ys = []
    for t in range(x_tbi.shape[0]):
        h = _gru_cell_ref(x_tbi[t], h, wih, whh, bih, bhh)
        ys.append(h)
    return jnp.stack(ys, 0), h


def _encoder_ref(inputs, enc_params):
    B, T, _ = inputs.shape
    layer_in = jnp.transpose(inputs, (1, 0, 2))
    h_finals = []
    y_f = y_b = None
    for layer in range(2):
        pf = enc_params[f"l{layer}_fwd"]
        pb = enc_params[f"l{layer}_bwd"]
        H = pf["whh"].shape[-1]
        h0 = jnp.zeros((B, H), jnp.float32)
        y_f, h_f = _gru_seq_ref(layer_in, h0, pf["wih"], pf["whh"],
                                pf["bih"], pf["bhh"])
        y_b_rev, h_b = _gru_seq_ref(layer_in[::-1], h0, pb["wih"], pb["whh"],
                                    pb["bih"], pb["bhh"])
        y_b = y_b_rev[::-1]
        h_finals += [h_f, h_b]
        layer_in = jnp.concatenate([y_f, y_b], axis=-1)
    enc_y = jnp.transpose(y_f + y_b, (1, 0, 2))
    c_hid = (h_finals[0] + h_finals[1] + h_finals[2] + h_finals[3]) / 4.0
    return enc_y, c_hid


def _decoder_ref(targets, c_hid, use_sample, params):
    B, L = targets.shape
    E = params["embedding"]
    V, _ = E.shape
    target_i = jnp.full((B,), V - 2, jnp.int32)
    h = c_hid
    outs = []
    for i in range(L):
        emb = E[target_i]
        h = _gru_cell_ref(emb, h, params["dec_wih"], params["dec_whh"],
                          params["dec_bih"], params["dec_bhh"])
        out = h @ params["fc_w"] + params["fc_b"][0]
        outs.append(out)
        target_i = jnp.where(use_sample[i] > 0,
                             jnp.argmax(out, axis=-1).astype(jnp.int32),
                             targets[:, i])
    return jnp.stack(outs, axis=1)


def _seq2seq_ref(inputs, targets, use_sample, enc_params, dec_params):
    _, c_hid = _encoder_ref(inputs, enc_params)
    return _decoder_ref(targets, c_hid, use_sample, dec_params)


# ----------------------------------------------------------------------------
if __name__ == "__main__":
    key = jax.random.PRNGKey(0)
    B, T, L = 2, 8, 6          # batch, audio length, target length
    INPUT = 16                 # cfg.TRAIN.AUDIO_FEATURE_LENGTH (small synthetic)
    H = 32                     # hidden_size (1024 in the real module)
    V = 12                     # cfg.TRAIN.CLASS_LENGTH
    sample_rate = 0.3

    keys = jax.random.split(key, 8)
    inputs = jax.random.normal(keys[0], (B, T, INPUT), jnp.float32)
    targets = jax.random.randint(keys[1], (B, L), 0, V, dtype=jnp.int32)
    # TODO(synk): the module uses python random.random() per step for scheduled
    # sampling; replaced by a deterministic precomputed mask with the same rate.
    use_sample = (jax.random.uniform(keys[2], (L,)) < sample_rate).astype(jnp.int32)

    def init(k, shape, scale=0.1):
        return scale * jax.random.normal(k, shape, jnp.float32)

    pkeys = iter(jax.random.split(keys[3], 64))
    enc_params = {}
    for layer, I_l in enumerate([INPUT, 2 * H]):
        for d in ("fwd", "bwd"):
            enc_params[f"l{layer}_{d}"] = dict(
                wih=init(next(pkeys), (3, I_l, H)),
                whh=init(next(pkeys), (3, H, H)),
                bih=init(next(pkeys), (3, 1, H)),
                bhh=init(next(pkeys), (3, 1, H)),
            )
    dec_params = dict(
        embedding=init(next(pkeys), (V, H)),
        dec_wih=init(next(pkeys), (3, H, H)),
        dec_whh=init(next(pkeys), (3, H, H)),
        dec_bih=init(next(pkeys), (3, 1, H)),
        dec_bhh=init(next(pkeys), (3, 1, H)),
        fc_w=init(next(pkeys), (H, V)),
        fc_b=init(next(pkeys), (1, V)),
    )

    fwd = jax.jit(seq2seq_forward, static_argnames=("mxu_dtype",))

    # f32 MXU path: checked against the pure-JAX reference.
    pre = jax.block_until_ready(
        fwd(inputs, targets, use_sample, enc_params, dec_params,
            mxu_dtype=jnp.float32))
    assert pre.shape == (B, L, V) and pre.dtype == jnp.float32

    ref = jax.block_until_ready(
        _seq2seq_ref(inputs, targets, use_sample, enc_params, dec_params))
    np.testing.assert_allclose(np.asarray(pre), np.asarray(ref),
                               rtol=1e-4, atol=1e-4)

    # bf16 MXU path (v6e/v7x fast path, f32 accumulation + f32 gate math):
    # smoke test only — scheduled-sampling argmax may legitimately diverge
    # under reduced matmul precision.
    pre_bf16 = jax.block_until_ready(
        fwd(inputs, targets, use_sample, enc_params, dec_params,
            mxu_dtype=jnp.bfloat16))
    assert pre_bf16.shape == (B, L, V)
    assert bool(jnp.all(jnp.isfinite(pre_bf16)))

    print("KERNEL_OK")
</pallas_src>

<mosaic_0001>
module attributes {stable_mosaic.version = 11 : i64} {
  func.func @kernel(%arg0: i32, %arg1: memref<8x2x96xf32, #tpu.memory_space<vmem>>, %arg2: memref<32x96xf32, #tpu.memory_space<vmem>>, %arg3: memref<1x96xf32, #tpu.memory_space<vmem>>, %arg4: memref<8x2x32xf32, #tpu.memory_space<vmem>>, %arg5: memref<2x32xf32, #tpu.memory_space<vmem>>) attributes {dimension_semantics = [#tpu.dimension_semantics<arbitrary>], iteration_bounds = array<i64: 1>, scalar_prefetch = 0 : i64, scratch_operands = 1 : i64, tpu.core_type = #tpu.core_type<tc>, window_params = [{transform_indices = @transform_0, window_bounds = array<i64: 8, 2, 96>}, {pipeline_mode = #tpu.pipeline_mode<synchronous>, transform_indices = @transform_1, window_bounds = array<i64: 32, 96>}, {pipeline_mode = #tpu.pipeline_mode<synchronous>, transform_indices = @transform_2, window_bounds = array<i64: 1, 96>}, {transform_indices = @transform_3, window_bounds = array<i64: 8, 2, 32>}]} {
    %c0_i32 = arith.constant 0 : i32
    %0 = arith.cmpi eq, %arg0, %c0_i32 : i32
    %1 = arith.extui %0 : i1 to i32
    %c0_i32_0 = arith.constant 0 : i32
    %2 = arith.cmpi ne, %1, %c0_i32_0 : i32
    scf.if %2 {
      %cst_108 = arith.constant 0.000000e+00 : f32
      %293 = vector.broadcast %cst_108 : f32 to vector<2x32xf32>
      %c0_109 = arith.constant 0 : index
      %c0_110 = arith.constant 0 : index
      %294 = vector.load %arg5[%c0_109, %c0_110] : memref<2x32xf32, #tpu.memory_space<vmem>>, vector<2x32xf32>
      tpu.vector_store %arg5[%c0_109, %c0_110], %293 {strides = array<i32>} : memref<2x32xf32, #tpu.memory_space<vmem>>, vector<2x32xf32>,
    } else {
    }
    %c0 = arith.constant 0 : index
    %c0_1 = arith.constant 0 : index
    %3 = vector.load %arg5[%c0, %c0_1] : memref<2x32xf32, #tpu.memory_space<vmem>>, vector<2x32xf32>
    %c0_2 = arith.constant 0 : index
    %c0_3 = arith.constant 0 : index
    %c0_4 = arith.constant 0 : index
    %4 = vector.load %arg1[%c0_2, %c0_3, %c0_4] : memref<8x2x96xf32, #tpu.memory_space<vmem>>, vector<1x2x96xf32>
    %5 = vector.shape_cast %4 : vector<1x2x96xf32> to vector<2x96xf32>
    %c0_5 = arith.constant 0 : index
    %c0_6 = arith.constant 0 : index
    %6 = vector.load %arg2[%c0_5, %c0_6] : memref<32x96xf32, #tpu.memory_space<vmem>>, vector<32x96xf32>
    %cst = arith.constant dense<0.000000e+00> : vector<2x96xf32>
    %7 = tpu.matmul %3, %6, %cst {dimension_numbers = #tpu.dot_dimension_numbers<[1], [0], [0], [1], [0, 0, 1, 1], [], []>} : vector<2x32xf32>, vector<32x96xf32>, vector<2x96xf32> -> vector<2x96xf32>
    %c0_7 = arith.constant 0 : index
    %c0_8 = arith.constant 0 : index
    %8 = vector.load %arg3[%c0_7, %c0_8] : memref<1x96xf32, #tpu.memory_space<vmem>>, vector<1x96xf32>
    %9 = vector.broadcast %8 : vector<1x96xf32> to vector<2x96xf32>
    %10 = arith.addf %7, %9 : vector<2x96xf32>
    %11 = vector.extract_strided_slice %5 {offsets = [0, 0], sizes = [2, 32], strides = [1, 1]} : vector<2x96xf32> to vector<2x32xf32>
    %12 = vector.extract_strided_slice %10 {offsets = [0, 0], sizes = [2, 32], strides = [1, 1]} : vector<2x96xf32> to vector<2x32xf32>
    %13 = arith.addf %11, %12 : vector<2x32xf32>
    %14 = arith.negf %13 : vector<2x32xf32>
    %15 = math.exp %14 : vector<2x32xf32>
    %cst_9 = arith.constant 1.000000e+00 : f32
    %16 = vector.broadcast %cst_9 : f32 to vector<2x32xf32>
    %17 = arith.addf %16, %15 : vector<2x32xf32>
    %18 = arith.divf %16, %17 : vector<2x32xf32>
    %19 = vector.extract_strided_slice %5 {offsets = [0, 32], sizes = [2, 32], strides = [1, 1]} : vector<2x96xf32> to vector<2x32xf32>
    %20 = vector.extract_strided_slice %10 {offsets = [0, 32], sizes = [2, 32], strides = [1, 1]} : vector<2x96xf32> to vector<2x32xf32>
    %21 = arith.addf %19, %20 : vector<2x32xf32>
    %22 = arith.negf %21 : vector<2x32xf32>
    %23 = math.exp %22 : vector<2x32xf32>
    %cst_10 = arith.constant 1.000000e+00 : f32
    %24 = vector.broadcast %cst_10 : f32 to vector<2x32xf32>
    %25 = arith.addf %24, %23 : vector<2x32xf32>
    %26 = arith.divf %24, %25 : vector<2x32xf32>
    %27 = vector.extract_strided_slice %5 {offsets = [0, 64], sizes = [2, 32], strides = [1, 1]} : vector<2x96xf32> to vector<2x32xf32>
    %28 = vector.extract_strided_slice %10 {offsets = [0, 64], sizes = [2, 32], strides = [1, 1]} : vector<2x96xf32> to vector<2x32xf32>
    %29 = arith.mulf %18, %28 : vector<2x32xf32>
    %30 = arith.addf %27, %29 : vector<2x32xf32>
    %31 = math.tanh %30 : vector<2x32xf32>
    %cst_11 = arith.constant 1.000000e+00 : f32
    %32 = vector.broadcast %cst_11 : f32 to vector<2x32xf32>
    %33 = arith.subf %32, %26 : vector<2x32xf32>
    %34 = arith.mulf %33, %31 : vector<2x32xf32>
    %35 = arith.mulf %26, %3 : vector<2x32xf32>
    %36 = arith.addf %34, %35 : vector<2x32xf32>
    %c0_12 = arith.constant 0 : index
    %c0_13 = arith.constant 0 : index
    %c0_14 = arith.constant 0 : index
    %37 = vector.load %arg4[%c0_12, %c0_13, %c0_14] : memref<8x2x32xf32, #tpu.memory_space<vmem>>, vector<1x2x32xf32>
    %38 = vector.shape_cast %37 : vector<1x2x32xf32> to vector<2x32xf32>
    %39 = vector.shape_cast %36 : vector<2x32xf32> to vector<1x2x32xf32>
    tpu.vector_store %arg4[%c0_12, %c0_13, %c0_14], %39 {strides = array<i32>} : memref<8x2x32xf32, #tpu.memory_space<vmem>>, vector<1x2x32xf32>,
    %c1 = arith.constant 1 : index
    %c0_15 = arith.constant 0 : index
    %c0_16 = arith.constant 0 : index
    %40 = vector.load %arg1[%c1, %c0_15, %c0_16] : memref<8x2x96xf32, #tpu.memory_space<vmem>>, vector<1x2x96xf32>
    %41 = vector.shape_cast %40 : vector<1x2x96xf32> to vector<2x96xf32>
    %c0_17 = arith.constant 0 : index
    %c0_18 = arith.constant 0 : index
    %42 = vector.load %arg2[%c0_17, %c0_18] : memref<32x96xf32, #tpu.memory_space<vmem>>, vector<32x96xf32>
    %cst_19 = arith.constant dense<0.000000e+00> : vector<2x96xf32>
    %43 = tpu.matmul %36, %42, %cst_19 {dimension_numbers = #tpu.dot_dimension_numbers<[1], [0], [0], [1], [0, 0, 1, 1], [], []>} : vector<2x32xf32>, vector<32x96xf32>, vector<2x96xf32> -> vector<2x96xf32>
    %c0_20 = arith.constant 0 : index
    %c0_21 = arith.constant 0 : index
    %44 = vector.load %arg3[%c0_20, %c0_21] : memref<1x96xf32, #tpu.memory_space<vmem>>, vector<1x96xf32>
    %45 = vector.broadcast %44 : vector<1x96xf32> to vector<2x96xf32>
    %46 = arith.addf %43, %45 : vector<2x96xf32>
    %47 = vector.extract_strided_slice %41 {offsets = [0, 0], sizes = [2, 32], strides = [1, 1]} : vector<2x96xf32> to vector<2x32xf32>
    %48 = vector.extract_strided_slice %46 {offsets = [0, 0], sizes = [2, 32], strides = [1, 1]} : vector<2x96xf32> to vector<2x32xf32>
    %49 = arith.addf %47, %48 : vector<2x32xf32>
    %50 = arith.negf %49 : vector<2x32xf32>
    %51 = math.exp %50 : vector<2x32xf32>
    %cst_22 = arith.constant 1.000000e+00 : f32
    %52 = vector.broadcast %cst_22 : f32 to vector<2x32xf32>
    %53 = arith.addf %52, %51 : vector<2x32xf32>
    %54 = arith.divf %52, %53 : vector<2x32xf32>
    %55 = vector.extract_strided_slice %41 {offsets = [0, 32], sizes = [2, 32], strides = [1, 1]} : vector<2x96xf32> to vector<2x32xf32>
    %56 = vector.extract_strided_slice %46 {offsets = [0, 32], sizes = [2, 32], strides = [1, 1]} : vector<2x96xf32> to vector<2x32xf32>
    %57 = arith.addf %55, %56 : vector<2x32xf32>
    %58 = arith.negf %57 : vector<2x32xf32>
    %59 = math.exp %58 : vector<2x32xf32>
    %cst_23 = arith.constant 1.000000e+00 : f32
    %60 = vector.broadcast %cst_23 : f32 to vector<2x32xf32>
    %61 = arith.addf %60, %59 : vector<2x32xf32>
    %62 = arith.divf %60, %61 : vector<2x32xf32>
    %63 = vector.extract_strided_slice %41 {offsets = [0, 64], sizes = [2, 32], strides = [1, 1]} : vector<2x96xf32> to vector<2x32xf32>
    %64 = vector.extract_strided_slice %46 {offsets = [0, 64], sizes = [2, 32], strides = [1, 1]} : vector<2x96xf32> to vector<2x32xf32>
    %65 = arith.mulf %54, %64 : vector<2x32xf32>
    %66 = arith.addf %63, %65 : vector<2x32xf32>
    %67 = math.tanh %66 : vector<2x32xf32>
    %cst_24 = arith.constant 1.000000e+00 : f32
    %68 = vector.broadcast %cst_24 : f32 to vector<2x32xf32>
    %69 = arith.subf %68, %62 : vector<2x32xf32>
    %70 = arith.mulf %69, %67 : vector<2x32xf32>
    %71 = arith.mulf %62, %36 : vector<2x32xf32>
    %72 = arith.addf %70, %71 : vector<2x32xf32>
    %c1_25 = arith.constant 1 : index
    %c0_26 = arith.constant 0 : index
    %c0_27 = arith.constant 0 : index
    %73 = vector.load %arg4[%c1_25, %c0_26, %c0_27] : memref<8x2x32xf32, #tpu.memory_space<vmem>>, vector<1x2x32xf32>
    %74 = vector.shape_cast %73 : vector<1x2x32xf32> to vector<2x32xf32>
    %75 = vector.shape_cast %72 : vector<2x32xf32> to vector<1x2x32xf32>
    tpu.vector_store %arg4[%c1_25, %c0_26, %c0_27], %75 {strides = array<i32>} : memref<8x2x32xf32, #tpu.memory_space<vmem>>, vector<1x2x32xf32>,
    %c2 = arith.constant 2 : index
    %c0_28 = arith.constant 0 : index
    %c0_29 = arith.constant 0 : index
    %76 = vector.load %arg1[%c2, %c0_28, %c0_29] : memref<8x2x96xf32, #tpu.memory_space<vmem>>, vector<1x2x96xf32>
    %77 = vector.shape_cast %76 : vector<1x2x96xf32> to vector<2x96xf32>
    %c0_30 = arith.constant 0 : index
    %c0_31 = arith.constant 0 : index
    %78 = vector.load %arg2[%c0_30, %c0_31] : memref<32x96xf32, #tpu.memory_space<vmem>>, vector<32x96xf32>
    %cst_32 = arith.constant dense<0.000000e+00> : vector<2x96xf32>
    %79 = tpu.matmul %72, %78, %cst_32 {dimension_numbers = #tpu.dot_dimension_numbers<[1], [0], [0], [1], [0, 0, 1, 1], [], []>} : vector<2x32xf32>, vector<32x96xf32>, vector<2x96xf32> -> vector<2x96xf32>
    %c0_33 = arith.constant 0 : index
    %c0_34 = arith.constant 0 : index
    %80 = vector.load %arg3[%c0_33, %c0_34] : memref<1x96xf32, #tpu.memory_space<vmem>>, vector<1x96xf32>
    %81 = vector.broadcast %80 : vector<1x96xf32> to vector<2x96xf32>
    %82 = arith.addf %79, %81 : vector<2x96xf32>
    %83 = vector.extract_strided_slice %77 {offsets = [0, 0], sizes = [2, 32], strides = [1, 1]} : vector<2x96xf32> to vector<2x32xf32>
    %84 = vector.extract_strided_slice %82 {offsets = [0, 0], sizes = [2, 32], strides = [1, 1]} : vector<2x96xf32> to vector<2x32xf32>
    %85 = arith.addf %83, %84 : vector<2x32xf32>
    %86 = arith.negf %85 : vector<2x32xf32>
    %87 = math.exp %86 : vector<2x32xf32>
    %cst_35 = arith.constant 1.000000e+00 : f32
    %88 = vector.broadcast %cst_35 : f32 to vector<2x32xf32>
    %89 = arith.addf %88, %87 : vector<2x32xf32>
    %90 = arith.divf %88, %89 : vector<2x32xf32>
    %91 = vector.extract_strided_slice %77 {offsets = [0, 32], sizes = [2, 32], strides = [1, 1]} : vector<2x96xf32> to vector<2x32xf32>
    %92 = vector.extract_strided_slice %82 {offsets = [0, 32], sizes = [2, 32], strides = [1, 1]} : vector<2x96xf32> to vector<2x32xf32>
    %93 = arith.addf %91, %92 : vector<2x32xf32>
    %94 = arith.negf %93 : vector<2x32xf32>
    %95 = math.exp %94 : vector<2x32xf32>
    %cst_36 = arith.constant 1.000000e+00 : f32
    %96 = vector.broadcast %cst_36 : f32 to vector<2x32xf32>
    %97 = arith.addf %96, %95 : vector<2x32xf32>
    %98 = arith.divf %96, %97 : vector<2x32xf32>
    %99 = vector.extract_strided_slice %77 {offsets = [0, 64], sizes = [2, 32], strides = [1, 1]} : vector<2x96xf32> to vector<2x32xf32>
    %100 = vector.extract_strided_slice %82 {offsets = [0, 64], sizes = [2, 32], strides = [1, 1]} : vector<2x96xf32> to vector<2x32xf32>
    %101 = arith.mulf %90, %100 : vector<2x32xf32>
    %102 = arith.addf %99, %101 : vector<2x32xf32>
    %103 = math.tanh %102 : vector<2x32xf32>
    %cst_37 = arith.constant 1.000000e+00 : f32
    %104 = vector.broadcast %cst_37 : f32 to vector<2x32xf32>
    %105 = arith.subf %104, %98 : vector<2x32xf32>
    %106 = arith.mulf %105, %103 : vector<2x32xf32>
    %107 = arith.mulf %98, %72 : vector<2x32xf32>
    %108 = arith.addf %106, %107 : vector<2x32xf32>
    %c2_38 = arith.constant 2 : index
    %c0_39 = arith.constant 0 : index
    %c0_40 = arith.constant 0 : index
    %109 = vector.load %arg4[%c2_38, %c0_39, %c0_40] : memref<8x2x32xf32, #tpu.memory_space<vmem>>, vector<1x2x32xf32>
    %110 = vector.shape_cast %109 : vector<1x2x32xf32> to vector<2x32xf32>
    %111 = vector.shape_cast %108 : vector<2x32xf32> to vector<1x2x32xf32>
    tpu.vector_store %arg4[%c2_38, %c0_39, %c0_40], %111 {strides = array<i32>} : memref<8x2x32xf32, #tpu.memory_space<vmem>>, vector<1x2x32xf32>,
    %c3 = arith.constant 3 : index
    %c0_41 = arith.constant 0 : index
    %c0_42 = arith.constant 0 : index
    %112 = vector.load %arg1[%c3, %c0_41, %c0_42] : memref<8x2x96xf32, #tpu.memory_space<vmem>>, vector<1x2x96xf32>
    %113 = vector.shape_cast %112 : vector<1x2x96xf32> to vector<2x96xf32>
    %c0_43 = arith.constant 0 : index
    %c0_44 = arith.constant 0 : index
    %114 = vector.load %arg2[%c0_43, %c0_44] : memref<32x96xf32, #tpu.memory_space<vmem>>, vector<32x96xf32>
    %cst_45 = arith.constant dense<0.000000e+00> : vector<2x96xf32>
    %115 = tpu.matmul %108, %114, %cst_45 {dimension_numbers = #tpu.dot_dimension_numbers<[1], [0], [0], [1], [0, 0, 1, 1], [], []>} : vector<2x32xf32>, vector<32x96xf32>, vector<2x96xf32> -> vector<2x96xf32>
    %c0_46 = arith.constant 0 : index
    %c0_47 = arith.constant 0 : index
    %116 = vector.load %arg3[%c0_46, %c0_47] : memref<1x96xf32, #tpu.memory_space<vmem>>, vector<1x96xf32>
    %117 = vector.broadcast %116 : vector<1x96xf32> to vector<2x96xf32>
    %118 = arith.addf %115, %117 : vector<2x96xf32>
    %119 = vector.extract_strided_slice %113 {offsets = [0, 0], sizes = [2, 32], strides = [1, 1]} : vector<2x96xf32> to vector<2x32xf32>
    %120 = vector.extract_strided_slice %118 {offsets = [0, 0], sizes = [2, 32], strides = [1, 1]} : vector<2x96xf32> to vector<2x32xf32>
    %121 = arith.addf %119, %120 : vector<2x32xf32>
    %122 = arith.negf %121 : vector<2x32xf32>
    %123 = math.exp %122 : vector<2x32xf32>
    %cst_48 = arith.constant 1.000000e+00 : f32
    %124 = vector.broadcast %cst_48 : f32 to vector<2x32xf32>
    %125 = arith.addf %124, %123 : vector<2x32xf32>
    %126 = arith.divf %124, %125 : vector<2x32xf32>
    %127 = vector.extract_strided_slice %113 {offsets = [0, 32], sizes = [2, 32], strides = [1, 1]} : vector<2x96xf32> to vector<2x32xf32>
    %128 = vector.extract_strided_slice %118 {offsets = [0, 32], sizes = [2, 32], strides = [1, 1]} : vector<2x96xf32> to vector<2x32xf32>
    %129 = arith.addf %127, %128 : vector<2x32xf32>
    %130 = arith.negf %129 : vector<2x32xf32>
    %131 = math.exp %130 : vector<2x32xf32>
    %cst_49 = arith.constant 1.000000e+00 : f32
    %132 = vector.broadcast %cst_49 : f32 to vector<2x32xf32>
    %133 = arith.addf %132, %131 : vector<2x32xf32>
    %134 = arith.divf %132, %133 : vector<2x32xf32>
    %135 = vector.extract_strided_slice %113 {offsets = [0, 64], sizes = [2, 32], strides = [1, 1]} : vector<2x96xf32> to vector<2x32xf32>
    %136 = vector.extract_strided_slice %118 {offsets = [0, 64], sizes = [2, 32], strides = [1, 1]} : vector<2x96xf32> to vector<2x32xf32>
    %137 = arith.mulf %126, %136 : vector<2x32xf32>
    %138 = arith.addf %135, %137 : vector<2x32xf32>
    %139 = math.tanh %138 : vector<2x32xf32>
    %cst_50 = arith.constant 1.000000e+00 : f32
    %140 = vector.broadcast %cst_50 : f32 to vector<2x32xf32>
    %141 = arith.subf %140, %134 : vector<2x32xf32>
    %142 = arith.mulf %141, %139 : vector<2x32xf32>
    %143 = arith.mulf %134, %108 : vector<2x32xf32>
    %144 = arith.addf %142, %143 : vector<2x32xf32>
    %c3_51 = arith.constant 3 : index
    %c0_52 = arith.constant 0 : index
    %c0_53 = arith.constant 0 : index
    %145 = vector.load %arg4[%c3_51, %c0_52, %c0_53] : memref<8x2x32xf32, #tpu.memory_space<vmem>>, vector<1x2x32xf32>
    %146 = vector.shape_cast %145 : vector<1x2x32xf32> to vector<2x32xf32>
    %147 = vector.shape_cast %144 : vector<2x32xf32> to vector<1x2x32xf32>
    tpu.vector_store %arg4[%c3_51, %c0_52, %c0_53], %147 {strides = array<i32>} : memref<8x2x32xf32, #tpu.memory_space<vmem>>, vector<1x2x32xf32>,
    %c4 = arith.constant 4 : index
    %c0_54 = arith.constant 0 : index
    %c0_55 = arith.constant 0 : index
    %148 = vector.load %arg1[%c4, %c0_54, %c0_55] : memref<8x2x96xf32, #tpu.memory_space<vmem>>, vector<1x2x96xf32>
    %149 = vector.shape_cast %148 : vector<1x2x96xf32> to vector<2x96xf32>
    %c0_56 = arith.constant 0 : index
    %c0_57 = arith.constant 0 : index
    %150 = vector.load %arg2[%c0_56, %c0_57] : memref<32x96xf32, #tpu.memory_space<vmem>>, vector<32x96xf32>
    %cst_58 = arith.constant dense<0.000000e+00> : vector<2x96xf32>
    %151 = tpu.matmul %144, %150, %cst_58 {dimension_numbers = #tpu.dot_dimension_numbers<[1], [0], [0], [1], [0, 0, 1, 1], [], []>} : vector<2x32xf32>, vector<32x96xf32>, vector<2x96xf32> -> vector<2x96xf32>
    %c0_59 = arith.constant 0 : index
    %c0_60 = arith.constant 0 : index
    %152 = vector.load %arg3[%c0_59, %c0_60] : memref<1x96xf32, #tpu.memory_space<vmem>>, vector<1x96xf32>
    %153 = vector.broadcast %152 : vector<1x96xf32> to vector<2x96xf32>
    %154 = arith.addf %151, %153 : vector<2x96xf32>
    %155 = vector.extract_strided_slice %149 {offsets = [0, 0], sizes = [2, 32], strides = [1, 1]} : vector<2x96xf32> to vector<2x32xf32>
    %156 = vector.extract_strided_slice %154 {offsets = [0, 0], sizes = [2, 32], strides = [1, 1]} : vector<2x96xf32> to vector<2x32xf32>
    %157 = arith.addf %155, %156 : vector<2x32xf32>
    %158 = arith.negf %157 : vector<2x32xf32>
    %159 = math.exp %158 : vector<2x32xf32>
    %cst_61 = arith.constant 1.000000e+00 : f32
    %160 = vector.broadcast %cst_61 : f32 to vector<2x32xf32>
    %161 = arith.addf %160, %159 : vector<2x32xf32>
    %162 = arith.divf %160, %161 : vector<2x32xf32>
    %163 = vector.extract_strided_slice %149 {offsets = [0, 32], sizes = [2, 32], strides = [1, 1]} : vector<2x96xf32> to vector<2x32xf32>
    %164 = vector.extract_strided_slice %154 {offsets = [0, 32], sizes = [2, 32], strides = [1, 1]} : vector<2x96xf32> to vector<2x32xf32>
    %165 = arith.addf %163, %164 : vector<2x32xf32>
    %166 = arith.negf %165 : vector<2x32xf32>
    %167 = math.exp %166 : vector<2x32xf32>
    %cst_62 = arith.constant 1.000000e+00 : f32
    %168 = vector.broadcast %cst_62 : f32 to vector<2x32xf32>
    %169 = arith.addf %168, %167 : vector<2x32xf32>
    %170 = arith.divf %168, %169 : vector<2x32xf32>
    %171 = vector.extract_strided_slice %149 {offsets = [0, 64], sizes = [2, 32], strides = [1, 1]} : vector<2x96xf32> to vector<2x32xf32>
    %172 = vector.extract_strided_slice %154 {offsets = [0, 64], sizes = [2, 32], strides = [1, 1]} : vector<2x96xf32> to vector<2x32xf32>
    %173 = arith.mulf %162, %172 : vector<2x32xf32>
    %174 = arith.addf %171, %173 : vector<2x32xf32>
    %175 = math.tanh %174 : vector<2x32xf32>
    %cst_63 = arith.constant 1.000000e+00 : f32
    %176 = vector.broadcast %cst_63 : f32 to vector<2x32xf32>
    %177 = arith.subf %176, %170 : vector<2x32xf32>
    %178 = arith.mulf %177, %175 : vector<2x32xf32>
    %179 = arith.mulf %170, %144 : vector<2x32xf32>
    %180 = arith.addf %178, %179 : vector<2x32xf32>
    %c4_64 = arith.constant 4 : index
    %c0_65 = arith.constant 0 : index
    %c0_66 = arith.constant 0 : index
    %181 = vector.load %arg4[%c4_64, %c0_65, %c0_66] : memref<8x2x32xf32, #tpu.memory_space<vmem>>, vector<1x2x32xf32>
    %182 = vector.shape_cast %181 : vector<1x2x32xf32> to vector<2x32xf32>
    %183 = vector.shape_cast %180 : vector<2x32xf32> to vector<1x2x32xf32>
    tpu.vector_store %arg4[%c4_64, %c0_65, %c0_66], %183 {strides = array<i32>} : memref<8x2x32xf32, #tpu.memory_space<vmem>>, vector<1x2x32xf32>,
    %c5 = arith.constant 5 : index
    %c0_67 = arith.constant 0 : index
    %c0_68 = arith.constant 0 : index
    %184 = vector.load %arg1[%c5, %c0_67, %c0_68] : memref<8x2x96xf32, #tpu.memory_space<vmem>>, vector<1x2x96xf32>
    %185 = vector.shape_cast %184 : vector<1x2x96xf32> to vector<2x96xf32>
    %c0_69 = arith.constant 0 : index
    %c0_70 = arith.constant 0 : index
    %186 = vector.load %arg2[%c0_69, %c0_70] : memref<32x96xf32, #tpu.memory_space<vmem>>, vector<32x96xf32>
    %cst_71 = arith.constant dense<0.000000e+00> : vector<2x96xf32>
    %187 = tpu.matmul %180, %186, %cst_71 {dimension_numbers = #tpu.dot_dimension_numbers<[1], [0], [0], [1], [0, 0, 1, 1], [], []>} : vector<2x32xf32>, vector<32x96xf32>, vector<2x96xf32> -> vector<2x96xf32>
    %c0_72 = arith.constant 0 : index
    %c0_73 = arith.constant 0 : index
    %188 = vector.load %arg3[%c0_72, %c0_73] : memref<1x96xf32, #tpu.memory_space<vmem>>, vector<1x96xf32>
    %189 = vector.broadcast %188 : vector<1x96xf32> to vector<2x96xf32>
    %190 = arith.addf %187, %189 : vector<2x96xf32>
    %191 = vector.extract_strided_slice %185 {offsets = [0, 0], sizes = [2, 32], strides = [1, 1]} : vector<2x96xf32> to vector<2x32xf32>
    %192 = vector.extract_strided_slice %190 {offsets = [0, 0], sizes = [2, 32], strides = [1, 1]} : vector<2x96xf32> to vector<2x32xf32>
    %193 = arith.addf %191, %192 : vector<2x32xf32>
    %194 = arith.negf %193 : vector<2x32xf32>
    %195 = math.exp %194 : vector<2x32xf32>
    %cst_74 = arith.constant 1.000000e+00 : f32
    %196 = vector.broadcast %cst_74 : f32 to vector<2x32xf32>
    %197 = arith.addf %196, %195 : vector<2x32xf32>
    %198 = arith.divf %196, %197 : vector<2x32xf32>
    %199 = vector.extract_strided_slice %185 {offsets = [0, 32], sizes = [2, 32], strides = [1, 1]} : vector<2x96xf32> to vector<2x32xf32>
    %200 = vector.extract_strided_slice %190 {offsets = [0, 32], sizes = [2, 32], strides = [1, 1]} : vector<2x96xf32> to vector<2x32xf32>
    %201 = arith.addf %199, %200 : vector<2x32xf32>
    %202 = arith.negf %201 : vector<2x32xf32>
    %203 = math.exp %202 : vector<2x32xf32>
    %cst_75 = arith.constant 1.000000e+00 : f32
    %204 = vector.broadcast %cst_75 : f32 to vector<2x32xf32>
    %205 = arith.addf %204, %203 : vector<2x32xf32>
    %206 = arith.divf %204, %205 : vector<2x32xf32>
    %207 = vector.extract_strided_slice %185 {offsets = [0, 64], sizes = [2, 32], strides = [1, 1]} : vector<2x96xf32> to vector<2x32xf32>
    %208 = vector.extract_strided_slice %190 {offsets = [0, 64], sizes = [2, 32], strides = [1, 1]} : vector<2x96xf32> to vector<2x32xf32>
    %209 = arith.mulf %198, %208 : vector<2x32xf32>
    %210 = arith.addf %207, %209 : vector<2x32xf32>
    %211 = math.tanh %210 : vector<2x32xf32>
    %cst_76 = arith.constant 1.000000e+00 : f32
    %212 = vector.broadcast %cst_76 : f32 to vector<2x32xf32>
    %213 = arith.subf %212, %206 : vector<2x32xf32>
    %214 = arith.mulf %213, %211 : vector<2x32xf32>
    %215 = arith.mulf %206, %180 : vector<2x32xf32>
    %216 = arith.addf %214, %215 : vector<2x32xf32>
    %c5_77 = arith.constant 5 : index
    %c0_78 = arith.constant 0 : index
    %c0_79 = arith.constant 0 : index
    %217 = vector.load %arg4[%c5_77, %c0_78, %c0_79] : memref<8x2x32xf32, #tpu.memory_space<vmem>>, vector<1x2x32xf32>
    %218 = vector.shape_cast %217 : vector<1x2x32xf32> to vector<2x32xf32>
    %219 = vector.shape_cast %216 : vector<2x32xf32> to vector<1x2x32xf32>
    tpu.vector_store %arg4[%c5_77, %c0_78, %c0_79], %219 {strides = array<i32>} : memref<8x2x32xf32, #tpu.memory_space<vmem>>, vector<1x2x32xf32>,
    %c6 = arith.constant 6 : index
    %c0_80 = arith.constant 0 : index
    %c0_81 = arith.constant 0 : index
    %220 = vector.load %arg1[%c6, %c0_80, %c0_81] : memref<8x2x96xf32, #tpu.memory_space<vmem>>, vector<1x2x96xf32>
    %221 = vector.shape_cast %220 : vector<1x2x96xf32> to vector<2x96xf32>
    %c0_82 = arith.constant 0 : index
    %c0_83 = arith.constant 0 : index
    %222 = vector.load %arg2[%c0_82, %c0_83] : memref<32x96xf32, #tpu.memory_space<vmem>>, vector<32x96xf32>
    %cst_84 = arith.constant dense<0.000000e+00> : vector<2x96xf32>
    %223 = tpu.matmul %216, %222, %cst_84 {dimension_numbers = #tpu.dot_dimension_numbers<[1], [0], [0], [1], [0, 0, 1, 1], [], []>} : vector<2x32xf32>, vector<32x96xf32>, vector<2x96xf32> -> vector<2x96xf32>
    %c0_85 = arith.constant 0 : index
    %c0_86 = arith.constant 0 : index
    %224 = vector.load %arg3[%c0_85, %c0_86] : memref<1x96xf32, #tpu.memory_space<vmem>>, vector<1x96xf32>
    %225 = vector.broadcast %224 : vector<1x96xf32> to vector<2x96xf32>
    %226 = arith.addf %223, %225 : vector<2x96xf32>
    %227 = vector.extract_strided_slice %221 {offsets = [0, 0], sizes = [2, 32], strides = [1, 1]} : vector<2x96xf32> to vector<2x32xf32>
    %228 = vector.extract_strided_slice %226 {offsets = [0, 0], sizes = [2, 32], strides = [1, 1]} : vector<2x96xf32> to vector<2x32xf32>
    %229 = arith.addf %227, %228 : vector<2x32xf32>
    %230 = arith.negf %229 : vector<2x32xf32>
    %231 = math.exp %230 : vector<2x32xf32>
    %cst_87 = arith.constant 1.000000e+00 : f32
    %232 = vector.broadcast %cst_87 : f32 to vector<2x32xf32>
    %233 = arith.addf %232, %231 : vector<2x32xf32>
    %234 = arith.divf %232, %233 : vector<2x32xf32>
    %235 = vector.extract_strided_slice %221 {offsets = [0, 32], sizes = [2, 32], strides = [1, 1]} : vector<2x96xf32> to vector<2x32xf32>
    %236 = vector.extract_strided_slice %226 {offsets = [0, 32], sizes = [2, 32], strides = [1, 1]} : vector<2x96xf32> to vector<2x32xf32>
    %237 = arith.addf %235, %236 : vector<2x32xf32>
    %238 = arith.negf %237 : vector<2x32xf32>
    %239 = math.exp %238 : vector<2x32xf32>
    %cst_88 = arith.constant 1.000000e+00 : f32
    %240 = vector.broadcast %cst_88 : f32 to vector<2x32xf32>
    %241 = arith.addf %240, %239 : vector<2x32xf32>
    %242 = arith.divf %240, %241 : vector<2x32xf32>
    %243 = vector.extract_strided_slice %221 {offsets = [0, 64], sizes = [2, 32], strides = [1, 1]} : vector<2x96xf32> to vector<2x32xf32>
    %244 = vector.extract_strided_slice %226 {offsets = [0, 64], sizes = [2, 32], strides = [1, 1]} : vector<2x96xf32> to vector<2x32xf32>
    %245 = arith.mulf %234, %244 : vector<2x32xf32>
    %246 = arith.addf %243, %245 : vector<2x32xf32>
    %247 = math.tanh %246 : vector<2x32xf32>
    %cst_89 = arith.constant 1.000000e+00 : f32
    %248 = vector.broadcast %cst_89 : f32 to vector<2x32xf32>
    %249 = arith.subf %248, %242 : vector<2x32xf32>
    %250 = arith.mulf %249, %247 : vector<2x32xf32>
    %251 = arith.mulf %242, %216 : vector<2x32xf32>
    %252 = arith.addf %250, %251 : vector<2x32xf32>
    %c6_90 = arith.constant 6 : index
    %c0_91 = arith.constant 0 : index
    %c0_92 = arith.constant 0 : index
    %253 = vector.load %arg4[%c6_90, %c0_91, %c0_92] : memref<8x2x32xf32, #tpu.memory_space<vmem>>, vector<1x2x32xf32>
    %254 = vector.shape_cast %253 : vector<1x2x32xf32> to vector<2x32xf32>
    %255 = vector.shape_cast %252 : vector<2x32xf32> to vector<1x2x32xf32>
    tpu.vector_store %arg4[%c6_90, %c0_91, %c0_92], %255 {strides = array<i32>} : memref<8x2x32xf32, #tpu.memory_space<vmem>>, vector<1x2x32xf32>,
    %c7 = arith.constant 7 : index
    %c0_93 = arith.constant 0 : index
    %c0_94 = arith.constant 0 : index
    %256 = vector.load %arg1[%c7, %c0_93, %c0_94] : memref<8x2x96xf32, #tpu.memory_space<vmem>>, vector<1x2x96xf32>
    %257 = vector.shape_cast %256 : vector<1x2x96xf32> to vector<2x96xf32>
    %c0_95 = arith.constant 0 : index
    %c0_96 = arith.constant 0 : index
    %258 = vector.load %arg2[%c0_95, %c0_96] : memref<32x96xf32, #tpu.memory_space<vmem>>, vector<32x96xf32>
    %cst_97 = arith.constant dense<0.000000e+00> : vector<2x96xf32>
    %259 = tpu.matmul %252, %258, %cst_97 {dimension_numbers = #tpu.dot_dimension_numbers<[1], [0], [0], [1], [0, 0, 1, 1], [], []>} : vector<2x32xf32>, vector<32x96xf32>, vector<2x96xf32> -> vector<2x96xf32>
    %c0_98 = arith.constant 0 : index
    %c0_99 = arith.constant 0 : index
    %260 = vector.load %arg3[%c0_98, %c0_99] : memref<1x96xf32, #tpu.memory_space<vmem>>, vector<1x96xf32>
    %261 = vector.broadcast %260 : vector<1x96xf32> to vector<2x96xf32>
    %262 = arith.addf %259, %261 : vector<2x96xf32>
    %263 = vector.extract_strided_slice %257 {offsets = [0, 0], sizes = [2, 32], strides = [1, 1]} : vector<2x96xf32> to vector<2x32xf32>
    %264 = vector.extract_strided_slice %262 {offsets = [0, 0], sizes = [2, 32], strides = [1, 1]} : vector<2x96xf32> to vector<2x32xf32>
    %265 = arith.addf %263, %264 : vector<2x32xf32>
    %266 = arith.negf %265 : vector<2x32xf32>
    %267 = math.exp %266 : vector<2x32xf32>
    %cst_100 = arith.constant 1.000000e+00 : f32
    %268 = vector.broadcast %cst_100 : f32 to vector<2x32xf32>
    %269 = arith.addf %268, %267 : vector<2x32xf32>
    %270 = arith.divf %268, %269 : vector<2x32xf32>
    %271 = vector.extract_strided_slice %257 {offsets = [0, 32], sizes = [2, 32], strides = [1, 1]} : vector<2x96xf32> to vector<2x32xf32>
    %272 = vector.extract_strided_slice %262 {offsets = [0, 32], sizes = [2, 32], strides = [1, 1]} : vector<2x96xf32> to vector<2x32xf32>
    %273 = arith.addf %271, %272 : vector<2x32xf32>
    %274 = arith.negf %273 : vector<2x32xf32>
    %275 = math.exp %274 : vector<2x32xf32>
    %cst_101 = arith.constant 1.000000e+00 : f32
    %276 = vector.broadcast %cst_101 : f32 to vector<2x32xf32>
    %277 = arith.addf %276, %275 : vector<2x32xf32>
    %278 = arith.divf %276, %277 : vector<2x32xf32>
    %279 = vector.extract_strided_slice %257 {offsets = [0, 64], sizes = [2, 32], strides = [1, 1]} : vector<2x96xf32> to vector<2x32xf32>
    %280 = vector.extract_strided_slice %262 {offsets = [0, 64], sizes = [2, 32], strides = [1, 1]} : vector<2x96xf32> to vector<2x32xf32>
    %281 = arith.mulf %270, %280 : vector<2x32xf32>
    %282 = arith.addf %279, %281 : vector<2x32xf32>
    %283 = math.tanh %282 : vector<2x32xf32>
    %cst_102 = arith.constant 1.000000e+00 : f32
    %284 = vector.broadcast %cst_102 : f32 to vector<2x32xf32>
    %285 = arith.subf %284, %278 : vector<2x32xf32>
    %286 = arith.mulf %285, %283 : vector<2x32xf32>
    %287 = arith.mulf %278, %252 : vector<2x32xf32>
    %288 = arith.addf %286, %287 : vector<2x32xf32>
    %c7_103 = arith.constant 7 : index
    %c0_104 = arith.constant 0 : index
    %c0_105 = arith.constant 0 : index
    %289 = vector.load %arg4[%c7_103, %c0_104, %c0_105] : memref<8x2x32xf32, #tpu.memory_space<vmem>>, vector<1x2x32xf32>
    %290 = vector.shape_cast %289 : vector<1x2x32xf32> to vector<2x32xf32>
    %291 = vector.shape_cast %288 : vector<2x32xf32> to vector<1x2x32xf32>
    tpu.vector_store %arg4[%c7_103, %c0_104, %c0_105], %291 {strides = array<i32>} : memref<8x2x32xf32, #tpu.memory_space<vmem>>, vector<1x2x32xf32>,
    %c0_106 = arith.constant 0 : index
    %c0_107 = arith.constant 0 : index
    %292 = vector.load %arg5[%c0_106, %c0_107] : memref<2x32xf32, #tpu.memory_space<vmem>>, vector<2x32xf32>
    tpu.vector_store %arg5[%c0_106, %c0_107], %288 {strides = array<i32>} : memref<2x32xf32, #tpu.memory_space<vmem>>, vector<2x32xf32>,
    return
  }
  func.func @transform_0(%arg0: i32) -> (i32, i32, i32) {
    %c0_i32 = arith.constant 0 : i32
    %c0_i32_0 = arith.constant 0 : i32
    %c0_i32_1 = arith.constant 0 : i32
    return %arg0, %c0_i32, %c0_i32_0 : i32, i32, i32
  }
  func.func @transform_1(%arg0: i32) -> (i32, i32) {
    %c0_i32 = arith.constant 0 : i32
    %c0_i32_0 = arith.constant 0 : i32
    %c0_i32_1 = arith.constant 0 : i32
    return %c0_i32, %c0_i32_0 : i32, i32
  }
  func.func @transform_2(%arg0: i32) -> (i32, i32) {
    %c0_i32 = arith.constant 0 : i32
    %c0_i32_0 = arith.constant 0 : i32
    %c0_i32_1 = arith.constant 0 : i32
    return %c0_i32, %c0_i32_0 : i32, i32
  }
  func.func @transform_3(%arg0: i32) -> (i32, i32, i32) {
    %c0_i32 = arith.constant 0 : i32
    %c0_i32_0 = arith.constant 0 : i32
    %c0_i32_1 = arith.constant 0 : i32
    return %arg0, %c0_i32, %c0_i32_0 : i32, i32, i32
  }
}

module attributes {stable_mosaic.version = 11 : i64} {
  func.func @kernel(%arg0: i32, %arg1: memref<8x2x96xf32, #tpu.memory_space<vmem>>, %arg2: memref<32x96xf32, #tpu.memory_space<vmem>>, %arg3: memref<1x96xf32, #tpu.memory_space<vmem>>, %arg4: memref<8x2x32xf32, #tpu.memory_space<vmem>>, %arg5: memref<2x32xf32, #tpu.memory_space<vmem>>) attributes {dimension_semantics = [#tpu.dimension_semantics<arbitrary>], iteration_bounds = array<i64: 1>, scalar_prefetch = 0 : i64, scratch_operands = 1 : i64, tpu.core_type = #tpu.core_type<tc>, window_params = [{transform_indices = @transform_0, window_bounds = array<i64: 8, 2, 96>}, {pipeline_mode = #tpu.pipeline_mode<synchronous>, transform_indices = @transform_1, window_bounds = array<i64: 32, 96>}, {pipeline_mode = #tpu.pipeline_mode<synchronous>, transform_indices = @transform_2, window_bounds = array<i64: 1, 96>}, {transform_indices = @transform_3, window_bounds = array<i64: 8, 2, 32>}]} {
    %c0_i32 = arith.constant 0 : i32
    %0 = arith.cmpi eq, %arg0, %c0_i32 : i32
    %1 = arith.extui %0 : i1 to i32
    %c0_i32_0 = arith.constant 0 : i32
    %2 = arith.cmpi ne, %1, %c0_i32_0 : i32
    scf.if %2 {
      %cst_108 = arith.constant 0.000000e+00 : f32
      %293 = vector.broadcast %cst_108 : f32 to vector<2x32xf32>
      %c0_109 = arith.constant 0 : index
      %c0_110 = arith.constant 0 : index
      %294 = vector.load %arg5[%c0_109, %c0_110] : memref<2x32xf32, #tpu.memory_space<vmem>>, vector<2x32xf32>
      tpu.vector_store %arg5[%c0_109, %c0_110], %293 {strides = array<i32>} : memref<2x32xf32, #tpu.memory_space<vmem>>, vector<2x32xf32>,
    } else {
    }
    %c0 = arith.constant 0 : index
    %c0_1 = arith.constant 0 : index
    %3 = vector.load %arg5[%c0, %c0_1] : memref<2x32xf32, #tpu.memory_space<vmem>>, vector<2x32xf32>
    %c7 = arith.constant 7 : index
    %c0_2 = arith.constant 0 : index
    %c0_3 = arith.constant 0 : index
    %4 = vector.load %arg1[%c7, %c0_2, %c0_3] : memref<8x2x96xf32, #tpu.memory_space<vmem>>, vector<1x2x96xf32>
    %5 = vector.shape_cast %4 : vector<1x2x96xf32> to vector<2x96xf32>
    %c0_4 = arith.constant 0 : index
    %c0_5 = arith.constant 0 : index
    %6 = vector.load %arg2[%c0_4, %c0_5] : memref<32x96xf32, #tpu.memory_space<vmem>>, vector<32x96xf32>
    %cst = arith.constant dense<0.000000e+00> : vector<2x96xf32>
    %7 = tpu.matmul %3, %6, %cst {dimension_numbers = #tpu.dot_dimension_numbers<[1], [0], [0], [1], [0, 0, 1, 1], [], []>} : vector<2x32xf32>, vector<32x96xf32>, vector<2x96xf32> -> vector<2x96xf32>
    %c0_6 = arith.constant 0 : index
    %c0_7 = arith.constant 0 : index
    %8 = vector.load %arg3[%c0_6, %c0_7] : memref<1x96xf32, #tpu.memory_space<vmem>>, vector<1x96xf32>
    %9 = vector.broadcast %8 : vector<1x96xf32> to vector<2x96xf32>
    %10 = arith.addf %7, %9 : vector<2x96xf32>
    %11 = vector.extract_strided_slice %5 {offsets = [0, 0], sizes = [2, 32], strides = [1, 1]} : vector<2x96xf32> to vector<2x32xf32>
    %12 = vector.extract_strided_slice %10 {offsets = [0, 0], sizes = [2, 32], strides = [1, 1]} : vector<2x96xf32> to vector<2x32xf32>
    %13 = arith.addf %11, %12 : vector<2x32xf32>
    %14 = arith.negf %13 : vector<2x32xf32>
    %15 = math.exp %14 : vector<2x32xf32>
    %cst_8 = arith.constant 1.000000e+00 : f32
    %16 = vector.broadcast %cst_8 : f32 to vector<2x32xf32>
    %17 = arith.addf %16, %15 : vector<2x32xf32>
    %18 = arith.divf %16, %17 : vector<2x32xf32>
    %19 = vector.extract_strided_slice %5 {offsets = [0, 32], sizes = [2, 32], strides = [1, 1]} : vector<2x96xf32> to vector<2x32xf32>
    %20 = vector.extract_strided_slice %10 {offsets = [0, 32], sizes = [2, 32], strides = [1, 1]} : vector<2x96xf32> to vector<2x32xf32>
    %21 = arith.addf %19, %20 : vector<2x32xf32>
    %22 = arith.negf %21 : vector<2x32xf32>
    %23 = math.exp %22 : vector<2x32xf32>
    %cst_9 = arith.constant 1.000000e+00 : f32
    %24 = vector.broadcast %cst_9 : f32 to vector<2x32xf32>
    %25 = arith.addf %24, %23 : vector<2x32xf32>
    %26 = arith.divf %24, %25 : vector<2x32xf32>
    %27 = vector.extract_strided_slice %5 {offsets = [0, 64], sizes = [2, 32], strides = [1, 1]} : vector<2x96xf32> to vector<2x32xf32>
    %28 = vector.extract_strided_slice %10 {offsets = [0, 64], sizes = [2, 32], strides = [1, 1]} : vector<2x96xf32> to vector<2x32xf32>
    %29 = arith.mulf %18, %28 : vector<2x32xf32>
    %30 = arith.addf %27, %29 : vector<2x32xf32>
    %31 = math.tanh %30 : vector<2x32xf32>
    %cst_10 = arith.constant 1.000000e+00 : f32
    %32 = vector.broadcast %cst_10 : f32 to vector<2x32xf32>
    %33 = arith.subf %32, %26 : vector<2x32xf32>
    %34 = arith.mulf %33, %31 : vector<2x32xf32>
    %35 = arith.mulf %26, %3 : vector<2x32xf32>
    %36 = arith.addf %34, %35 : vector<2x32xf32>
    %c7_11 = arith.constant 7 : index
    %c0_12 = arith.constant 0 : index
    %c0_13 = arith.constant 0 : index
    %37 = vector.load %arg4[%c7_11, %c0_12, %c0_13] : memref<8x2x32xf32, #tpu.memory_space<vmem>>, vector<1x2x32xf32>
    %38 = vector.shape_cast %37 : vector<1x2x32xf32> to vector<2x32xf32>
    %39 = vector.shape_cast %36 : vector<2x32xf32> to vector<1x2x32xf32>
    tpu.vector_store %arg4[%c7_11, %c0_12, %c0_13], %39 {strides = array<i32>} : memref<8x2x32xf32, #tpu.memory_space<vmem>>, vector<1x2x32xf32>,
    %c6 = arith.constant 6 : index
    %c0_14 = arith.constant 0 : index
    %c0_15 = arith.constant 0 : index
    %40 = vector.load %arg1[%c6, %c0_14, %c0_15] : memref<8x2x96xf32, #tpu.memory_space<vmem>>, vector<1x2x96xf32>
    %41 = vector.shape_cast %40 : vector<1x2x96xf32> to vector<2x96xf32>
    %c0_16 = arith.constant 0 : index
    %c0_17 = arith.constant 0 : index
    %42 = vector.load %arg2[%c0_16, %c0_17] : memref<32x96xf32, #tpu.memory_space<vmem>>, vector<32x96xf32>
    %cst_18 = arith.constant dense<0.000000e+00> : vector<2x96xf32>
    %43 = tpu.matmul %36, %42, %cst_18 {dimension_numbers = #tpu.dot_dimension_numbers<[1], [0], [0], [1], [0, 0, 1, 1], [], []>} : vector<2x32xf32>, vector<32x96xf32>, vector<2x96xf32> -> vector<2x96xf32>
    %c0_19 = arith.constant 0 : index
    %c0_20 = arith.constant 0 : index
    %44 = vector.load %arg3[%c0_19, %c0_20] : memref<1x96xf32, #tpu.memory_space<vmem>>, vector<1x96xf32>
    %45 = vector.broadcast %44 : vector<1x96xf32> to vector<2x96xf32>
    %46 = arith.addf %43, %45 : vector<2x96xf32>
    %47 = vector.extract_strided_slice %41 {offsets = [0, 0], sizes = [2, 32], strides = [1, 1]} : vector<2x96xf32> to vector<2x32xf32>
    %48 = vector.extract_strided_slice %46 {offsets = [0, 0], sizes = [2, 32], strides = [1, 1]} : vector<2x96xf32> to vector<2x32xf32>
    %49 = arith.addf %47, %48 : vector<2x32xf32>
    %50 = arith.negf %49 : vector<2x32xf32>
    %51 = math.exp %50 : vector<2x32xf32>
    %cst_21 = arith.constant 1.000000e+00 : f32
    %52 = vector.broadcast %cst_21 : f32 to vector<2x32xf32>
    %53 = arith.addf %52, %51 : vector<2x32xf32>
    %54 = arith.divf %52, %53 : vector<2x32xf32>
    %55 = vector.extract_strided_slice %41 {offsets = [0, 32], sizes = [2, 32], strides = [1, 1]} : vector<2x96xf32> to vector<2x32xf32>
    %56 = vector.extract_strided_slice %46 {offsets = [0, 32], sizes = [2, 32], strides = [1, 1]} : vector<2x96xf32> to vector<2x32xf32>
    %57 = arith.addf %55, %56 : vector<2x32xf32>
    %58 = arith.negf %57 : vector<2x32xf32>
    %59 = math.exp %58 : vector<2x32xf32>
    %cst_22 = arith.constant 1.000000e+00 : f32
    %60 = vector.broadcast %cst_22 : f32 to vector<2x32xf32>
    %61 = arith.addf %60, %59 : vector<2x32xf32>
    %62 = arith.divf %60, %61 : vector<2x32xf32>
    %63 = vector.extract_strided_slice %41 {offsets = [0, 64], sizes = [2, 32], strides = [1, 1]} : vector<2x96xf32> to vector<2x32xf32>
    %64 = vector.extract_strided_slice %46 {offsets = [0, 64], sizes = [2, 32], strides = [1, 1]} : vector<2x96xf32> to vector<2x32xf32>
    %65 = arith.mulf %54, %64 : vector<2x32xf32>
    %66 = arith.addf %63, %65 : vector<2x32xf32>
    %67 = math.tanh %66 : vector<2x32xf32>
    %cst_23 = arith.constant 1.000000e+00 : f32
    %68 = vector.broadcast %cst_23 : f32 to vector<2x32xf32>
    %69 = arith.subf %68, %62 : vector<2x32xf32>
    %70 = arith.mulf %69, %67 : vector<2x32xf32>
    %71 = arith.mulf %62, %36 : vector<2x32xf32>
    %72 = arith.addf %70, %71 : vector<2x32xf32>
    %c6_24 = arith.constant 6 : index
    %c0_25 = arith.constant 0 : index
    %c0_26 = arith.constant 0 : index
    %73 = vector.load %arg4[%c6_24, %c0_25, %c0_26] : memref<8x2x32xf32, #tpu.memory_space<vmem>>, vector<1x2x32xf32>
    %74 = vector.shape_cast %73 : vector<1x2x32xf32> to vector<2x32xf32>
    %75 = vector.shape_cast %72 : vector<2x32xf32> to vector<1x2x32xf32>
    tpu.vector_store %arg4[%c6_24, %c0_25, %c0_26], %75 {strides = array<i32>} : memref<8x2x32xf32, #tpu.memory_space<vmem>>, vector<1x2x32xf32>,
    %c5 = arith.constant 5 : index
    %c0_27 = arith.constant 0 : index
    %c0_28 = arith.constant 0 : index
    %76 = vector.load %arg1[%c5, %c0_27, %c0_28] : memref<8x2x96xf32, #tpu.memory_space<vmem>>, vector<1x2x96xf32>
    %77 = vector.shape_cast %76 : vector<1x2x96xf32> to vector<2x96xf32>
    %c0_29 = arith.constant 0 : index
    %c0_30 = arith.constant 0 : index
    %78 = vector.load %arg2[%c0_29, %c0_30] : memref<32x96xf32, #tpu.memory_space<vmem>>, vector<32x96xf32>
    %cst_31 = arith.constant dense<0.000000e+00> : vector<2x96xf32>
    %79 = tpu.matmul %72, %78, %cst_31 {dimension_numbers = #tpu.dot_dimension_numbers<[1], [0], [0], [1], [0, 0, 1, 1], [], []>} : vector<2x32xf32>, vector<32x96xf32>, vector<2x96xf32> -> vector<2x96xf32>
    %c0_32 = arith.constant 0 : index
    %c0_33 = arith.constant 0 : index
    %80 = vector.load %arg3[%c0_32, %c0_33] : memref<1x96xf32, #tpu.memory_space<vmem>>, vector<1x96xf32>
    %81 = vector.broadcast %80 : vector<1x96xf32> to vector<2x96xf32>
    %82 = arith.addf %79, %81 : vector<2x96xf32>
    %83 = vector.extract_strided_slice %77 {offsets = [0, 0], sizes = [2, 32], strides = [1, 1]} : vector<2x96xf32> to vector<2x32xf32>
    %84 = vector.extract_strided_slice %82 {offsets = [0, 0], sizes = [2, 32], strides = [1, 1]} : vector<2x96xf32> to vector<2x32xf32>
    %85 = arith.addf %83, %84 : vector<2x32xf32>
    %86 = arith.negf %85 : vector<2x32xf32>
    %87 = math.exp %86 : vector<2x32xf32>
    %cst_34 = arith.constant 1.000000e+00 : f32
    %88 = vector.broadcast %cst_34 : f32 to vector<2x32xf32>
    %89 = arith.addf %88, %87 : vector<2x32xf32>
    %90 = arith.divf %88, %89 : vector<2x32xf32>
    %91 = vector.extract_strided_slice %77 {offsets = [0, 32], sizes = [2, 32], strides = [1, 1]} : vector<2x96xf32> to vector<2x32xf32>
    %92 = vector.extract_strided_slice %82 {offsets = [0, 32], sizes = [2, 32], strides = [1, 1]} : vector<2x96xf32> to vector<2x32xf32>
    %93 = arith.addf %91, %92 : vector<2x32xf32>
    %94 = arith.negf %93 : vector<2x32xf32>
    %95 = math.exp %94 : vector<2x32xf32>
    %cst_35 = arith.constant 1.000000e+00 : f32
    %96 = vector.broadcast %cst_35 : f32 to vector<2x32xf32>
    %97 = arith.addf %96, %95 : vector<2x32xf32>
    %98 = arith.divf %96, %97 : vector<2x32xf32>
    %99 = vector.extract_strided_slice %77 {offsets = [0, 64], sizes = [2, 32], strides = [1, 1]} : vector<2x96xf32> to vector<2x32xf32>
    %100 = vector.extract_strided_slice %82 {offsets = [0, 64], sizes = [2, 32], strides = [1, 1]} : vector<2x96xf32> to vector<2x32xf32>
    %101 = arith.mulf %90, %100 : vector<2x32xf32>
    %102 = arith.addf %99, %101 : vector<2x32xf32>
    %103 = math.tanh %102 : vector<2x32xf32>
    %cst_36 = arith.constant 1.000000e+00 : f32
    %104 = vector.broadcast %cst_36 : f32 to vector<2x32xf32>
    %105 = arith.subf %104, %98 : vector<2x32xf32>
    %106 = arith.mulf %105, %103 : vector<2x32xf32>
    %107 = arith.mulf %98, %72 : vector<2x32xf32>
    %108 = arith.addf %106, %107 : vector<2x32xf32>
    %c5_37 = arith.constant 5 : index
    %c0_38 = arith.constant 0 : index
    %c0_39 = arith.constant 0 : index
    %109 = vector.load %arg4[%c5_37, %c0_38, %c0_39] : memref<8x2x32xf32, #tpu.memory_space<vmem>>, vector<1x2x32xf32>
    %110 = vector.shape_cast %109 : vector<1x2x32xf32> to vector<2x32xf32>
    %111 = vector.shape_cast %108 : vector<2x32xf32> to vector<1x2x32xf32>
    tpu.vector_store %arg4[%c5_37, %c0_38, %c0_39], %111 {strides = array<i32>} : memref<8x2x32xf32, #tpu.memory_space<vmem>>, vector<1x2x32xf32>,
    %c4 = arith.constant 4 : index
    %c0_40 = arith.constant 0 : index
    %c0_41 = arith.constant 0 : index
    %112 = vector.load %arg1[%c4, %c0_40, %c0_41] : memref<8x2x96xf32, #tpu.memory_space<vmem>>, vector<1x2x96xf32>
    %113 = vector.shape_cast %112 : vector<1x2x96xf32> to vector<2x96xf32>
    %c0_42 = arith.constant 0 : index
    %c0_43 = arith.constant 0 : index
    %114 = vector.load %arg2[%c0_42, %c0_43] : memref<32x96xf32, #tpu.memory_space<vmem>>, vector<32x96xf32>
    %cst_44 = arith.constant dense<0.000000e+00> : vector<2x96xf32>
    %115 = tpu.matmul %108, %114, %cst_44 {dimension_numbers = #tpu.dot_dimension_numbers<[1], [0], [0], [1], [0, 0, 1, 1], [], []>} : vector<2x32xf32>, vector<32x96xf32>, vector<2x96xf32> -> vector<2x96xf32>
    %c0_45 = arith.constant 0 : index
    %c0_46 = arith.constant 0 : index
    %116 = vector.load %arg3[%c0_45, %c0_46] : memref<1x96xf32, #tpu.memory_space<vmem>>, vector<1x96xf32>
    %117 = vector.broadcast %116 : vector<1x96xf32> to vector<2x96xf32>
    %118 = arith.addf %115, %117 : vector<2x96xf32>
    %119 = vector.extract_strided_slice %113 {offsets = [0, 0], sizes = [2, 32], strides = [1, 1]} : vector<2x96xf32> to vector<2x32xf32>
    %120 = vector.extract_strided_slice %118 {offsets = [0, 0], sizes = [2, 32], strides = [1, 1]} : vector<2x96xf32> to vector<2x32xf32>
    %121 = arith.addf %119, %120 : vector<2x32xf32>
    %122 = arith.negf %121 : vector<2x32xf32>
    %123 = math.exp %122 : vector<2x32xf32>
    %cst_47 = arith.constant 1.000000e+00 : f32
    %124 = vector.broadcast %cst_47 : f32 to vector<2x32xf32>
    %125 = arith.addf %124, %123 : vector<2x32xf32>
    %126 = arith.divf %124, %125 : vector<2x32xf32>
    %127 = vector.extract_strided_slice %113 {offsets = [0, 32], sizes = [2, 32], strides = [1, 1]} : vector<2x96xf32> to vector<2x32xf32>
    %128 = vector.extract_strided_slice %118 {offsets = [0, 32], sizes = [2, 32], strides = [1, 1]} : vector<2x96xf32> to vector<2x32xf32>
    %129 = arith.addf %127, %128 : vector<2x32xf32>
    %130 = arith.negf %129 : vector<2x32xf32>
    %131 = math.exp %130 : vector<2x32xf32>
    %cst_48 = arith.constant 1.000000e+00 : f32
    %132 = vector.broadcast %cst_48 : f32 to vector<2x32xf32>
    %133 = arith.addf %132, %131 : vector<2x32xf32>
    %134 = arith.divf %132, %133 : vector<2x32xf32>
    %135 = vector.extract_strided_slice %113 {offsets = [0, 64], sizes = [2, 32], strides = [1, 1]} : vector<2x96xf32> to vector<2x32xf32>
    %136 = vector.extract_strided_slice %118 {offsets = [0, 64], sizes = [2, 32], strides = [1, 1]} : vector<2x96xf32> to vector<2x32xf32>
    %137 = arith.mulf %126, %136 : vector<2x32xf32>
    %138 = arith.addf %135, %137 : vector<2x32xf32>
    %139 = math.tanh %138 : vector<2x32xf32>
    %cst_49 = arith.constant 1.000000e+00 : f32
    %140 = vector.broadcast %cst_49 : f32 to vector<2x32xf32>
    %141 = arith.subf %140, %134 : vector<2x32xf32>
    %142 = arith.mulf %141, %139 : vector<2x32xf32>
    %143 = arith.mulf %134, %108 : vector<2x32xf32>
    %144 = arith.addf %142, %143 : vector<2x32xf32>
    %c4_50 = arith.constant 4 : index
    %c0_51 = arith.constant 0 : index
    %c0_52 = arith.constant 0 : index
    %145 = vector.load %arg4[%c4_50, %c0_51, %c0_52] : memref<8x2x32xf32, #tpu.memory_space<vmem>>, vector<1x2x32xf32>
    %146 = vector.shape_cast %145 : vector<1x2x32xf32> to vector<2x32xf32>
    %147 = vector.shape_cast %144 : vector<2x32xf32> to vector<1x2x32xf32>
    tpu.vector_store %arg4[%c4_50, %c0_51, %c0_52], %147 {strides = array<i32>} : memref<8x2x32xf32, #tpu.memory_space<vmem>>, vector<1x2x32xf32>,
    %c3 = arith.constant 3 : index
    %c0_53 = arith.constant 0 : index
    %c0_54 = arith.constant 0 : index
    %148 = vector.load %arg1[%c3, %c0_53, %c0_54] : memref<8x2x96xf32, #tpu.memory_space<vmem>>, vector<1x2x96xf32>
    %149 = vector.shape_cast %148 : vector<1x2x96xf32> to vector<2x96xf32>
    %c0_55 = arith.constant 0 : index
    %c0_56 = arith.constant 0 : index
    %150 = vector.load %arg2[%c0_55, %c0_56] : memref<32x96xf32, #tpu.memory_space<vmem>>, vector<32x96xf32>
    %cst_57 = arith.constant dense<0.000000e+00> : vector<2x96xf32>
    %151 = tpu.matmul %144, %150, %cst_57 {dimension_numbers = #tpu.dot_dimension_numbers<[1], [0], [0], [1], [0, 0, 1, 1], [], []>} : vector<2x32xf32>, vector<32x96xf32>, vector<2x96xf32> -> vector<2x96xf32>
    %c0_58 = arith.constant 0 : index
    %c0_59 = arith.constant 0 : index
    %152 = vector.load %arg3[%c0_58, %c0_59] : memref<1x96xf32, #tpu.memory_space<vmem>>, vector<1x96xf32>
    %153 = vector.broadcast %152 : vector<1x96xf32> to vector<2x96xf32>
    %154 = arith.addf %151, %153 : vector<2x96xf32>
    %155 = vector.extract_strided_slice %149 {offsets = [0, 0], sizes = [2, 32], strides = [1, 1]} : vector<2x96xf32> to vector<2x32xf32>
    %156 = vector.extract_strided_slice %154 {offsets = [0, 0], sizes = [2, 32], strides = [1, 1]} : vector<2x96xf32> to vector<2x32xf32>
    %157 = arith.addf %155, %156 : vector<2x32xf32>
    %158 = arith.negf %157 : vector<2x32xf32>
    %159 = math.exp %158 : vector<2x32xf32>
    %cst_60 = arith.constant 1.000000e+00 : f32
    %160 = vector.broadcast %cst_60 : f32 to vector<2x32xf32>
    %161 = arith.addf %160, %159 : vector<2x32xf32>
    %162 = arith.divf %160, %161 : vector<2x32xf32>
    %163 = vector.extract_strided_slice %149 {offsets = [0, 32], sizes = [2, 32], strides = [1, 1]} : vector<2x96xf32> to vector<2x32xf32>
    %164 = vector.extract_strided_slice %154 {offsets = [0, 32], sizes = [2, 32], strides = [1, 1]} : vector<2x96xf32> to vector<2x32xf32>
    %165 = arith.addf %163, %164 : vector<2x32xf32>
    %166 = arith.negf %165 : vector<2x32xf32>
    %167 = math.exp %166 : vector<2x32xf32>
    %cst_61 = arith.constant 1.000000e+00 : f32
    %168 = vector.broadcast %cst_61 : f32 to vector<2x32xf32>
    %169 = arith.addf %168, %167 : vector<2x32xf32>
    %170 = arith.divf %168, %169 : vector<2x32xf32>
    %171 = vector.extract_strided_slice %149 {offsets = [0, 64], sizes = [2, 32], strides = [1, 1]} : vector<2x96xf32> to vector<2x32xf32>
    %172 = vector.extract_strided_slice %154 {offsets = [0, 64], sizes = [2, 32], strides = [1, 1]} : vector<2x96xf32> to vector<2x32xf32>
    %173 = arith.mulf %162, %172 : vector<2x32xf32>
    %174 = arith.addf %171, %173 : vector<2x32xf32>
    %175 = math.tanh %174 : vector<2x32xf32>
    %cst_62 = arith.constant 1.000000e+00 : f32
    %176 = vector.broadcast %cst_62 : f32 to vector<2x32xf32>
    %177 = arith.subf %176, %170 : vector<2x32xf32>
    %178 = arith.mulf %177, %175 : vector<2x32xf32>
    %179 = arith.mulf %170, %144 : vector<2x32xf32>
    %180 = arith.addf %178, %179 : vector<2x32xf32>
    %c3_63 = arith.constant 3 : index
    %c0_64 = arith.constant 0 : index
    %c0_65 = arith.constant 0 : index
    %181 = vector.load %arg4[%c3_63, %c0_64, %c0_65] : memref<8x2x32xf32, #tpu.memory_space<vmem>>, vector<1x2x32xf32>
    %182 = vector.shape_cast %181 : vector<1x2x32xf32> to vector<2x32xf32>
    %183 = vector.shape_cast %180 : vector<2x32xf32> to vector<1x2x32xf32>
    tpu.vector_store %arg4[%c3_63, %c0_64, %c0_65], %183 {strides = array<i32>} : memref<8x2x32xf32, #tpu.memory_space<vmem>>, vector<1x2x32xf32>,
    %c2 = arith.constant 2 : index
    %c0_66 = arith.constant 0 : index
    %c0_67 = arith.constant 0 : index
    %184 = vector.load %arg1[%c2, %c0_66, %c0_67] : memref<8x2x96xf32, #tpu.memory_space<vmem>>, vector<1x2x96xf32>
    %185 = vector.shape_cast %184 : vector<1x2x96xf32> to vector<2x96xf32>
    %c0_68 = arith.constant 0 : index
    %c0_69 = arith.constant 0 : index
    %186 = vector.load %arg2[%c0_68, %c0_69] : memref<32x96xf32, #tpu.memory_space<vmem>>, vector<32x96xf32>
    %cst_70 = arith.constant dense<0.000000e+00> : vector<2x96xf32>
    %187 = tpu.matmul %180, %186, %cst_70 {dimension_numbers = #tpu.dot_dimension_numbers<[1], [0], [0], [1], [0, 0, 1, 1], [], []>} : vector<2x32xf32>, vector<32x96xf32>, vector<2x96xf32> -> vector<2x96xf32>
    %c0_71 = arith.constant 0 : index
    %c0_72 = arith.constant 0 : index
    %188 = vector.load %arg3[%c0_71, %c0_72] : memref<1x96xf32, #tpu.memory_space<vmem>>, vector<1x96xf32>
    %189 = vector.broadcast %188 : vector<1x96xf32> to vector<2x96xf32>
    %190 = arith.addf %187, %189 : vector<2x96xf32>
    %191 = vector.extract_strided_slice %185 {offsets = [0, 0], sizes = [2, 32], strides = [1, 1]} : vector<2x96xf32> to vector<2x32xf32>
    %192 = vector.extract_strided_slice %190 {offsets = [0, 0], sizes = [2, 32], strides = [1, 1]} : vector<2x96xf32> to vector<2x32xf32>
    %193 = arith.addf %191, %192 : vector<2x32xf32>
    %194 = arith.negf %193 : vector<2x32xf32>
    %195 = math.exp %194 : vector<2x32xf32>
    %cst_73 = arith.constant 1.000000e+00 : f32
    %196 = vector.broadcast %cst_73 : f32 to vector<2x32xf32>
    %197 = arith.addf %196, %195 : vector<2x32xf32>
    %198 = arith.divf %196, %197 : vector<2x32xf32>
    %199 = vector.extract_strided_slice %185 {offsets = [0, 32], sizes = [2, 32], strides = [1, 1]} : vector<2x96xf32> to vector<2x32xf32>
    %200 = vector.extract_strided_slice %190 {offsets = [0, 32], sizes = [2, 32], strides = [1, 1]} : vector<2x96xf32> to vector<2x32xf32>
    %201 = arith.addf %199, %200 : vector<2x32xf32>
    %202 = arith.negf %201 : vector<2x32xf32>
    %203 = math.exp %202 : vector<2x32xf32>
    %cst_74 = arith.constant 1.000000e+00 : f32
    %204 = vector.broadcast %cst_74 : f32 to vector<2x32xf32>
    %205 = arith.addf %204, %203 : vector<2x32xf32>
    %206 = arith.divf %204, %205 : vector<2x32xf32>
    %207 = vector.extract_strided_slice %185 {offsets = [0, 64], sizes = [2, 32], strides = [1, 1]} : vector<2x96xf32> to vector<2x32xf32>
    %208 = vector.extract_strided_slice %190 {offsets = [0, 64], sizes = [2, 32], strides = [1, 1]} : vector<2x96xf32> to vector<2x32xf32>
    %209 = arith.mulf %198, %208 : vector<2x32xf32>
    %210 = arith.addf %207, %209 : vector<2x32xf32>
    %211 = math.tanh %210 : vector<2x32xf32>
    %cst_75 = arith.constant 1.000000e+00 : f32
    %212 = vector.broadcast %cst_75 : f32 to vector<2x32xf32>
    %213 = arith.subf %212, %206 : vector<2x32xf32>
    %214 = arith.mulf %213, %211 : vector<2x32xf32>
    %215 = arith.mulf %206, %180 : vector<2x32xf32>
    %216 = arith.addf %214, %215 : vector<2x32xf32>
    %c2_76 = arith.constant 2 : index
    %c0_77 = arith.constant 0 : index
    %c0_78 = arith.constant 0 : index
    %217 = vector.load %arg4[%c2_76, %c0_77, %c0_78] : memref<8x2x32xf32, #tpu.memory_space<vmem>>, vector<1x2x32xf32>
    %218 = vector.shape_cast %217 : vector<1x2x32xf32> to vector<2x32xf32>
    %219 = vector.shape_cast %216 : vector<2x32xf32> to vector<1x2x32xf32>
    tpu.vector_store %arg4[%c2_76, %c0_77, %c0_78], %219 {strides = array<i32>} : memref<8x2x32xf32, #tpu.memory_space<vmem>>, vector<1x2x32xf32>,
    %c1 = arith.constant 1 : index
    %c0_79 = arith.constant 0 : index
    %c0_80 = arith.constant 0 : index
    %220 = vector.load %arg1[%c1, %c0_79, %c0_80] : memref<8x2x96xf32, #tpu.memory_space<vmem>>, vector<1x2x96xf32>
    %221 = vector.shape_cast %220 : vector<1x2x96xf32> to vector<2x96xf32>
    %c0_81 = arith.constant 0 : index
    %c0_82 = arith.constant 0 : index
    %222 = vector.load %arg2[%c0_81, %c0_82] : memref<32x96xf32, #tpu.memory_space<vmem>>, vector<32x96xf32>
    %cst_83 = arith.constant dense<0.000000e+00> : vector<2x96xf32>
    %223 = tpu.matmul %216, %222, %cst_83 {dimension_numbers = #tpu.dot_dimension_numbers<[1], [0], [0], [1], [0, 0, 1, 1], [], []>} : vector<2x32xf32>, vector<32x96xf32>, vector<2x96xf32> -> vector<2x96xf32>
    %c0_84 = arith.constant 0 : index
    %c0_85 = arith.constant 0 : index
    %224 = vector.load %arg3[%c0_84, %c0_85] : memref<1x96xf32, #tpu.memory_space<vmem>>, vector<1x96xf32>
    %225 = vector.broadcast %224 : vector<1x96xf32> to vector<2x96xf32>
    %226 = arith.addf %223, %225 : vector<2x96xf32>
    %227 = vector.extract_strided_slice %221 {offsets = [0, 0], sizes = [2, 32], strides = [1, 1]} : vector<2x96xf32> to vector<2x32xf32>
    %228 = vector.extract_strided_slice %226 {offsets = [0, 0], sizes = [2, 32], strides = [1, 1]} : vector<2x96xf32> to vector<2x32xf32>
    %229 = arith.addf %227, %228 : vector<2x32xf32>
    %230 = arith.negf %229 : vector<2x32xf32>
    %231 = math.exp %230 : vector<2x32xf32>
    %cst_86 = arith.constant 1.000000e+00 : f32
    %232 = vector.broadcast %cst_86 : f32 to vector<2x32xf32>
    %233 = arith.addf %232, %231 : vector<2x32xf32>
    %234 = arith.divf %232, %233 : vector<2x32xf32>
    %235 = vector.extract_strided_slice %221 {offsets = [0, 32], sizes = [2, 32], strides = [1, 1]} : vector<2x96xf32> to vector<2x32xf32>
    %236 = vector.extract_strided_slice %226 {offsets = [0, 32], sizes = [2, 32], strides = [1, 1]} : vector<2x96xf32> to vector<2x32xf32>
    %237 = arith.addf %235, %236 : vector<2x32xf32>
    %238 = arith.negf %237 : vector<2x32xf32>
    %239 = math.exp %238 : vector<2x32xf32>
    %cst_87 = arith.constant 1.000000e+00 : f32
    %240 = vector.broadcast %cst_87 : f32 to vector<2x32xf32>
    %241 = arith.addf %240, %239 : vector<2x32xf32>
    %242 = arith.divf %240, %241 : vector<2x32xf32>
    %243 = vector.extract_strided_slice %221 {offsets = [0, 64], sizes = [2, 32], strides = [1, 1]} : vector<2x96xf32> to vector<2x32xf32>
    %244 = vector.extract_strided_slice %226 {offsets = [0, 64], sizes = [2, 32], strides = [1, 1]} : vector<2x96xf32> to vector<2x32xf32>
    %245 = arith.mulf %234, %244 : vector<2x32xf32>
    %246 = arith.addf %243, %245 : vector<2x32xf32>
    %247 = math.tanh %246 : vector<2x32xf32>
    %cst_88 = arith.constant 1.000000e+00 : f32
    %248 = vector.broadcast %cst_88 : f32 to vector<2x32xf32>
    %249 = arith.subf %248, %242 : vector<2x32xf32>
    %250 = arith.mulf %249, %247 : vector<2x32xf32>
    %251 = arith.mulf %242, %216 : vector<2x32xf32>
    %252 = arith.addf %250, %251 : vector<2x32xf32>
    %c1_89 = arith.constant 1 : index
    %c0_90 = arith.constant 0 : index
    %c0_91 = arith.constant 0 : index
    %253 = vector.load %arg4[%c1_89, %c0_90, %c0_91] : memref<8x2x32xf32, #tpu.memory_space<vmem>>, vector<1x2x32xf32>
    %254 = vector.shape_cast %253 : vector<1x2x32xf32> to vector<2x32xf32>
    %255 = vector.shape_cast %252 : vector<2x32xf32> to vector<1x2x32xf32>
    tpu.vector_store %arg4[%c1_89, %c0_90, %c0_91], %255 {strides = array<i32>} : memref<8x2x32xf32, #tpu.memory_space<vmem>>, vector<1x2x32xf32>,
    %c0_92 = arith.constant 0 : index
    %c0_93 = arith.constant 0 : index
    %c0_94 = arith.constant 0 : index
    %256 = vector.load %arg1[%c0_92, %c0_93, %c0_94] : memref<8x2x96xf32, #tpu.memory_space<vmem>>, vector<1x2x96xf32>
    %257 = vector.shape_cast %256 : vector<1x2x96xf32> to vector<2x96xf32>
    %c0_95 = arith.constant 0 : index
    %c0_96 = arith.constant 0 : index
    %258 = vector.load %arg2[%c0_95, %c0_96] : memref<32x96xf32, #tpu.memory_space<vmem>>, vector<32x96xf32>
    %cst_97 = arith.constant dense<0.000000e+00> : vector<2x96xf32>
    %259 = tpu.matmul %252, %258, %cst_97 {dimension_numbers = #tpu.dot_dimension_numbers<[1], [0], [0], [1], [0, 0, 1, 1], [], []>} : vector<2x32xf32>, vector<32x96xf32>, vector<2x96xf32> -> vector<2x96xf32>
    %c0_98 = arith.constant 0 : index
    %c0_99 = arith.constant 0 : index
    %260 = vector.load %arg3[%c0_98, %c0_99] : memref<1x96xf32, #tpu.memory_space<vmem>>, vector<1x96xf32>
    %261 = vector.broadcast %260 : vector<1x96xf32> to vector<2x96xf32>
    %262 = arith.addf %259, %261 : vector<2x96xf32>
    %263 = vector.extract_strided_slice %257 {offsets = [0, 0], sizes = [2, 32], strides = [1, 1]} : vector<2x96xf32> to vector<2x32xf32>
    %264 = vector.extract_strided_slice %262 {offsets = [0, 0], sizes = [2, 32], strides = [1, 1]} : vector<2x96xf32> to vector<2x32xf32>
    %265 = arith.addf %263, %264 : vector<2x32xf32>
    %266 = arith.negf %265 : vector<2x32xf32>
    %267 = math.exp %266 : vector<2x32xf32>
    %cst_100 = arith.constant 1.000000e+00 : f32
    %268 = vector.broadcast %cst_100 : f32 to vector<2x32xf32>
    %269 = arith.addf %268, %267 : vector<2x32xf32>
    %270 = arith.divf %268, %269 : vector<2x32xf32>
    %271 = vector.extract_strided_slice %257 {offsets = [0, 32], sizes = [2, 32], strides = [1, 1]} : vector<2x96xf32> to vector<2x32xf32>
    %272 = vector.extract_strided_slice %262 {offsets = [0, 32], sizes = [2, 32], strides = [1, 1]} : vector<2x96xf32> to vector<2x32xf32>
    %273 = arith.addf %271, %272 : vector<2x32xf32>
    %274 = arith.negf %273 : vector<2x32xf32>
    %275 = math.exp %274 : vector<2x32xf32>
    %cst_101 = arith.constant 1.000000e+00 : f32
    %276 = vector.broadcast %cst_101 : f32 to vector<2x32xf32>
    %277 = arith.addf %276, %275 : vector<2x32xf32>
    %278 = arith.divf %276, %277 : vector<2x32xf32>
    %279 = vector.extract_strided_slice %257 {offsets = [0, 64], sizes = [2, 32], strides = [1, 1]} : vector<2x96xf32> to vector<2x32xf32>
    %280 = vector.extract_strided_slice %262 {offsets = [0, 64], sizes = [2, 32], strides = [1, 1]} : vector<2x96xf32> to vector<2x32xf32>
    %281 = arith.mulf %270, %280 : vector<2x32xf32>
    %282 = arith.addf %279, %281 : vector<2x32xf32>
    %283 = math.tanh %282 : vector<2x32xf32>
    %cst_102 = arith.constant 1.000000e+00 : f32
    %284 = vector.broadcast %cst_102 : f32 to vector<2x32xf32>
    %285 = arith.subf %284, %278 : vector<2x32xf32>
    %286 = arith.mulf %285, %283 : vector<2x32xf32>
    %287 = arith.mulf %278, %252 : vector<2x32xf32>
    %288 = arith.addf %286, %287 : vector<2x32xf32>
    %c0_103 = arith.constant 0 : index
    %c0_104 = arith.constant 0 : index
    %c0_105 = arith.constant 0 : index
    %289 = vector.load %arg4[%c0_103, %c0_104, %c0_105] : memref<8x2x32xf32, #tpu.memory_space<vmem>>, vector<1x2x32xf32>
    %290 = vector.shape_cast %289 : vector<1x2x32xf32> to vector<2x32xf32>
    %291 = vector.shape_cast %288 : vector<2x32xf32> to vector<1x2x32xf32>
    tpu.vector_store %arg4[%c0_103, %c0_104, %c0_105], %291 {strides = array<i32>} : memref<8x2x32xf32, #tpu.memory_space<vmem>>, vector<1x2x32xf32>,
    %c0_106 = arith.constant 0 : index
    %c0_107 = arith.constant 0 : index
    %292 = vector.load %arg5[%c0_106, %c0_107] : memref<2x32xf32, #tpu.memory_space<vmem>>, vector<2x32xf32>
    tpu.vector_store %arg5[%c0_106, %c0_107], %288 {strides = array<i32>} : memref<2x32xf32, #tpu.memory_space<vmem>>, vector<2x32xf32>,
    return
  }
  func.func @transform_0(%arg0: i32) -> (i32, i32, i32) {
    %c0_i32 = arith.constant 0 : i32
    %0 = arith.subi %c0_i32, %arg0 : i32
    %c0_i32_0 = arith.constant 0 : i32
    %c0_i32_1 = arith.constant 0 : i32
    %c0_i32_2 = arith.constant 0 : i32
    return %0, %c0_i32_0, %c0_i32_1 : i32, i32, i32
  }
  func.func @transform_1(%arg0: i32) -> (i32, i32) {
    %c0_i32 = arith.constant 0 : i32
    %c0_i32_0 = arith.constant 0 : i32
    %c0_i32_1 = arith.constant 0 : i32
    return %c0_i32, %c0_i32_0 : i32, i32
  }
  func.func @transform_2(%arg0: i32) -> (i32, i32) {
    %c0_i32 = arith.constant 0 : i32
    %c0_i32_0 = arith.constant 0 : i32
    %c0_i32_1 = arith.constant 0 : i32
    return %c0_i32, %c0_i32_0 : i32, i32
  }
  func.func @transform_3(%arg0: i32) -> (i32, i32, i32) {
    %c0_i32 = arith.constant 0 : i32
    %0 = arith.subi %c0_i32, %arg0 : i32
    %c0_i32_0 = arith.constant 0 : i32
    %c0_i32_1 = arith.constant 0 : i32
    %c0_i32_2 = arith.constant 0 : i32
    return %0, %c0_i32_0, %c0_i32_1 : i32, i32, i32
  }
}

module attributes {stable_mosaic.version = 11 : i64} {
  func.func @kernel(%arg0: i32, %arg1: memref<6xi32, #tpu.memory_space<smem>>, %arg2: memref<6x2x1xi32, #tpu.memory_space<vmem>>, %arg3: memref<128x96xf32, #tpu.memory_space<vmem>>, %arg4: memref<2x32xf32, #tpu.memory_space<vmem>>, %arg5: memref<32x96xf32, #tpu.memory_space<vmem>>, %arg6: memref<1x96xf32, #tpu.memory_space<vmem>>, %arg7: memref<32x128xf32, #tpu.memory_space<vmem>>, %arg8: memref<1x128xf32, #tpu.memory_space<vmem>>, %arg9: memref<6x2x128xf32, #tpu.memory_space<vmem>>, %arg10: memref<2x32xf32, #tpu.memory_space<vmem>>, %arg11: memref<2x128xf32, #tpu.memory_space<vmem>>) attributes {dimension_semantics = [#tpu.dimension_semantics<arbitrary>], iteration_bounds = array<i64: 1>, scalar_prefetch = 1 : i64, scratch_operands = 2 : i64, tpu.core_type = #tpu.core_type<tc>, window_params = [{transform_indices = @transform_0, window_bounds = array<i64: 6, 2, 1>}, {pipeline_mode = #tpu.pipeline_mode<synchronous>, transform_indices = @transform_1, window_bounds = array<i64: 128, 96>}, {pipeline_mode = #tpu.pipeline_mode<synchronous>, transform_indices = @transform_2, window_bounds = array<i64: 2, 32>}, {pipeline_mode = #tpu.pipeline_mode<synchronous>, transform_indices = @transform_3, window_bounds = array<i64: 32, 96>}, {pipeline_mode = #tpu.pipeline_mode<synchronous>, transform_indices = @transform_4, window_bounds = array<i64: 1, 96>}, {pipeline_mode = #tpu.pipeline_mode<synchronous>, transform_indices = @transform_5, window_bounds = array<i64: 32, 128>}, {pipeline_mode = #tpu.pipeline_mode<synchronous>, transform_indices = @transform_6, window_bounds = array<i64: 1, 128>}, {transform_indices = @transform_7, window_bounds = array<i64: 6, 2, 128>}]} {
    %0 = tpu.iota {dimensions = array<i32: 1>} : vector<2x128xi32>
    %c0_i32 = arith.constant 0 : i32
    %1 = arith.cmpi eq, %arg0, %c0_i32 : i32
    %2 = arith.extui %1 : i1 to i32
    %c0_i32_0 = arith.constant 0 : i32
    %3 = arith.cmpi ne, %2, %c0_i32_0 : i32
    scf.if %3 {
      %c0_169 = arith.constant 0 : index
      %c0_170 = arith.constant 0 : index
      %440 = vector.load %arg4[%c0_169, %c0_170] : memref<2x32xf32, #tpu.memory_space<vmem>>, vector<2x32xf32>
      %c0_171 = arith.constant 0 : index
      %c0_172 = arith.constant 0 : index
      %441 = vector.load %arg10[%c0_171, %c0_172] : memref<2x32xf32, #tpu.memory_space<vmem>>, vector<2x32xf32>
      tpu.vector_store %arg10[%c0_171, %c0_172], %440 {strides = array<i32>} : memref<2x32xf32, #tpu.memory_space<vmem>>, vector<2x32xf32>,
      %c10_i32 = arith.constant 10 : i32
      %442 = vector.broadcast %c10_i32 : i32 to vector<2x128xi32>
      %443 = arith.cmpi eq, %0, %442 : vector<2x128xi32>
      %444 = arith.extui %443 : vector<2x128xi1> to vector<2x128xi32>
      %445 = arith.sitofp %444 : vector<2x128xi32> to vector<2x128xf32>
      %c0_173 = arith.constant 0 : index
      %c0_174 = arith.constant 0 : index
      %446 = vector.load %arg11[%c0_173, %c0_174] : memref<2x128xf32, #tpu.memory_space<vmem>>, vector<2x128xf32>
      tpu.vector_store %arg11[%c0_173, %c0_174], %445 {strides = array<i32>} : memref<2x128xf32, #tpu.memory_space<vmem>>, vector<2x128xf32>,
    } else {
    }
    %c0 = arith.constant 0 : index
    %c0_1 = arith.constant 0 : index
    %4 = vector.load %arg11[%c0, %c0_1] : memref<2x128xf32, #tpu.memory_space<vmem>>, vector<2x128xf32>
    %c0_2 = arith.constant 0 : index
    %c0_3 = arith.constant 0 : index
    %5 = vector.load %arg10[%c0_2, %c0_3] : memref<2x32xf32, #tpu.memory_space<vmem>>, vector<2x32xf32>
    %c0_4 = arith.constant 0 : index
    %c0_5 = arith.constant 0 : index
    %6 = vector.load %arg3[%c0_4, %c0_5] : memref<128x96xf32, #tpu.memory_space<vmem>>, vector<128x96xf32>
    %cst = arith.constant dense<0.000000e+00> : vector<2x96xf32>
    %7 = tpu.matmul %4, %6, %cst {dimension_numbers = #tpu.dot_dimension_numbers<[1], [0], [0], [1], [0, 0, 1, 1], [], []>} : vector<2x128xf32>, vector<128x96xf32>, vector<2x96xf32> -> vector<2x96xf32>
    %c0_6 = arith.constant 0 : index
    %c0_7 = arith.constant 0 : index
    %8 = vector.load %arg5[%c0_6, %c0_7] : memref<32x96xf32, #tpu.memory_space<vmem>>, vector<32x96xf32>
    %cst_8 = arith.constant dense<0.000000e+00> : vector<2x96xf32>
    %9 = tpu.matmul %5, %8, %cst_8 {dimension_numbers = #tpu.dot_dimension_numbers<[1], [0], [0], [1], [0, 0, 1, 1], [], []>} : vector<2x32xf32>, vector<32x96xf32>, vector<2x96xf32> -> vector<2x96xf32>
    %c0_9 = arith.constant 0 : index
    %c0_10 = arith.constant 0 : index
    %10 = vector.load %arg6[%c0_9, %c0_10] : memref<1x96xf32, #tpu.memory_space<vmem>>, vector<1x96xf32>
    %11 = vector.broadcast %10 : vector<1x96xf32> to vector<2x96xf32>
    %12 = arith.addf %9, %11 : vector<2x96xf32>
    %13 = vector.extract_strided_slice %7 {offsets = [0, 0], sizes = [2, 32], strides = [1, 1]} : vector<2x96xf32> to vector<2x32xf32>
    %14 = vector.extract_strided_slice %12 {offsets = [0, 0], sizes = [2, 32], strides = [1, 1]} : vector<2x96xf32> to vector<2x32xf32>
    %15 = arith.addf %13, %14 : vector<2x32xf32>
    %16 = arith.negf %15 : vector<2x32xf32>
    %17 = math.exp %16 : vector<2x32xf32>
    %cst_11 = arith.constant 1.000000e+00 : f32
    %18 = vector.broadcast %cst_11 : f32 to vector<2x32xf32>
    %19 = arith.addf %18, %17 : vector<2x32xf32>
    %20 = arith.divf %18, %19 : vector<2x32xf32>
    %21 = vector.extract_strided_slice %7 {offsets = [0, 32], sizes = [2, 32], strides = [1, 1]} : vector<2x96xf32> to vector<2x32xf32>
    %22 = vector.extract_strided_slice %12 {offsets = [0, 32], sizes = [2, 32], strides = [1, 1]} : vector<2x96xf32> to vector<2x32xf32>
    %23 = arith.addf %21, %22 : vector<2x32xf32>
    %24 = arith.negf %23 : vector<2x32xf32>
    %25 = math.exp %24 : vector<2x32xf32>
    %cst_12 = arith.constant 1.000000e+00 : f32
    %26 = vector.broadcast %cst_12 : f32 to vector<2x32xf32>
    %27 = arith.addf %26, %25 : vector<2x32xf32>
    %28 = arith.divf %26, %27 : vector<2x32xf32>
    %29 = vector.extract_strided_slice %7 {offsets = [0, 64], sizes = [2, 32], strides = [1, 1]} : vector<2x96xf32> to vector<2x32xf32>
    %30 = vector.extract_strided_slice %12 {offsets = [0, 64], sizes = [2, 32], strides = [1, 1]} : vector<2x96xf32> to vector<2x32xf32>
    %31 = arith.mulf %20, %30 : vector<2x32xf32>
    %32 = arith.addf %29, %31 : vector<2x32xf32>
    %33 = math.tanh %32 : vector<2x32xf32>
    %cst_13 = arith.constant 1.000000e+00 : f32
    %34 = vector.broadcast %cst_13 : f32 to vector<2x32xf32>
    %35 = arith.subf %34, %28 : vector<2x32xf32>
    %36 = arith.mulf %35, %33 : vector<2x32xf32>
    %37 = arith.mulf %28, %5 : vector<2x32xf32>
    %38 = arith.addf %36, %37 : vector<2x32xf32>
    %c0_14 = arith.constant 0 : index
    %c0_15 = arith.constant 0 : index
    %39 = vector.load %arg7[%c0_14, %c0_15] : memref<32x128xf32, #tpu.memory_space<vmem>>, vector<32x128xf32>
    %cst_16 = arith.constant dense<0.000000e+00> : vector<2x128xf32>
    %40 = tpu.matmul %38, %39, %cst_16 {dimension_numbers = #tpu.dot_dimension_numbers<[1], [0], [0], [1], [0, 0, 1, 1], [], []>} : vector<2x32xf32>, vector<32x128xf32>, vector<2x128xf32> -> vector<2x128xf32>
    %c0_17 = arith.constant 0 : index
    %c0_18 = arith.constant 0 : index
    %41 = vector.load %arg8[%c0_17, %c0_18] : memref<1x128xf32, #tpu.memory_space<vmem>>, vector<1x128xf32>
    %42 = vector.broadcast %41 : vector<1x128xf32> to vector<2x128xf32>
    %43 = arith.addf %40, %42 : vector<2x128xf32>
    %c0_19 = arith.constant 0 : index
    %c0_20 = arith.constant 0 : index
    %c0_21 = arith.constant 0 : index
    %44 = vector.load %arg9[%c0_19, %c0_20, %c0_21] : memref<6x2x128xf32, #tpu.memory_space<vmem>>, vector<1x2x128xf32>
    %45 = vector.shape_cast %44 : vector<1x2x128xf32> to vector<2x128xf32>
    %46 = vector.shape_cast %43 : vector<2x128xf32> to vector<1x2x128xf32>
    tpu.vector_store %arg9[%c0_19, %c0_20, %c0_21], %46 {strides = array<i32>} : memref<6x2x128xf32, #tpu.memory_space<vmem>>, vector<1x2x128xf32>,
    %cst_22 = arith.constant dense<0xFF800000> : vector<2xf32>
    %47 = vector.multi_reduction <maximumf>, %43, %cst_22 [1] : vector<2x128xf32> to vector<2xf32>
    %48 = vector.shape_cast %47 : vector<2xf32> to vector<2x1xf32>
    %49 = vector.broadcast %48 : vector<2x1xf32> to vector<2x128xf32>
    %50 = arith.cmpf oeq, %43, %49 : vector<2x128xf32>
    %c128_i32 = arith.constant 128 : i32
    %51 = vector.broadcast %c128_i32 : i32 to vector<2x128xi32>
    %52 = arith.select %50, %0, %51 : vector<2x128xi1>, vector<2x128xi32>
    %cst_23 = arith.constant dense<2147483647> : vector<2xi32>
    %53 = vector.multi_reduction <minsi>, %52, %cst_23 [1] : vector<2x128xi32> to vector<2xi32>
    %54 = vector.shape_cast %53 : vector<2xi32> to vector<2x1xi32>
    %55 = vector.broadcast %54 : vector<2x1xi32> to vector<2x128xi32>
    %56 = arith.cmpi eq, %0, %55 : vector<2x128xi32>
    %57 = arith.extui %56 : vector<2x128xi1> to vector<2x128xi32>
    %58 = arith.sitofp %57 : vector<2x128xi32> to vector<2x128xf32>
    %c0_24 = arith.constant 0 : index
    %c0_25 = arith.constant 0 : index
    %c0_26 = arith.constant 0 : index
    %59 = vector.load %arg2[%c0_24, %c0_25, %c0_26] : memref<6x2x1xi32, #tpu.memory_space<vmem>>, vector<1x2x1xi32>
    %60 = vector.shape_cast %59 : vector<1x2x1xi32> to vector<2x1xi32>
    %61 = vector.broadcast %60 : vector<2x1xi32> to vector<2x128xi32>
    %62 = arith.cmpi eq, %0, %61 : vector<2x128xi32>
    %63 = arith.extui %62 : vector<2x128xi1> to vector<2x128xi32>
    %64 = arith.sitofp %63 : vector<2x128xi32> to vector<2x128xf32>
    %c6_i32 = arith.constant 6 : i32
    %65 = arith.muli %arg0, %c6_i32 : i32
    %c0_i32_27 = arith.constant 0 : i32
    %66 = arith.addi %65, %c0_i32_27 : i32
    %67 = arith.index_cast %66 : i32 to index
    %68 = memref.load %arg1[%67] : memref<6xi32, #tpu.memory_space<smem>>
    %c0_i32_28 = arith.constant 0 : i32
    %69 = arith.cmpi sgt, %68, %c0_i32_28 : i32
    %70 = arith.extui %69 : i1 to i32
    %71 = arith.sitofp %70 : i32 to f32
    %72 = vector.broadcast %71 : f32 to vector<2x128xf32>
    %73 = arith.mulf %72, %58 : vector<2x128xf32>
    %cst_29 = arith.constant 1.000000e+00 : f32
    %74 = arith.subf %cst_29, %71 : f32
    %75 = vector.broadcast %74 : f32 to vector<2x128xf32>
    %76 = arith.mulf %75, %64 : vector<2x128xf32>
    %77 = arith.addf %73, %76 : vector<2x128xf32>
    %c0_30 = arith.constant 0 : index
    %c0_31 = arith.constant 0 : index
    %78 = vector.load %arg3[%c0_30, %c0_31] : memref<128x96xf32, #tpu.memory_space<vmem>>, vector<128x96xf32>
    %cst_32 = arith.constant dense<0.000000e+00> : vector<2x96xf32>
    %79 = tpu.matmul %77, %78, %cst_32 {dimension_numbers = #tpu.dot_dimension_numbers<[1], [0], [0], [1], [0, 0, 1, 1], [], []>} : vector<2x128xf32>, vector<128x96xf32>, vector<2x96xf32> -> vector<2x96xf32>
    %c0_33 = arith.constant 0 : index
    %c0_34 = arith.constant 0 : index
    %80 = vector.load %arg5[%c0_33, %c0_34] : memref<32x96xf32, #tpu.memory_space<vmem>>, vector<32x96xf32>
    %cst_35 = arith.constant dense<0.000000e+00> : vector<2x96xf32>
    %81 = tpu.matmul %38, %80, %cst_35 {dimension_numbers = #tpu.dot_dimension_numbers<[1], [0], [0], [1], [0, 0, 1, 1], [], []>} : vector<2x32xf32>, vector<32x96xf32>, vector<2x96xf32> -> vector<2x96xf32>
    %c0_36 = arith.constant 0 : index
    %c0_37 = arith.constant 0 : index
    %82 = vector.load %arg6[%c0_36, %c0_37] : memref<1x96xf32, #tpu.memory_space<vmem>>, vector<1x96xf32>
    %83 = vector.broadcast %82 : vector<1x96xf32> to vector<2x96xf32>
    %84 = arith.addf %81, %83 : vector<2x96xf32>
    %85 = vector.extract_strided_slice %79 {offsets = [0, 0], sizes = [2, 32], strides = [1, 1]} : vector<2x96xf32> to vector<2x32xf32>
    %86 = vector.extract_strided_slice %84 {offsets = [0, 0], sizes = [2, 32], strides = [1, 1]} : vector<2x96xf32> to vector<2x32xf32>
    %87 = arith.addf %85, %86 : vector<2x32xf32>
    %88 = arith.negf %87 : vector<2x32xf32>
    %89 = math.exp %88 : vector<2x32xf32>
    %cst_38 = arith.constant 1.000000e+00 : f32
    %90 = vector.broadcast %cst_38 : f32 to vector<2x32xf32>
    %91 = arith.addf %90, %89 : vector<2x32xf32>
    %92 = arith.divf %90, %91 : vector<2x32xf32>
    %93 = vector.extract_strided_slice %79 {offsets = [0, 32], sizes = [2, 32], strides = [1, 1]} : vector<2x96xf32> to vector<2x32xf32>
    %94 = vector.extract_strided_slice %84 {offsets = [0, 32], sizes = [2, 32], strides = [1, 1]} : vector<2x96xf32> to vector<2x32xf32>
    %95 = arith.addf %93, %94 : vector<2x32xf32>
    %96 = arith.negf %95 : vector<2x32xf32>
    %97 = math.exp %96 : vector<2x32xf32>
    %cst_39 = arith.constant 1.000000e+00 : f32
    %98 = vector.broadcast %cst_39 : f32 to vector<2x32xf32>
    %99 = arith.addf %98, %97 : vector<2x32xf32>
    %100 = arith.divf %98, %99 : vector<2x32xf32>
    %101 = vector.extract_strided_slice %79 {offsets = [0, 64], sizes = [2, 32], strides = [1, 1]} : vector<2x96xf32> to vector<2x32xf32>
    %102 = vector.extract_strided_slice %84 {offsets = [0, 64], sizes = [2, 32], strides = [1, 1]} : vector<2x96xf32> to vector<2x32xf32>
    %103 = arith.mulf %92, %102 : vector<2x32xf32>
    %104 = arith.addf %101, %103 : vector<2x32xf32>
    %105 = math.tanh %104 : vector<2x32xf32>
    %cst_40 = arith.constant 1.000000e+00 : f32
    %106 = vector.broadcast %cst_40 : f32 to vector<2x32xf32>
    %107 = arith.subf %106, %100 : vector<2x32xf32>
    %108 = arith.mulf %107, %105 : vector<2x32xf32>
    %109 = arith.mulf %100, %38 : vector<2x32xf32>
    %110 = arith.addf %108, %109 : vector<2x32xf32>
    %c0_41 = arith.constant 0 : index
    %c0_42 = arith.constant 0 : index
    %111 = vector.load %arg7[%c0_41, %c0_42] : memref<32x128xf32, #tpu.memory_space<vmem>>, vector<32x128xf32>
    %cst_43 = arith.constant dense<0.000000e+00> : vector<2x128xf32>
    %112 = tpu.matmul %110, %111, %cst_43 {dimension_numbers = #tpu.dot_dimension_numbers<[1], [0], [0], [1], [0, 0, 1, 1], [], []>} : vector<2x32xf32>, vector<32x128xf32>, vector<2x128xf32> -> vector<2x128xf32>
    %c0_44 = arith.constant 0 : index
    %c0_45 = arith.constant 0 : index
    %113 = vector.load %arg8[%c0_44, %c0_45] : memref<1x128xf32, #tpu.memory_space<vmem>>, vector<1x128xf32>
    %114 = vector.broadcast %113 : vector<1x128xf32> to vector<2x128xf32>
    %115 = arith.addf %112, %114 : vector<2x128xf32>
    %c1 = arith.constant 1 : index
    %c0_46 = arith.constant 0 : index
    %c0_47 = arith.constant 0 : index
    %116 = vector.load %arg9[%c1, %c0_46, %c0_47] : memref<6x2x128xf32, #tpu.memory_space<vmem>>, vector<1x2x128xf32>
    %117 = vector.shape_cast %116 : vector<1x2x128xf32> to vector<2x128xf32>
    %118 = vector.shape_cast %115 : vector<2x128xf32> to vector<1x2x128xf32>
    tpu.vector_store %arg9[%c1, %c0_46, %c0_47], %118 {strides = array<i32>} : memref<6x2x128xf32, #tpu.memory_space<vmem>>, vector<1x2x128xf32>,
    %cst_48 = arith.constant dense<0xFF800000> : vector<2xf32>
    %119 = vector.multi_reduction <maximumf>, %115, %cst_48 [1] : vector<2x128xf32> to vector<2xf32>
    %120 = vector.shape_cast %119 : vector<2xf32> to vector<2x1xf32>
    %121 = vector.broadcast %120 : vector<2x1xf32> to vector<2x128xf32>
    %122 = arith.cmpf oeq, %115, %121 : vector<2x128xf32>
    %c128_i32_49 = arith.constant 128 : i32
    %123 = vector.broadcast %c128_i32_49 : i32 to vector<2x128xi32>
    %124 = arith.select %122, %0, %123 : vector<2x128xi1>, vector<2x128xi32>
    %cst_50 = arith.constant dense<2147483647> : vector<2xi32>
    %125 = vector.multi_reduction <minsi>, %124, %cst_50 [1] : vector<2x128xi32> to vector<2xi32>
    %126 = vector.shape_cast %125 : vector<2xi32> to vector<2x1xi32>
    %127 = vector.broadcast %126 : vector<2x1xi32> to vector<2x128xi32>
    %128 = arith.cmpi eq, %0, %127 : vector<2x128xi32>
    %129 = arith.extui %128 : vector<2x128xi1> to vector<2x128xi32>
    %130 = arith.sitofp %129 : vector<2x128xi32> to vector<2x128xf32>
    %c1_51 = arith.constant 1 : index
    %c0_52 = arith.constant 0 : index
    %c0_53 = arith.constant 0 : index
    %131 = vector.load %arg2[%c1_51, %c0_52, %c0_53] : memref<6x2x1xi32, #tpu.memory_space<vmem>>, vector<1x2x1xi32>
    %132 = vector.shape_cast %131 : vector<1x2x1xi32> to vector<2x1xi32>
    %133 = vector.broadcast %132 : vector<2x1xi32> to vector<2x128xi32>
    %134 = arith.cmpi eq, %0, %133 : vector<2x128xi32>
    %135 = arith.extui %134 : vector<2x128xi1> to vector<2x128xi32>
    %136 = arith.sitofp %135 : vector<2x128xi32> to vector<2x128xf32>
    %c6_i32_54 = arith.constant 6 : i32
    %137 = arith.muli %arg0, %c6_i32_54 : i32
    %c1_i32 = arith.constant 1 : i32
    %138 = arith.addi %137, %c1_i32 : i32
    %139 = arith.index_cast %138 : i32 to index
    %140 = memref.load %arg1[%139] : memref<6xi32, #tpu.memory_space<smem>>
    %c0_i32_55 = arith.constant 0 : i32
    %141 = arith.cmpi sgt, %140, %c0_i32_55 : i32
    %142 = arith.extui %141 : i1 to i32
    %143 = arith.sitofp %142 : i32 to f32
    %144 = vector.broadcast %143 : f32 to vector<2x128xf32>
    %145 = arith.mulf %144, %130 : vector<2x128xf32>
    %cst_56 = arith.constant 1.000000e+00 : f32
    %146 = arith.subf %cst_56, %143 : f32
    %147 = vector.broadcast %146 : f32 to vector<2x128xf32>
    %148 = arith.mulf %147, %136 : vector<2x128xf32>
    %149 = arith.addf %145, %148 : vector<2x128xf32>
    %c0_57 = arith.constant 0 : index
    %c0_58 = arith.constant 0 : index
    %150 = vector.load %arg3[%c0_57, %c0_58] : memref<128x96xf32, #tpu.memory_space<vmem>>, vector<128x96xf32>
    %cst_59 = arith.constant dense<0.000000e+00> : vector<2x96xf32>
    %151 = tpu.matmul %149, %150, %cst_59 {dimension_numbers = #tpu.dot_dimension_numbers<[1], [0], [0], [1], [0, 0, 1, 1], [], []>} : vector<2x128xf32>, vector<128x96xf32>, vector<2x96xf32> -> vector<2x96xf32>
    %c0_60 = arith.constant 0 : index
    %c0_61 = arith.constant 0 : index
    %152 = vector.load %arg5[%c0_60, %c0_61] : memref<32x96xf32, #tpu.memory_space<vmem>>, vector<32x96xf32>
    %cst_62 = arith.constant dense<0.000000e+00> : vector<2x96xf32>
    %153 = tpu.matmul %110, %152, %cst_62 {dimension_numbers = #tpu.dot_dimension_numbers<[1], [0], [0], [1], [0, 0, 1, 1], [], []>} : vector<2x32xf32>, vector<32x96xf32>, vector<2x96xf32> -> vector<2x96xf32>
    %c0_63 = arith.constant 0 : index
    %c0_64 = arith.constant 0 : index
    %154 = vector.load %arg6[%c0_63, %c0_64] : memref<1x96xf32, #tpu.memory_space<vmem>>, vector<1x96xf32>
    %155 = vector.broadcast %154 : vector<1x96xf32> to vector<2x96xf32>
    %156 = arith.addf %153, %155 : vector<2x96xf32>
    %157 = vector.extract_strided_slice %151 {offsets = [0, 0], sizes = [2, 32], strides = [1, 1]} : vector<2x96xf32> to vector<2x32xf32>
    %158 = vector.extract_strided_slice %156 {offsets = [0, 0], sizes = [2, 32], strides = [1, 1]} : vector<2x96xf32> to vector<2x32xf32>
    %159 = arith.addf %157, %158 : vector<2x32xf32>
    %160 = arith.negf %159 : vector<2x32xf32>
    %161 = math.exp %160 : vector<2x32xf32>
    %cst_65 = arith.constant 1.000000e+00 : f32
    %162 = vector.broadcast %cst_65 : f32 to vector<2x32xf32>
    %163 = arith.addf %162, %161 : vector<2x32xf32>
    %164 = arith.divf %162, %163 : vector<2x32xf32>
    %165 = vector.extract_strided_slice %151 {offsets = [0, 32], sizes = [2, 32], strides = [1, 1]} : vector<2x96xf32> to vector<2x32xf32>
    %166 = vector.extract_strided_slice %156 {offsets = [0, 32], sizes = [2, 32], strides = [1, 1]} : vector<2x96xf32> to vector<2x32xf32>
    %167 = arith.addf %165, %166 : vector<2x32xf32>
    %168 = arith.negf %167 : vector<2x32xf32>
    %169 = math.exp %168 : vector<2x32xf32>
    %cst_66 = arith.constant 1.000000e+00 : f32
    %170 = vector.broadcast %cst_66 : f32 to vector<2x32xf32>
    %171 = arith.addf %170, %169 : vector<2x32xf32>
    %172 = arith.divf %170, %171 : vector<2x32xf32>
    %173 = vector.extract_strided_slice %151 {offsets = [0, 64], sizes = [2, 32], strides = [1, 1]} : vector<2x96xf32> to vector<2x32xf32>
    %174 = vector.extract_strided_slice %156 {offsets = [0, 64], sizes = [2, 32], strides = [1, 1]} : vector<2x96xf32> to vector<2x32xf32>
    %175 = arith.mulf %164, %174 : vector<2x32xf32>
    %176 = arith.addf %173, %175 : vector<2x32xf32>
    %177 = math.tanh %176 : vector<2x32xf32>
    %cst_67 = arith.constant 1.000000e+00 : f32
    %178 = vector.broadcast %cst_67 : f32 to vector<2x32xf32>
    %179 = arith.subf %178, %172 : vector<2x32xf32>
    %180 = arith.mulf %179, %177 : vector<2x32xf32>
    %181 = arith.mulf %172, %110 : vector<2x32xf32>
    %182 = arith.addf %180, %181 : vector<2x32xf32>
    %c0_68 = arith.constant 0 : index
    %c0_69 = arith.constant 0 : index
    %183 = vector.load %arg7[%c0_68, %c0_69] : memref<32x128xf32, #tpu.memory_space<vmem>>, vector<32x128xf32>
    %cst_70 = arith.constant dense<0.000000e+00> : vector<2x128xf32>
    %184 = tpu.matmul %182, %183, %cst_70 {dimension_numbers = #tpu.dot_dimension_numbers<[1], [0], [0], [1], [0, 0, 1, 1], [], []>} : vector<2x32xf32>, vector<32x128xf32>, vector<2x128xf32> -> vector<2x128xf32>
    %c0_71 = arith.constant 0 : index
    %c0_72 = arith.constant 0 : index
    %185 = vector.load %arg8[%c0_71, %c0_72] : memref<1x128xf32, #tpu.memory_space<vmem>>, vector<1x128xf32>
    %186 = vector.broadcast %185 : vector<1x128xf32> to vector<2x128xf32>
    %187 = arith.addf %184, %186 : vector<2x128xf32>
    %c2 = arith.constant 2 : index
    %c0_73 = arith.constant 0 : index
    %c0_74 = arith.constant 0 : index
    %188 = vector.load %arg9[%c2, %c0_73, %c0_74] : memref<6x2x128xf32, #tpu.memory_space<vmem>>, vector<1x2x128xf32>
    %189 = vector.shape_cast %188 : vector<1x2x128xf32> to vector<2x128xf32>
    %190 = vector.shape_cast %187 : vector<2x128xf32> to vector<1x2x128xf32>
    tpu.vector_store %arg9[%c2, %c0_73, %c0_74], %190 {strides = array<i32>} : memref<6x2x128xf32, #tpu.memory_space<vmem>>, vector<1x2x128xf32>,
    %cst_75 = arith.constant dense<0xFF800000> : vector<2xf32>
    %191 = vector.multi_reduction <maximumf>, %187, %cst_75 [1] : vector<2x128xf32> to vector<2xf32>
    %192 = vector.shape_cast %191 : vector<2xf32> to vector<2x1xf32>
    %193 = vector.broadcast %192 : vector<2x1xf32> to vector<2x128xf32>
    %194 = arith.cmpf oeq, %187, %193 : vector<2x128xf32>
    %c128_i32_76 = arith.constant 128 : i32
    %195 = vector.broadcast %c128_i32_76 : i32 to vector<2x128xi32>
    %196 = arith.select %194, %0, %195 : vector<2x128xi1>, vector<2x128xi32>
    %cst_77 = arith.constant dense<2147483647> : vector<2xi32>
    %197 = vector.multi_reduction <minsi>, %196, %cst_77 [1] : vector<2x128xi32> to vector<2xi32>
    %198 = vector.shape_cast %197 : vector<2xi32> to vector<2x1xi32>
    %199 = vector.broadcast %198 : vector<2x1xi32> to vector<2x128xi32>
    %200 = arith.cmpi eq, %0, %199 : vector<2x128xi32>
    %201 = arith.extui %200 : vector<2x128xi1> to vector<2x128xi32>
    %202 = arith.sitofp %201 : vector<2x128xi32> to vector<2x128xf32>
    %c2_78 = arith.constant 2 : index
    %c0_79 = arith.constant 0 : index
    %c0_80 = arith.constant 0 : index
    %203 = vector.load %arg2[%c2_78, %c0_79, %c0_80] : memref<6x2x1xi32, #tpu.memory_space<vmem>>, vector<1x2x1xi32>
    %204 = vector.shape_cast %203 : vector<1x2x1xi32> to vector<2x1xi32>
    %205 = vector.broadcast %204 : vector<2x1xi32> to vector<2x128xi32>
    %206 = arith.cmpi eq, %0, %205 : vector<2x128xi32>
    %207 = arith.extui %206 : vector<2x128xi1> to vector<2x128xi32>
    %208 = arith.sitofp %207 : vector<2x128xi32> to vector<2x128xf32>
    %c6_i32_81 = arith.constant 6 : i32
    %209 = arith.muli %arg0, %c6_i32_81 : i32
    %c2_i32 = arith.constant 2 : i32
    %210 = arith.addi %209, %c2_i32 : i32
    %211 = arith.index_cast %210 : i32 to index
    %212 = memref.load %arg1[%211] : memref<6xi32, #tpu.memory_space<smem>>
    %c0_i32_82 = arith.constant 0 : i32
    %213 = arith.cmpi sgt, %212, %c0_i32_82 : i32
    %214 = arith.extui %213 : i1 to i32
    %215 = arith.sitofp %214 : i32 to f32
    %216 = vector.broadcast %215 : f32 to vector<2x128xf32>
    %217 = arith.mulf %216, %202 : vector<2x128xf32>
    %cst_83 = arith.constant 1.000000e+00 : f32
    %218 = arith.subf %cst_83, %215 : f32
    %219 = vector.broadcast %218 : f32 to vector<2x128xf32>
    %220 = arith.mulf %219, %208 : vector<2x128xf32>
    %221 = arith.addf %217, %220 : vector<2x128xf32>
    %c0_84 = arith.constant 0 : index
    %c0_85 = arith.constant 0 : index
    %222 = vector.load %arg3[%c0_84, %c0_85] : memref<128x96xf32, #tpu.memory_space<vmem>>, vector<128x96xf32>
    %cst_86 = arith.constant dense<0.000000e+00> : vector<2x96xf32>
    %223 = tpu.matmul %221, %222, %cst_86 {dimension_numbers = #tpu.dot_dimension_numbers<[1], [0], [0], [1], [0, 0, 1, 1], [], []>} : vector<2x128xf32>, vector<128x96xf32>, vector<2x96xf32> -> vector<2x96xf32>
    %c0_87 = arith.constant 0 : index
    %c0_88 = arith.constant 0 : index
    %224 = vector.load %arg5[%c0_87, %c0_88] : memref<32x96xf32, #tpu.memory_space<vmem>>, vector<32x96xf32>
    %cst_89 = arith.constant dense<0.000000e+00> : vector<2x96xf32>
    %225 = tpu.matmul %182, %224, %cst_89 {dimension_numbers = #tpu.dot_dimension_numbers<[1], [0], [0], [1], [0, 0, 1, 1], [], []>} : vector<2x32xf32>, vector<32x96xf32>, vector<2x96xf32> -> vector<2x96xf32>
    %c0_90 = arith.constant 0 : index
    %c0_91 = arith.constant 0 : index
    %226 = vector.load %arg6[%c0_90, %c0_91] : memref<1x96xf32, #tpu.memory_space<vmem>>, vector<1x96xf32>
    %227 = vector.broadcast %226 : vector<1x96xf32> to vector<2x96xf32>
    %228 = arith.addf %225, %227 : vector<2x96xf32>
    %229 = vector.extract_strided_slice %223 {offsets = [0, 0], sizes = [2, 32], strides = [1, 1]} : vector<2x96xf32> to vector<2x32xf32>
    %230 = vector.extract_strided_slice %228 {offsets = [0, 0], sizes = [2, 32], strides = [1, 1]} : vector<2x96xf32> to vector<2x32xf32>
    %231 = arith.addf %229, %230 : vector<2x32xf32>
    %232 = arith.negf %231 : vector<2x32xf32>
    %233 = math.exp %232 : vector<2x32xf32>
    %cst_92 = arith.constant 1.000000e+00 : f32
    %234 = vector.broadcast %cst_92 : f32 to vector<2x32xf32>
    %235 = arith.addf %234, %233 : vector<2x32xf32>
    %236 = arith.divf %234, %235 : vector<2x32xf32>
    %237 = vector.extract_strided_slice %223 {offsets = [0, 32], sizes = [2, 32], strides = [1, 1]} : vector<2x96xf32> to vector<2x32xf32>
    %238 = vector.extract_strided_slice %228 {offsets = [0, 32], sizes = [2, 32], strides = [1, 1]} : vector<2x96xf32> to vector<2x32xf32>
    %239 = arith.addf %237, %238 : vector<2x32xf32>
    %240 = arith.negf %239 : vector<2x32xf32>
    %241 = math.exp %240 : vector<2x32xf32>
    %cst_93 = arith.constant 1.000000e+00 : f32
    %242 = vector.broadcast %cst_93 : f32 to vector<2x32xf32>
    %243 = arith.addf %242, %241 : vector<2x32xf32>
    %244 = arith.divf %242, %243 : vector<2x32xf32>
    %245 = vector.extract_strided_slice %223 {offsets = [0, 64], sizes = [2, 32], strides = [1, 1]} : vector<2x96xf32> to vector<2x32xf32>
    %246 = vector.extract_strided_slice %228 {offsets = [0, 64], sizes = [2, 32], strides = [1, 1]} : vector<2x96xf32> to vector<2x32xf32>
    %247 = arith.mulf %236, %246 : vector<2x32xf32>
    %248 = arith.addf %245, %247 : vector<2x32xf32>
    %249 = math.tanh %248 : vector<2x32xf32>
    %cst_94 = arith.constant 1.000000e+00 : f32
    %250 = vector.broadcast %cst_94 : f32 to vector<2x32xf32>
    %251 = arith.subf %250, %244 : vector<2x32xf32>
    %252 = arith.mulf %251, %249 : vector<2x32xf32>
    %253 = arith.mulf %244, %182 : vector<2x32xf32>
    %254 = arith.addf %252, %253 : vector<2x32xf32>
    %c0_95 = arith.constant 0 : index
    %c0_96 = arith.constant 0 : index
    %255 = vector.load %arg7[%c0_95, %c0_96] : memref<32x128xf32, #tpu.memory_space<vmem>>, vector<32x128xf32>
    %cst_97 = arith.constant dense<0.000000e+00> : vector<2x128xf32>
    %256 = tpu.matmul %254, %255, %cst_97 {dimension_numbers = #tpu.dot_dimension_numbers<[1], [0], [0], [1], [0, 0, 1, 1], [], []>} : vector<2x32xf32>, vector<32x128xf32>, vector<2x128xf32> -> vector<2x128xf32>
    %c0_98 = arith.constant 0 : index
    %c0_99 = arith.constant 0 : index
    %257 = vector.load %arg8[%c0_98, %c0_99] : memref<1x128xf32, #tpu.memory_space<vmem>>, vector<1x128xf32>
    %258 = vector.broadcast %257 : vector<1x128xf32> to vector<2x128xf32>
    %259 = arith.addf %256, %258 : vector<2x128xf32>
    %c3 = arith.constant 3 : index
    %c0_100 = arith.constant 0 : index
    %c0_101 = arith.constant 0 : index
    %260 = vector.load %arg9[%c3, %c0_100, %c0_101] : memref<6x2x128xf32, #tpu.memory_space<vmem>>, vector<1x2x128xf32>
    %261 = vector.shape_cast %260 : vector<1x2x128xf32> to vector<2x128xf32>
    %262 = vector.shape_cast %259 : vector<2x128xf32> to vector<1x2x128xf32>
    tpu.vector_store %arg9[%c3, %c0_100, %c0_101], %262 {strides = array<i32>} : memref<6x2x128xf32, #tpu.memory_space<vmem>>, vector<1x2x128xf32>,
    %cst_102 = arith.constant dense<0xFF800000> : vector<2xf32>
    %263 = vector.multi_reduction <maximumf>, %259, %cst_102 [1] : vector<2x128xf32> to vector<2xf32>
    %264 = vector.shape_cast %263 : vector<2xf32> to vector<2x1xf32>
    %265 = vector.broadcast %264 : vector<2x1xf32> to vector<2x128xf32>
    %266 = arith.cmpf oeq, %259, %265 : vector<2x128xf32>
    %c128_i32_103 = arith.constant 128 : i32
    %267 = vector.broadcast %c128_i32_103 : i32 to vector<2x128xi32>
    %268 = arith.select %266, %0, %267 : vector<2x128xi1>, vector<2x128xi32>
    %cst_104 = arith.constant dense<2147483647> : vector<2xi32>
    %269 = vector.multi_reduction <minsi>, %268, %cst_104 [1] : vector<2x128xi32> to vector<2xi32>
    %270 = vector.shape_cast %269 : vector<2xi32> to vector<2x1xi32>
    %271 = vector.broadcast %270 : vector<2x1xi32> to vector<2x128xi32>
    %272 = arith.cmpi eq, %0, %271 : vector<2x128xi32>
    %273 = arith.extui %272 : vector<2x128xi1> to vector<2x128xi32>
    %274 = arith.sitofp %273 : vector<2x128xi32> to vector<2x128xf32>
    %c3_105 = arith.constant 3 : index
    %c0_106 = arith.constant 0 : index
    %c0_107 = arith.constant 0 : index
    %275 = vector.load %arg2[%c3_105, %c0_106, %c0_107] : memref<6x2x1xi32, #tpu.memory_space<vmem>>, vector<1x2x1xi32>
    %276 = vector.shape_cast %275 : vector<1x2x1xi32> to vector<2x1xi32>
    %277 = vector.broadcast %276 : vector<2x1xi32> to vector<2x128xi32>
    %278 = arith.cmpi eq, %0, %277 : vector<2x128xi32>
    %279 = arith.extui %278 : vector<2x128xi1> to vector<2x128xi32>
    %280 = arith.sitofp %279 : vector<2x128xi32> to vector<2x128xf32>
    %c6_i32_108 = arith.constant 6 : i32
    %281 = arith.muli %arg0, %c6_i32_108 : i32
    %c3_i32 = arith.constant 3 : i32
    %282 = arith.addi %281, %c3_i32 : i32
    %283 = arith.index_cast %282 : i32 to index
    %284 = memref.load %arg1[%283] : memref<6xi32, #tpu.memory_space<smem>>
    %c0_i32_109 = arith.constant 0 : i32
    %285 = arith.cmpi sgt, %284, %c0_i32_109 : i32
    %286 = arith.extui %285 : i1 to i32
    %287 = arith.sitofp %286 : i32 to f32
    %288 = vector.broadcast %287 : f32 to vector<2x128xf32>
    %289 = arith.mulf %288, %274 : vector<2x128xf32>
    %cst_110 = arith.constant 1.000000e+00 : f32
    %290 = arith.subf %cst_110, %287 : f32
    %291 = vector.broadcast %290 : f32 to vector<2x128xf32>
    %292 = arith.mulf %291, %280 : vector<2x128xf32>
    %293 = arith.addf %289, %292 : vector<2x128xf32>
    %c0_111 = arith.constant 0 : index
    %c0_112 = arith.constant 0 : index
    %294 = vector.load %arg3[%c0_111, %c0_112] : memref<128x96xf32, #tpu.memory_space<vmem>>, vector<128x96xf32>
    %cst_113 = arith.constant dense<0.000000e+00> : vector<2x96xf32>
    %295 = tpu.matmul %293, %294, %cst_113 {dimension_numbers = #tpu.dot_dimension_numbers<[1], [0], [0], [1], [0, 0, 1, 1], [], []>} : vector<2x128xf32>, vector<128x96xf32>, vector<2x96xf32> -> vector<2x96xf32>
    %c0_114 = arith.constant 0 : index
    %c0_115 = arith.constant 0 : index
    %296 = vector.load %arg5[%c0_114, %c0_115] : memref<32x96xf32, #tpu.memory_space<vmem>>, vector<32x96xf32>
    %cst_116 = arith.constant dense<0.000000e+00> : vector<2x96xf32>
    %297 = tpu.matmul %254, %296, %cst_116 {dimension_numbers = #tpu.dot_dimension_numbers<[1], [0], [0], [1], [0, 0, 1, 1], [], []>} : vector<2x32xf32>, vector<32x96xf32>, vector<2x96xf32> -> vector<2x96xf32>
    %c0_117 = arith.constant 0 : index
    %c0_118 = arith.constant 0 : index
    %298 = vector.load %arg6[%c0_117, %c0_118] : memref<1x96xf32, #tpu.memory_space<vmem>>, vector<1x96xf32>
    %299 = vector.broadcast %298 : vector<1x96xf32> to vector<2x96xf32>
    %300 = arith.addf %297, %299 : vector<2x96xf32>
    %301 = vector.extract_strided_slice %295 {offsets = [0, 0], sizes = [2, 32], strides = [1, 1]} : vector<2x96xf32> to vector<2x32xf32>
    %302 = vector.extract_strided_slice %300 {offsets = [0, 0], sizes = [2, 32], strides = [1, 1]} : vector<2x96xf32> to vector<2x32xf32>
    %303 = arith.addf %301, %302 : vector<2x32xf32>
    %304 = arith.negf %303 : vector<2x32xf32>
    %305 = math.exp %304 : vector<2x32xf32>
    %cst_119 = arith.constant 1.000000e+00 : f32
    %306 = vector.broadcast %cst_119 : f32 to vector<2x32xf32>
    %307 = arith.addf %306, %305 : vector<2x32xf32>
    %308 = arith.divf %306, %307 : vector<2x32xf32>
    %309 = vector.extract_strided_slice %295 {offsets = [0, 32], sizes = [2, 32], strides = [1, 1]} : vector<2x96xf32> to vector<2x32xf32>
    %310 = vector.extract_strided_slice %300 {offsets = [0, 32], sizes = [2, 32], strides = [1, 1]} : vector<2x96xf32> to vector<2x32xf32>
    %311 = arith.addf %309, %310 : vector<2x32xf32>
    %312 = arith.negf %311 : vector<2x32xf32>
    %313 = math.exp %312 : vector<2x32xf32>
    %cst_120 = arith.constant 1.000000e+00 : f32
    %314 = vector.broadcast %cst_120 : f32 to vector<2x32xf32>
    %315 = arith.addf %314, %313 : vector<2x32xf32>
    %316 = arith.divf %314, %315 : vector<2x32xf32>
    %317 = vector.extract_strided_slice %295 {offsets = [0, 64], sizes = [2, 32], strides = [1, 1]} : vector<2x96xf32> to vector<2x32xf32>
    %318 = vector.extract_strided_slice %300 {offsets = [0, 64], sizes = [2, 32], strides = [1, 1]} : vector<2x96xf32> to vector<2x32xf32>
    %319 = arith.mulf %308, %318 : vector<2x32xf32>
    %320 = arith.addf %317, %319 : vector<2x32xf32>
    %321 = math.tanh %320 : vector<2x32xf32>
    %cst_121 = arith.constant 1.000000e+00 : f32
    %322 = vector.broadcast %cst_121 : f32 to vector<2x32xf32>
    %323 = arith.subf %322, %316 : vector<2x32xf32>
    %324 = arith.mulf %323, %321 : vector<2x32xf32>
    %325 = arith.mulf %316, %254 : vector<2x32xf32>
    %326 = arith.addf %324, %325 : vector<2x32xf32>
    %c0_122 = arith.constant 0 : index
    %c0_123 = arith.constant 0 : index
    %327 = vector.load %arg7[%c0_122, %c0_123] : memref<32x128xf32, #tpu.memory_space<vmem>>, vector<32x128xf32>
    %cst_124 = arith.constant dense<0.000000e+00> : vector<2x128xf32>
    %328 = tpu.matmul %326, %327, %cst_124 {dimension_numbers = #tpu.dot_dimension_numbers<[1], [0], [0], [1], [0, 0, 1, 1], [], []>} : vector<2x32xf32>, vector<32x128xf32>, vector<2x128xf32> -> vector<2x128xf32>
    %c0_125 = arith.constant 0 : index
    %c0_126 = arith.constant 0 : index
    %329 = vector.load %arg8[%c0_125, %c0_126] : memref<1x128xf32, #tpu.memory_space<vmem>>, vector<1x128xf32>
    %330 = vector.broadcast %329 : vector<1x128xf32> to vector<2x128xf32>
    %331 = arith.addf %328, %330 : vector<2x128xf32>
    %c4 = arith.constant 4 : index
    %c0_127 = arith.constant 0 : index
    %c0_128 = arith.constant 0 : index
    %332 = vector.load %arg9[%c4, %c0_127, %c0_128] : memref<6x2x128xf32, #tpu.memory_space<vmem>>, vector<1x2x128xf32>
    %333 = vector.shape_cast %332 : vector<1x2x128xf32> to vector<2x128xf32>
    %334 = vector.shape_cast %331 : vector<2x128xf32> to vector<1x2x128xf32>
    tpu.vector_store %arg9[%c4, %c0_127, %c0_128], %334 {strides = array<i32>} : memref<6x2x128xf32, #tpu.memory_space<vmem>>, vector<1x2x128xf32>,
    %cst_129 = arith.constant dense<0xFF800000> : vector<2xf32>
    %335 = vector.multi_reduction <maximumf>, %331, %cst_129 [1] : vector<2x128xf32> to vector<2xf32>
    %336 = vector.shape_cast %335 : vector<2xf32> to vector<2x1xf32>
    %337 = vector.broadcast %336 : vector<2x1xf32> to vector<2x128xf32>
    %338 = arith.cmpf oeq, %331, %337 : vector<2x128xf32>
    %c128_i32_130 = arith.constant 128 : i32
    %339 = vector.broadcast %c128_i32_130 : i32 to vector<2x128xi32>
    %340 = arith.select %338, %0, %339 : vector<2x128xi1>, vector<2x128xi32>
    %cst_131 = arith.constant dense<2147483647> : vector<2xi32>
    %341 = vector.multi_reduction <minsi>, %340, %cst_131 [1] : vector<2x128xi32> to vector<2xi32>
    %342 = vector.shape_cast %341 : vector<2xi32> to vector<2x1xi32>
    %343 = vector.broadcast %342 : vector<2x1xi32> to vector<2x128xi32>
    %344 = arith.cmpi eq, %0, %343 : vector<2x128xi32>
    %345 = arith.extui %344 : vector<2x128xi1> to vector<2x128xi32>
    %346 = arith.sitofp %345 : vector<2x128xi32> to vector<2x128xf32>
    %c4_132 = arith.constant 4 : index
    %c0_133 = arith.constant 0 : index
    %c0_134 = arith.constant 0 : index
    %347 = vector.load %arg2[%c4_132, %c0_133, %c0_134] : memref<6x2x1xi32, #tpu.memory_space<vmem>>, vector<1x2x1xi32>
    %348 = vector.shape_cast %347 : vector<1x2x1xi32> to vector<2x1xi32>
    %349 = vector.broadcast %348 : vector<2x1xi32> to vector<2x128xi32>
    %350 = arith.cmpi eq, %0, %349 : vector<2x128xi32>
    %351 = arith.extui %350 : vector<2x128xi1> to vector<2x128xi32>
    %352 = arith.sitofp %351 : vector<2x128xi32> to vector<2x128xf32>
    %c6_i32_135 = arith.constant 6 : i32
    %353 = arith.muli %arg0, %c6_i32_135 : i32
    %c4_i32 = arith.constant 4 : i32
    %354 = arith.addi %353, %c4_i32 : i32
    %355 = arith.index_cast %354 : i32 to index
    %356 = memref.load %arg1[%355] : memref<6xi32, #tpu.memory_space<smem>>
    %c0_i32_136 = arith.constant 0 : i32
    %357 = arith.cmpi sgt, %356, %c0_i32_136 : i32
    %358 = arith.extui %357 : i1 to i32
    %359 = arith.sitofp %358 : i32 to f32
    %360 = vector.broadcast %359 : f32 to vector<2x128xf32>
    %361 = arith.mulf %360, %346 : vector<2x128xf32>
    %cst_137 = arith.constant 1.000000e+00 : f32
    %362 = arith.subf %cst_137, %359 : f32
    %363 = vector.broadcast %362 : f32 to vector<2x128xf32>
    %364 = arith.mulf %363, %352 : vector<2x128xf32>
    %365 = arith.addf %361, %364 : vector<2x128xf32>
    %c0_138 = arith.constant 0 : index
    %c0_139 = arith.constant 0 : index
    %366 = vector.load %arg3[%c0_138, %c0_139] : memref<128x96xf32, #tpu.memory_space<vmem>>, vector<128x96xf32>
    %cst_140 = arith.constant dense<0.000000e+00> : vector<2x96xf32>
    %367 = tpu.matmul %365, %366, %cst_140 {dimension_numbers = #tpu.dot_dimension_numbers<[1], [0], [0], [1], [0, 0, 1, 1], [], []>} : vector<2x128xf32>, vector<128x96xf32>, vector<2x96xf32> -> vector<2x96xf32>
    %c0_141 = arith.constant 0 : index
    %c0_142 = arith.constant 0 : index
    %368 = vector.load %arg5[%c0_141, %c0_142] : memref<32x96xf32, #tpu.memory_space<vmem>>, vector<32x96xf32>
    %cst_143 = arith.constant dense<0.000000e+00> : vector<2x96xf32>
    %369 = tpu.matmul %326, %368, %cst_143 {dimension_numbers = #tpu.dot_dimension_numbers<[1], [0], [0], [1], [0, 0, 1, 1], [], []>} : vector<2x32xf32>, vector<32x96xf32>, vector<2x96xf32> -> vector<2x96xf32>
    %c0_144 = arith.constant 0 : index
    %c0_145 = arith.constant 0 : index
    %370 = vector.load %arg6[%c0_144, %c0_145] : memref<1x96xf32, #tpu.memory_space<vmem>>, vector<1x96xf32>
    %371 = vector.broadcast %370 : vector<1x96xf32> to vector<2x96xf32>
    %372 = arith.addf %369, %371 : vector<2x96xf32>
    %373 = vector.extract_strided_slice %367 {offsets = [0, 0], sizes = [2, 32], strides = [1, 1]} : vector<2x96xf32> to vector<2x32xf32>
    %374 = vector.extract_strided_slice %372 {offsets = [0, 0], sizes = [2, 32], strides = [1, 1]} : vector<2x96xf32> to vector<2x32xf32>
    %375 = arith.addf %373, %374 : vector<2x32xf32>
    %376 = arith.negf %375 : vector<2x32xf32>
    %377 = math.exp %376 : vector<2x32xf32>
    %cst_146 = arith.constant 1.000000e+00 : f32
    %378 = vector.broadcast %cst_146 : f32 to vector<2x32xf32>
    %379 = arith.addf %378, %377 : vector<2x32xf32>
    %380 = arith.divf %378, %379 : vector<2x32xf32>
    %381 = vector.extract_strided_slice %367 {offsets = [0, 32], sizes = [2, 32], strides = [1, 1]} : vector<2x96xf32> to vector<2x32xf32>
    %382 = vector.extract_strided_slice %372 {offsets = [0, 32], sizes = [2, 32], strides = [1, 1]} : vector<2x96xf32> to vector<2x32xf32>
    %383 = arith.addf %381, %382 : vector<2x32xf32>
    %384 = arith.negf %383 : vector<2x32xf32>
    %385 = math.exp %384 : vector<2x32xf32>
    %cst_147 = arith.constant 1.000000e+00 : f32
    %386 = vector.broadcast %cst_147 : f32 to vector<2x32xf32>
    %387 = arith.addf %386, %385 : vector<2x32xf32>
    %388 = arith.divf %386, %387 : vector<2x32xf32>
    %389 = vector.extract_strided_slice %367 {offsets = [0, 64], sizes = [2, 32], strides = [1, 1]} : vector<2x96xf32> to vector<2x32xf32>
    %390 = vector.extract_strided_slice %372 {offsets = [0, 64], sizes = [2, 32], strides = [1, 1]} : vector<2x96xf32> to vector<2x32xf32>
    %391 = arith.mulf %380, %390 : vector<2x32xf32>
    %392 = arith.addf %389, %391 : vector<2x32xf32>
    %393 = math.tanh %392 : vector<2x32xf32>
    %cst_148 = arith.constant 1.000000e+00 : f32
    %394 = vector.broadcast %cst_148 : f32 to vector<2x32xf32>
    %395 = arith.subf %394, %388 : vector<2x32xf32>
    %396 = arith.mulf %395, %393 : vector<2x32xf32>
    %397 = arith.mulf %388, %326 : vector<2x32xf32>
    %398 = arith.addf %396, %397 : vector<2x32xf32>
    %c0_149 = arith.constant 0 : index
    %c0_150 = arith.constant 0 : index
    %399 = vector.load %arg7[%c0_149, %c0_150] : memref<32x128xf32, #tpu.memory_space<vmem>>, vector<32x128xf32>
    %cst_151 = arith.constant dense<0.000000e+00> : vector<2x128xf32>
    %400 = tpu.matmul %398, %399, %cst_151 {dimension_numbers = #tpu.dot_dimension_numbers<[1], [0], [0], [1], [0, 0, 1, 1], [], []>} : vector<2x32xf32>, vector<32x128xf32>, vector<2x128xf32> -> vector<2x128xf32>
    %c0_152 = arith.constant 0 : index
    %c0_153 = arith.constant 0 : index
    %401 = vector.load %arg8[%c0_152, %c0_153] : memref<1x128xf32, #tpu.memory_space<vmem>>, vector<1x128xf32>
    %402 = vector.broadcast %401 : vector<1x128xf32> to vector<2x128xf32>
    %403 = arith.addf %400, %402 : vector<2x128xf32>
    %c5 = arith.constant 5 : index
    %c0_154 = arith.constant 0 : index
    %c0_155 = arith.constant 0 : index
    %404 = vector.load %arg9[%c5, %c0_154, %c0_155] : memref<6x2x128xf32, #tpu.memory_space<vmem>>, vector<1x2x128xf32>
    %405 = vector.shape_cast %404 : vector<1x2x128xf32> to vector<2x128xf32>
    %406 = vector.shape_cast %403 : vector<2x128xf32> to vector<1x2x128xf32>
    tpu.vector_store %arg9[%c5, %c0_154, %c0_155], %406 {strides = array<i32>} : memref<6x2x128xf32, #tpu.memory_space<vmem>>, vector<1x2x128xf32>,
    %cst_156 = arith.constant dense<0xFF800000> : vector<2xf32>
    %407 = vector.multi_reduction <maximumf>, %403, %cst_156 [1] : vector<2x128xf32> to vector<2xf32>
    %408 = vector.shape_cast %407 : vector<2xf32> to vector<2x1xf32>
    %409 = vector.broadcast %408 : vector<2x1xf32> to vector<2x128xf32>
    %410 = arith.cmpf oeq, %403, %409 : vector<2x128xf32>
    %c128_i32_157 = arith.constant 128 : i32
    %411 = vector.broadcast %c128_i32_157 : i32 to vector<2x128xi32>
    %412 = arith.select %410, %0, %411 : vector<2x128xi1>, vector<2x128xi32>
    %cst_158 = arith.constant dense<2147483647> : vector<2xi32>
    %413 = vector.multi_reduction <minsi>, %412, %cst_158 [1] : vector<2x128xi32> to vector<2xi32>
    %414 = vector.shape_cast %413 : vector<2xi32> to vector<2x1xi32>
    %415 = vector.broadcast %414 : vector<2x1xi32> to vector<2x128xi32>
    %416 = arith.cmpi eq, %0, %415 : vector<2x128xi32>
    %417 = arith.extui %416 : vector<2x128xi1> to vector<2x128xi32>
    %418 = arith.sitofp %417 : vector<2x128xi32> to vector<2x128xf32>
    %c5_159 = arith.constant 5 : index
    %c0_160 = arith.constant 0 : index
    %c0_161 = arith.constant 0 : index
    %419 = vector.load %arg2[%c5_159, %c0_160, %c0_161] : memref<6x2x1xi32, #tpu.memory_space<vmem>>, vector<1x2x1xi32>
    %420 = vector.shape_cast %419 : vector<1x2x1xi32> to vector<2x1xi32>
    %421 = vector.broadcast %420 : vector<2x1xi32> to vector<2x128xi32>
    %422 = arith.cmpi eq, %0, %421 : vector<2x128xi32>
    %423 = arith.extui %422 : vector<2x128xi1> to vector<2x128xi32>
    %424 = arith.sitofp %423 : vector<2x128xi32> to vector<2x128xf32>
    %c6_i32_162 = arith.constant 6 : i32
    %425 = arith.muli %arg0, %c6_i32_162 : i32
    %c5_i32 = arith.constant 5 : i32
    %426 = arith.addi %425, %c5_i32 : i32
    %427 = arith.index_cast %426 : i32 to index
    %428 = memref.load %arg1[%427] : memref<6xi32, #tpu.memory_space<smem>>
    %c0_i32_163 = arith.constant 0 : i32
    %429 = arith.cmpi sgt, %428, %c0_i32_163 : i32
    %430 = arith.extui %429 : i1 to i32
    %431 = arith.sitofp %430 : i32 to f32
    %432 = vector.broadcast %431 : f32 to vector<2x128xf32>
    %433 = arith.mulf %432, %418 : vector<2x128xf32>
    %cst_164 = arith.constant 1.000000e+00 : f32
    %434 = arith.subf %cst_164, %431 : f32
    %435 = vector.broadcast %434 : f32 to vector<2x128xf32>
    %436 = arith.mulf %435, %424 : vector<2x128xf32>
    %437 = arith.addf %433, %436 : vector<2x128xf32>
    %c0_165 = arith.constant 0 : index
    %c0_166 = arith.constant 0 : index
    %438 = vector.load %arg10[%c0_165, %c0_166] : memref<2x32xf32, #tpu.memory_space<vmem>>, vector<2x32xf32>
    tpu.vector_store %arg10[%c0_165, %c0_166], %398 {strides = array<i32>} : memref<2x32xf32, #tpu.memory_space<vmem>>, vector<2x32xf32>,
    %c0_167 = arith.constant 0 : index
    %c0_168 = arith.constant 0 : index
    %439 = vector.load %arg11[%c0_167, %c0_168] : memref<2x128xf32, #tpu.memory_space<vmem>>, vector<2x128xf32>
    tpu.vector_store %arg11[%c0_167, %c0_168], %437 {strides = array<i32>} : memref<2x128xf32, #tpu.memory_space<vmem>>, vector<2x128xf32>,
    return
  }
  func.func @transform_0(%arg0: i32, %arg1: memref<6xi32, #tpu.memory_space<smem>>) -> (i32, i32, i32) {
    %c0_i32 = arith.constant 0 : i32
    %c0_i32_0 = arith.constant 0 : i32
    %c0_i32_1 = arith.constant 0 : i32
    return %arg0, %c0_i32, %c0_i32_0 : i32, i32, i32
  }
  func.func @transform_1(%arg0: i32, %arg1: memref<6xi32, #tpu.memory_space<smem>>) -> (i32, i32) {
    %c0_i32 = arith.constant 0 : i32
    %c0_i32_0 = arith.constant 0 : i32
    %c0_i32_1 = arith.constant 0 : i32
    return %c0_i32, %c0_i32_0 : i32, i32
  }
  func.func @transform_2(%arg0: i32, %arg1: memref<6xi32, #tpu.memory_space<smem>>) -> (i32, i32) {
    %c0_i32 = arith.constant 0 : i32
    %c0_i32_0 = arith.constant 0 : i32
    %c0_i32_1 = arith.constant 0 : i32
    return %c0_i32, %c0_i32_0 : i32, i32
  }
  func.func @transform_3(%arg0: i32, %arg1: memref<6xi32, #tpu.memory_space<smem>>) -> (i32, i32) {
    %c0_i32 = arith.constant 0 : i32
    %c0_i32_0 = arith.constant 0 : i32
    %c0_i32_1 = arith.constant 0 : i32
    return %c0_i32, %c0_i32_0 : i32, i32
  }
  func.func @transform_4(%arg0: i32, %arg1: memref<6xi32, #tpu.memory_space<smem>>) -> (i32, i32) {
    %c0_i32 = arith.constant 0 : i32
    %c0_i32_0 = arith.constant 0 : i32
    %c0_i32_1 = arith.constant 0 : i32
    return %c0_i32, %c0_i32_0 : i32, i32
  }
  func.func @transform_5(%arg0: i32, %arg1: memref<6xi32, #tpu.memory_space<smem>>) -> (i32, i32) {
    %c0_i32 = arith.constant 0 : i32
    %c0_i32_0 = arith.constant 0 : i32
    %c0_i32_1 = arith.constant 0 : i32
    return %c0_i32, %c0_i32_0 : i32, i32
  }
  func.func @transform_6(%arg0: i32, %arg1: memref<6xi32, #tpu.memory_space<smem>>) -> (i32, i32) {
    %c0_i32 = arith.constant 0 : i32
    %c0_i32_0 = arith.constant 0 : i32
    %c0_i32_1 = arith.constant 0 : i32
    return %c0_i32, %c0_i32_0 : i32, i32
  }
  func.func @transform_7(%arg0: i32, %arg1: memref<6xi32, #tpu.memory_space<smem>>) -> (i32, i32, i32) {
    %c0_i32 = arith.constant 0 : i32
    %c0_i32_0 = arith.constant 0 : i32
    %c0_i32_1 = arith.constant 0 : i32
    return %arg0, %c0_i32, %c0_i32_0 : i32, i32, i32
  }
}

</mosaic_0001>

<llo_original>
// kernel: seq2seq_forward.5
$region0: #{seq2seq_forward.5}
  #allocation0 [shape = 'u32[]', space=smem, size = 0x4, offset = 0x4, fixed_abs, tag = 'smem constant byte address 0x4 - core index']
  #allocation1 [shape = 'u32[144,128]{1,0:T(1,128)}', space=vmem, size = 0x12000, scoped, tag = 'internal scratch']
  #allocation2 [shape = 'f32[2,32]{1,0:T(2,128)}', space=vmem, size = 0x400, scoped, tag = 'scratch operand']
  %s0 = inlined_call_operand.hbm [shape: f32[8,2,96], index: 0, kind: input, shape index: {}]
  %s1 = inlined_call_operand.hbm [shape: f32[32,96], index: 1, kind: input, shape index: {}]
  %s2 = inlined_call_operand.hbm [shape: f32[1,96], index: 2, kind: input, shape index: {}]
  %s3 = inlined_call_operand.hbm [shape: f32[8,2,32], index: 3, kind: output, shape index: {}]
  %s4 = sld [smem:[#allocation0]]
  $region38: #{seq2seq_forward.5} parent=0
    _
  %s6 = ssub.s32 1, %s4
  %s7 = scalar_select 0, %s6, %s4
  $region1: #{seq2seq_forward.5} parent=0
    #allocation3 [shape = 'u8[8192]{0}', space=vmem, size = 0x2000, scoped, tag = 'input window, operand 0, single buffered']
    #allocation4 [shape = 's32[1]{0}', space=sflag, size = 0x4, scoped, tag = 'scoped memory for seq2seq_forward.5']
    #allocation5 [shape = 's32[1]{0}', space=sflag, size = 0x4, scoped, tag = 'scoped memory for seq2seq_forward.5']
    #allocation6 [shape = 'u8[16384]{0}', space=vmem, size = 0x4000, scoped, tag = 'input window, operand 1, single buffered']
    #allocation7 [shape = 's32[1]{0}', space=sflag, size = 0x4, scoped, tag = 'scoped memory for seq2seq_forward.5']
    #allocation8 [shape = 'u8[512]{0}', space=vmem, size = 0x400, scoped, tag = 'input window, operand 2, single buffered']
    #allocation9 [shape = 'u8[8192]{0}', space=vmem, size = 0x2000, scoped, tag = 'output window, operand 0, single buffered']
    %8 = vsyncpa [#allocation4], 0
    %9 = vsyncpa [#allocation7], 0
    %10 = vsyncpa [#allocation5], 0
    // Predicated region
    $region2: #{seq2seq_forward.5} parent=1 // pred_check
      _
    $region3: #{seq2seq_forward.5} parent=1 // pred_check_branch
      %12 = sbr.rel (0) target = $region5
    $region4: #{seq2seq_forward.5} parent=1 // pred_region
      %s14 = ssub.s32 256, 256
      %15 = vsyncadd [#allocation4], %s14
      %s16 = sshll.u32 [#allocation3], 4
      %s17 = int_to_ptr.vmem [resolvable:$true] %s16
      %22 = dma.hbm_to_vmem [thread:$0]  %s0, 256, %s17, [#allocation4], 32, 32, 2
    $region5: #{seq2seq_forward.5} parent=1 // pred_fallthru
      _
    // Predicated region
    $region6: #{seq2seq_forward.5} parent=1 // pred_check
      _
    $region7: #{seq2seq_forward.5} parent=1 // pred_check_branch
      %24 = sbr.rel (0) target = $region9
    $region8: #{seq2seq_forward.5} parent=1 // pred_region
      %s26 = ssub.s32 512, 512
      %27 = vsyncadd [#allocation7], %s26
      %s28 = sshll.u32 [#allocation6], 4
      %s29 = int_to_ptr.vmem [resolvable:$true] %s28
      %34 = dma.hbm_to_vmem [thread:$0]  %s1, 512, %s29, [#allocation7], 128, 128, 8
    $region9: #{seq2seq_forward.5} parent=1 // pred_fallthru
      _
    // Predicated region
    $region10: #{seq2seq_forward.5} parent=1 // pred_check
      _
    $region11: #{seq2seq_forward.5} parent=1 // pred_check_branch
      %36 = sbr.rel (0) target = $region13
    $region12: #{seq2seq_forward.5} parent=1 // pred_region
      %s38 = ssub.s32 16, 16
      %39 = vsyncadd [#allocation7], %s38
      %s41 = sshll.u32 [#allocation8], 4
      %s42 = int_to_ptr.vmem [resolvable:$true] %s41
      %44 = dma.hbm_to_vmem [thread:$0]  %s2, 16, %s42, [#allocation7]
    $region13: #{seq2seq_forward.5} parent=1 // pred_fallthru
      _
    // Predicated region
    $region14: #{seq2seq_forward.5} parent=1 // pred_check
      _
    $region15: #{seq2seq_forward.5} parent=1 // pred_check_branch
      %46 = sbr.rel (0) target = $region17
    $region16: #{seq2seq_forward.5} parent=1 // pred_region
      %47 = dma.done [#allocation4], 256
    $region17: #{seq2seq_forward.5} parent=1 // pred_fallthru
      _
    // Predicated region
    $region18: #{seq2seq_forward.5} parent=1 // pred_check
      _
    $region19: #{seq2seq_forward.5} parent=1 // pred_check_branch
      %49 = sbr.rel (0) target = $region21
    $region20: #{seq2seq_forward.5} parent=1 // pred_region
      %50 = dma.done [#allocation7], 512
    $region21: #{seq2seq_forward.5} parent=1 // pred_fallthru
      _
    // Predicated region
    $region22: #{seq2seq_forward.5} parent=1 // pred_check
      _
    $region23: #{seq2seq_forward.5} parent=1 // pred_check_branch
      %52 = sbr.rel (0) target = $region25
    $region24: #{seq2seq_forward.5} parent=1 // pred_region
      %53 = dma.done [#allocation7], 16
    $region25: #{seq2seq_forward.5} parent=1 // pred_fallthru
      _
    %p54 = scmp.eq.s32.totalorder 0, 0
    // Predicated region
    $region26: #{seq2seq_forward.5} parent=1 // pred_check
      %p55 = pneg %p54
    $region27: #{seq2seq_forward.5} parent=1 // pred_check_branch
      %57 = sbr.rel (%p55) target = $region29
    $region28: #{seq2seq_forward.5} parent=1 // pred_region
      %vm58 = vcmask 254976
      %59 = vst.msk [vmem:[#allocation2] sm:$0x3] %vm58, 0.0
    $region29: #{seq2seq_forward.5} parent=1 // pred_fallthru
      _
    %v60 = vld [vmem:[#allocation2] sm:$0x3]
    %v61 = vld [vmem:[#allocation3] sm:$0x3]
    %v62 = vld [vmem:[#allocation6] sm:$0xff]
    %v63 = vld [vmem:[#allocation6 + $0x8] sm:$0xff]
    %v64 = vld [vmem:[#allocation6 + $0x10] sm:$0xff]
    %v65 = vld [vmem:[#allocation6 + $0x18] sm:$0xff]
    %v66 = vld [vmem:[#allocation8] sm:$0x1]
    %v68 = vlaneseq
    %v69 = vshrl.u32 %v68, 7
    %v70 = vsub.s32 0, %v69
    %v71 = vrot.slane %v66, %v70
    %vm73 = vcmask 261120
    %v75 = vsel %vm73, %v60, 0
    %77 = vmatprep.subr.mxu0 0.0
    %78 = vmatpush1.msra.mxu0 %v62
    %79 = vmatprep.subr.mxu0 0.0
    %80 = vmatpush1.msra.mxu0 %v63
    %81 = vmatprep.subr.mxu0 0.0
    %82 = vmatpush1.msra.mxu0 %v64
    %83 = vmatprep.subr.mxu0 0.0
    %84 = vmatpush1.msra.mxu0 %v65
    %85 = vmatprep.subr.mxu0 0.0
    %86 = vmatpush1.msra.mxu0 0.0
    %87 = vmatprep.subr.mxu0 0.0
    %88 = vmatpush1.msra.mxu0 0.0
    %89 = vmatprep.subr.mxu0 0.0
    %90 = vmatpush1.msra.mxu0 0.0
    %91 = vmatprep.subr.mxu0 0.0
    %92 = vmatpush1.msra.mxu0 0.0
    %93 = vmatprep.subr.mxu0 0.0
    %94 = vmatpush1.msra.mxu0 0.0
    %95 = vmatprep.subr.mxu0 0.0
    %96 = vmatpush1.msra.mxu0 0.0
    %97 = vmatprep.subr.mxu0 0.0
    %98 = vmatpush1.msra.mxu0 0.0
    %99 = vmatprep.subr.mxu0 0.0
    %100 = vmatpush1.msra.mxu0 0.0
    %101 = vmatprep.subr.mxu0 0.0
    %102 = vmatpush1.msra.mxu0 0.0
    %103 = vmatprep.subr.mxu0 0.0
    %104 = vmatpush1.msra.mxu0 0.0
    %105 = vmatprep.subr.mxu0 0.0
    %106 = vmatpush1.msra.mxu0 0.0
    %107 = vmatprep.subr.mxu0 0.0
    %108 = vmatpush1.msra.mxu0 0.0
    %109 = vmatprep.subr.mxu0 0.0
    %110 = vmatpush1.msra.mxu0 0.0
    %111 = vmatprep.subr.mxu0 0.0
    %112 = vmatpush1.msra.mxu0 0.0
    %113 = vmatprep.subr.mxu0 0.0
    %114 = vmatpush1.msra.mxu0 0.0
    %115 = vmatprep.subr.mxu0 0.0
    %116 = vmatpush1.msra.mxu0 0.0
    %117 = vmatprep.subr.mxu0 0.0
    %118 = vmatpush1.msra.mxu0 0.0
    %119 = vmatprep.subr.mxu0 0.0
    %120 = vmatpush1.msra.mxu0 0.0
    %121 = vmatprep.subr.mxu0 0.0
    %122 = vmatpush1.msra.mxu0 0.0
    %123 = vmatprep.subr.mxu0 0.0
    %124 = vmatpush1.msra.mxu0 0.0
    %125 = vmatprep.subr.mxu0 0.0
    %126 = vmatpush1.msra.mxu0 0.0
    %127 = vmatprep.subr.mxu0 0.0
    %128 = vmatpush1.msra.mxu0 0.0
    %129 = vmatprep.subr.mxu0 0.0
    %130 = vmatpush1.msra.mxu0 0.0
    %131 = vmatprep.subr.mxu0 0.0
    %132 = vmatpush1.msra.mxu0 0.0
    %133 = vmatprep.subr.mxu0 0.0
    %134 = vmatpush1.msra.mxu0 0.0
    %135 = vmatprep.subr.mxu0 0.0
    %136 = vmatpush1.msra.mxu0 0.0
    %137 = vmatprep.subr.mxu0 0.0
    %138 = vmatpush1.msra.mxu0 0.0
    %139 = vmatprep.subr.mxu0 0.0
    %140 = vmatpush1.msra.mxu0 0.0
    %141 = vmatprep.mubr.f32.mxu0 0.0
    %142 = vmatmul.mubr.f32.gmra.mrb[0].mxu0 %v75
    %v143 = vpop.f32.mrb[0].mxu0
    %v144 = vadd.f32 %v71, %v143
    %v145 = vpop.f32.mrb[0].mxu0
    %146 = vdwg.mxu0
    %v147 = vadd.f32 %v61, %v144
    %v148 = vxor.u32 %v147, 2147483648
    %v149 = vmul.f32 %v148, 1.442695
    %v150 = vpow.pop %v149
    %v151 = vadd.f32 %v150, 1.0
    %v152 = vrcp.pop %v151
    %v153 = vmul.f32 1.0, %v152
    %155 = vrot.lane.b32.xlu0 %v144, 64
    %v156 = vpop.permute.xlu0 %155
    %v158 = vmul.f32 %v153, %v156
    %160 = vrot.lane.b32.xlu0 %v158, 64
    %v161 = vpop.permute.xlu0 %160
    %v163 = vadd.f32 %v61, %v161
    %v164 = vtanh.pop %v163
    %v165 = vsub.f32 1.0, %v153
    %167 = vrot.lane.b32.xlu0 %v164, 96
    %v168 = vpop.permute.xlu0 %167
    %v170 = vmul.f32 %v165, %v168
    %171 = vrot.lane.b32.xlu0 %v60, 32
    %v172 = vpop.permute.xlu0 %171
    %v174 = vmul.f32 %v153, %v172
    %v175 = vadd.f32 %v170, %v174
    %177 = vrot.lane.b32.xlu0 %v175, 96
    %v178 = vpop.permute.xlu0 %177
    %vm180 = vcmask 254976
    %181 = vst.msk [vmem:[#allocation9] sm:$0x3] %vm180, %v178
    %s182 = scalar_lea.vmem [#allocation3], 2
    %v183 = vld [vmem:[%s182] sm:$0x3]
    %v184 = vld [vmem:[#allocation6] sm:$0xff]
    %v185 = vld [vmem:[#allocation6 + $0x8] sm:$0xff]
    %v186 = vld [vmem:[#allocation6 + $0x10] sm:$0xff]
    %v187 = vld [vmem:[#allocation6 + $0x18] sm:$0xff]
    %v188 = vld [vmem:[#allocation8] sm:$0x1]
    %v190 = vlaneseq
    %v191 = vshrl.u32 %v190, 7
    %v192 = vsub.s32 0, %v191
    %v193 = vrot.slane %v188, %v192
    %v195 = vsel %vm73, %v178, 0
    %197 = vmatprep.subr.mxu0 0.0
    %198 = vmatpush1.msra.mxu0 %v184
    %199 = vmatprep.subr.mxu0 0.0
    %200 = vmatpush1.msra.mxu0 %v185
    %201 = vmatprep.subr.mxu0 0.0
    %202 = vmatpush1.msra.mxu0 %v186
    %203 = vmatprep.subr.mxu0 0.0
    %204 = vmatpush1.msra.mxu0 %v187
    %205 = vmatprep.subr.mxu0 0.0
    %206 = vmatpush1.msra.mxu0 0.0
    %207 = vmatprep.subr.mxu0 0.0
    %208 = vmatpush1.msra.mxu0 0.0
    %209 = vmatprep.subr.mxu0 0.0
    %210 = vmatpush1.msra.mxu0 0.0
    %211 = vmatprep.subr.mxu0 0.0
    %212 = vmatpush1.msra.mxu0 0.0
    %213 = vmatprep.subr.mxu0 0.0
    %214 = vmatpush1.msra.mxu0 0.0
    %215 = vmatprep.subr.mxu0 0.0
    %216 = vmatpush1.msra.mxu0 0.0
    %217 = vmatprep.subr.mxu0 0.0
    %218 = vmatpush1.msra.mxu0 0.0
    %219 = vmatprep.subr.mxu0 0.0
    %220 = vmatpush1.msra.mxu0 0.0
    %221 = vmatprep.subr.mxu0 0.0
    %222 = vmatpush1.msra.mxu0 0.0
    %223 = vmatprep.subr.mxu0 0.0
    %224 = vmatpush1.msra.mxu0 0.0
    %225 = vmatprep.subr.mxu0 0.0
    %226 = vmatpush1.msra.mxu0 0.0
    %227 = vmatprep.subr.mxu0 0.0
    %228 = vmatpush1.msra.mxu0 0.0
    %229 = vmatprep.subr.mxu0 0.0
    %230 = vmatpush1.msra.mxu0 0.0
    %231 = vmatprep.subr.mxu0 0.0
    %232 = vmatpush1.msra.mxu0 0.0
    %233 = vmatprep.subr.mxu0 0.0
    %234 = vmatpush1.msra.mxu0 0.0
    %235 = vmatprep.subr.mxu0 0.0
    %236 = vmatpush1.msra.mxu0 0.0
    %237 = vmatprep.subr.mxu0 0.0
    %238 = vmatpush1.msra.mxu0 0.0
    %239 = vmatprep.subr.mxu0 0.0
    %240 = vmatpush1.msra.mxu0 0.0
    %241 = vmatprep.subr.mxu0 0.0
    %242 = vmatpush1.msra.mxu0 0.0
    %243 = vmatprep.subr.mxu0 0.0
    %244 = vmatpush1.msra.mxu0 0.0
    %245 = vmatprep.subr.mxu0 0.0
    %246 = vmatpush1.msra.mxu0 0.0
    %247 = vmatprep.subr.mxu0 0.0
    %248 = vmatpush1.msra.mxu0 0.0
    %249 = vmatprep.subr.mxu0 0.0
    %250 = vmatpush1.msra.mxu0 0.0
    %251 = vmatprep.subr.mxu0 0.0
    %252 = vmatpush1.msra.mxu0 0.0
    %253 = vmatprep.subr.mxu0 0.0
    %254 = vmatpush1.msra.mxu0 0.0
    %255 = vmatprep.subr.mxu0 0.0
    %256 = vmatpush1.msra.mxu0 0.0
    %257 = vmatprep.subr.mxu0 0.0
    %258 = vmatpush1.msra.mxu0 0.0
    %259 = vmatprep.subr.mxu0 0.0
    %260 = vmatpush1.msra.mxu0 0.0
    %261 = vmatprep.mubr.f32.mxu0 0.0
    %262 = vmatmul.mubr.f32.gmra.mrb[0].mxu0 %v195
    %v263 = vpop.f32.mrb[0].mxu0
    %v264 = vadd.f32 %v193, %v263
    %v265 = vpop.f32.mrb[0].mxu0
    %266 = vdwg.mxu0
    %v267 = vadd.f32 %v183, %v264
    %v268 = vxor.u32 %v267, 2147483648
    %v269 = vmul.f32 %v268, 1.442695
    %v270 = vpow.pop %v269
    %v271 = vadd.f32 %v270, 1.0
    %v272 = vrcp.pop %v271
    %v273 = vmul.f32 1.0, %v272
    %275 = vrot.lane.b32.xlu0 %v264, 64
    %v276 = vpop.permute.xlu0 %275
    %v278 = vmul.f32 %v273, %v276
    %280 = vrot.lane.b32.xlu0 %v278, 64
    %v281 = vpop.permute.xlu0 %280
    %v283 = vadd.f32 %v183, %v281
    %v284 = vtanh.pop %v283
    %v285 = vsub.f32 1.0, %v273
    %287 = vrot.lane.b32.xlu0 %v284, 96
    %v288 = vpop.permute.xlu0 %287
    %v290 = vmul.f32 %v285, %v288
    %v291 = vmul.f32 %v273, %v175
    %v292 = vadd.f32 %v290, %v291
    %294 = vrot.lane.b32.xlu0 %v292, 96
    %v295 = vpop.permute.xlu0 %294
    %s297 = scalar_lea.vmem [#allocation9], 2
    %298 = vst.msk [vmem:[%s297] sm:$0x3] %vm180, %v295
    %s299 = scalar_lea.vmem [#allocation3], 4
    %v300 = vld [vmem:[%s299] sm:$0x3]
    %v301 = vld [vmem:[#allocation6] sm:$0xff]
    %v302 = vld [vmem:[#allocation6 + $0x8] sm:$0xff]
    %v303 = vld [vmem:[#allocation6 + $0x10] sm:$0xff]
    %v304 = vld [vmem:[#allocation6 + $0x18] sm:$0xff]
    %v305 = vld [vmem:[#allocation8] sm:$0x1]
    %v307 = vlaneseq
    %v308 = vshrl.u32 %v307, 7
    %v309 = vsub.s32 0, %v308
    %v310 = vrot.slane %v305, %v309
    %v312 = vsel %vm73, %v295, 0
    %314 = vmatprep.subr.mxu0 0.0
    %315 = vmatpush1.msra.mxu0 %v301
    %316 = vmatprep.subr.mxu0 0.0
    %317 = vmatpush1.msra.mxu0 %v302
    %318 = vmatprep.subr.mxu0 0.0
    %319 = vmatpush1.msra.mxu0 %v303
    %320 = vmatprep.subr.mxu0 0.0
    %321 = vmatpush1.msra.mxu0 %v304
    %322 = vmatprep.subr.mxu0 0.0
    %323 = vmatpush1.msra.mxu0 0.0
    %324 = vmatprep.subr.mxu0 0.0
    %325 = vmatpush1.msra.mxu0 0.0
    %326 = vmatprep.subr.mxu0 0.0
    %327 = vmatpush1.msra.mxu0 0.0
    %328 = vmatprep.subr.mxu0 0.0
    %329 = vmatpush1.msra.mxu0 0.0
    %330 = vmatprep.subr.mxu0 0.0
    %331 = vmatpush1.msra.mxu0 0.0
    %332 = vmatprep.subr.mxu0 0.0
    %333 = vmatpush1.msra.mxu0 0.0
    %334 = vmatprep.subr.mxu0 0.0
    %335 = vmatpush1.msra.mxu0 0.0
    %336 = vmatprep.subr.mxu0 0.0
    %337 = vmatpush1.msra.mxu0 0.0
    %338 = vmatprep.subr.mxu0 0.0
    %339 = vmatpush1.msra.mxu0 0.0
    %340 = vmatprep.subr.mxu0 0.0
    %341 = vmatpush1.msra.mxu0 0.0
    %342 = vmatprep.subr.mxu0 0.0
    %343 = vmatpush1.msra.mxu0 0.0
    %344 = vmatprep.subr.mxu0 0.0
    %345 = vmatpush1.msra.mxu0 0.0
    %346 = vmatprep.subr.mxu0 0.0
    %347 = vmatpush1.msra.mxu0 0.0
    %348 = vmatprep.subr.mxu0 0.0
    %349 = vmatpush1.msra.mxu0 0.0
    %350 = vmatprep.subr.mxu0 0.0
    %351 = vmatpush1.msra.mxu0 0.0
    %352 = vmatprep.subr.mxu0 0.0
    %353 = vmatpush1.msra.mxu0 0.0
    %354 = vmatprep.subr.mxu0 0.0
    %355 = vmatpush1.msra.mxu0 0.0
    %356 = vmatprep.subr.mxu0 0.0
    %357 = vmatpush1.msra.mxu0 0.0
    %358 = vmatprep.subr.mxu0 0.0
    %359 = vmatpush1.msra.mxu0 0.0
    %360 = vmatprep.subr.mxu0 0.0
    %361 = vmatpush1.msra.mxu0 0.0
    %362 = vmatprep.subr.mxu0 0.0
    %363 = vmatpush1.msra.mxu0 0.0
    %364 = vmatprep.subr.mxu0 0.0
    %365 = vmatpush1.msra.mxu0 0.0
    %366 = vmatprep.subr.mxu0 0.0
    %367 = vmatpush1.msra.mxu0 0.0
    %368 = vmatprep.subr.mxu0 0.0
    %369 = vmatpush1.msra.mxu0 0.0
    %370 = vmatprep.subr.mxu0 0.0
    %371 = vmatpush1.msra.mxu0 0.0
    %372 = vmatprep.subr.mxu0 0.0
    %373 = vmatpush1.msra.mxu0 0.0
    %374 = vmatprep.subr.mxu0 0.0
    %375 = vmatpush1.msra.mxu0 0.0
    %376 = vmatprep.subr.mxu0 0.0
    %377 = vmatpush1.msra.mxu0 0.0
    %378 = vmatprep.mubr.f32.mxu0 0.0
    %379 = vmatmul.mubr.f32.gmra.mrb[0].mxu0 %v312
    %v380 = vpop.f32.mrb[0].mxu0
    %v381 = vadd.f32 %v310, %v380
    %v382 = vpop.f32.mrb[0].mxu0
    %383 = vdwg.mxu0
    %v384 = vadd.f32 %v300, %v381
    %v385 = vxor.u32 %v384, 2147483648
    %v386 = vmul.f32 %v385, 1.442695
    %v387 = vpow.pop %v386
    %v388 = vadd.f32 %v387, 1.0
    %v389 = vrcp.pop %v388
    %v390 = vmul.f32 1.0, %v389
    %392 = vrot.lane.b32.xlu0 %v381, 64
    %v393 = vpop.permute.xlu0 %392
    %v395 = vmul.f32 %v390, %v393
    %397 = vrot.lane.b32.xlu0 %v395, 64
    %v398 = vpop.permute.xlu0 %397
    %v400 = vadd.f32 %v300, %v398
    %v401 = vtanh.pop %v400
    %v402 = vsub.f32 1.0, %v390
    %404 = vrot.lane.b32.xlu0 %v401, 96
    %v405 = vpop.permute.xlu0 %404
    %v407 = vmul.f32 %v402, %v405
    %v408 = vmul.f32 %v390, %v292
    %v409 = vadd.f32 %v407, %v408
    %411 = vrot.lane.b32.xlu0 %v409, 96
    %v412 = vpop.permute.xlu0 %411
    %s414 = scalar_lea.vmem [#allocation9], 4
    %415 = vst.msk [vmem:[%s414] sm:$0x3] %vm180, %v412
    %s416 = scalar_lea.vmem [#allocation3], 6
    %v417 = vld [vmem:[%s416] sm:$0x3]
    %v418 = vld [vmem:[#allocation6] sm:$0xff]
    %v419 = vld [vmem:[#allocation6 + $0x8] sm:$0xff]
    %v420 = vld [vmem:[#allocation6 + $0x10] sm:$0xff]
    %v421 = vld [vmem:[#allocation6 + $0x18] sm:$0xff]
    %v422 = vld [vmem:[#allocation8] sm:$0x1]
    %v424 = vlaneseq
    %v425 = vshrl.u32 %v424, 7
    %v426 = vsub.s32 0, %v425
    %v427 = vrot.slane %v422, %v426
    %v429 = vsel %vm73, %v412, 0
    %431 = vmatprep.subr.mxu0 0.0
    %432 = vmatpush1.msra.mxu0 %v418
    %433 = vmatprep.subr.mxu0 0.0
    %434 = vmatpush1.msra.mxu0 %v419
    %435 = vmatprep.subr.mxu0 0.0
    %436 = vmatpush1.msra.mxu0 %v420
    %437 = vmatprep.subr.mxu0 0.0
    %438 = vmatpush1.msra.mxu0 %v421
    %439 = vmatprep.subr.mxu0 0.0
    %440 = vmatpush1.msra.mxu0 0.0
    %441 = vmatprep.subr.mxu0 0.0
    %442 = vmatpush1.msra.mxu0 0.0
    %443 = vmatprep.subr.mxu0 0.0
    %444 = vmatpush1.msra.mxu0 0.0
    %445 = vmatprep.subr.mxu0 0.0
    %446 = vmatpush1.msra.mxu0 0.0
    %447 = vmatprep.subr.mxu0 0.0
    %448 = vmatpush1.msra.mxu0 0.0
    %449 = vmatprep.subr.mxu0 0.0
    %450 = vmatpush1.msra.mxu0 0.0
    %451 = vmatprep.subr.mxu0 0.0
    %452 = vmatpush1.msra.mxu0 0.0
    %453 = vmatprep.subr.mxu0 0.0
    %454 = vmatpush1.msra.mxu0 0.0
    %455 = vmatprep.subr.mxu0 0.0
    %456 = vmatpush1.msra.mxu0 0.0
    %457 = vmatprep.subr.mxu0 0.0
    %458 = vmatpush1.msra.mxu0 0.0
    %459 = vmatprep.subr.mxu0 0.0
    %460 = vmatpush1.msra.mxu0 0.0
    %461 = vmatprep.subr.mxu0 0.0
    %462 = vmatpush1.msra.mxu0 0.0
    %463 = vmatprep.subr.mxu0 0.0
    %464 = vmatpush1.msra.mxu0 0.0
    %465 = vmatprep.subr.mxu0 0.0
    %466 = vmatpush1.msra.mxu0 0.0
    %467 = vmatprep.subr.mxu0 0.0
    %468 = vmatpush1.msra.mxu0 0.0
    %469 = vmatprep.subr.mxu0 0.0
    %470 = vmatpush1.msra.mxu0 0.0
    %471 = vmatprep.subr.mxu0 0.0
    %472 = vmatpush1.msra.mxu0 0.0
    %473 = vmatprep.subr.mxu0 0.0
    %474 = vmatpush1.msra.mxu0 0.0
    %475 = vmatprep.subr.mxu0 0.0
    %476 = vmatpush1.msra.mxu0 0.0
    %477 = vmatprep.subr.mxu0 0.0
    %478 = vmatpush1.msra.mxu0 0.0
    %479 = vmatprep.subr.mxu0 0.0
    %480 = vmatpush1.msra.mxu0 0.0
    %481 = vmatprep.subr.mxu0 0.0
    %482 = vmatpush1.msra.mxu0 0.0
    %483 = vmatprep.subr.mxu0 0.0
    %484 = vmatpush1.msra.mxu0 0.0
    %485 = vmatprep.subr.mxu0 0.0
    %486 = vmatpush1.msra.mxu0 0.0
    %487 = vmatprep.subr.mxu0 0.0
    %488 = vmatpush1.msra.mxu0 0.0
    %489 = vmatprep.subr.mxu0 0.0
    %490 = vmatpush1.msra.mxu0 0.0
    %491 = vmatprep.subr.mxu0 0.0
    %492 = vmatpush1.msra.mxu0 0.0
    %493 = vmatprep.subr.mxu0 0.0
    %494 = vmatpush1.msra.mxu0 0.0
    %495 = vmatprep.mubr.f32.mxu0 0.0
    %496 = vmatmul.mubr.f32.gmra.mrb[0].mxu0 %v429
    %v497 = vpop.f32.mrb[0].mxu0
    %v498 = vadd.f32 %v427, %v497
    %v499 = vpop.f32.mrb[0].mxu0
    %500 = vdwg.mxu0
    %v501 = vadd.f32 %v417, %v498
    %v502 = vxor.u32 %v501, 2147483648
    %v503 = vmul.f32 %v502, 1.442695
    %v504 = vpow.pop %v503
    %v505 = vadd.f32 %v504, 1.0
    %v506 = vrcp.pop %v505
    %v507 = vmul.f32 1.0, %v506
    %509 = vrot.lane.b32.xlu0 %v498, 64
    %v510 = vpop.permute.xlu0 %509
    %v512 = vmul.f32 %v507, %v510
    %514 = vrot.lane.b32.xlu0 %v512, 64
    %v515 = vpop.permute.xlu0 %514
    %v517 = vadd.f32 %v417, %v515
    %v518 = vtanh.pop %v517
    %v519 = vsub.f32 1.0, %v507
    %521 = vrot.lane.b32.xlu0 %v518, 96
    %v522 = vpop.permute.xlu0 %521
    %v524 = vmul.f32 %v519, %v522
    %v525 = vmul.f32 %v507, %v409
    %v526 = vadd.f32 %v524, %v525
    %528 = vrot.lane.b32.xlu0 %v526, 96
    %v529 = vpop.permute.xlu0 %528
    %s531 = scalar_lea.vmem [#allocation9], 6
    %532 = vst.msk [vmem:[%s531] sm:$0x3] %vm180, %v529
    %s533 = scalar_lea.vmem [#allocation3], 8
    %v534 = vld [vmem:[%s533] sm:$0x3]
    %v535 = vld [vmem:[#allocation6] sm:$0xff]
    %v536 = vld [vmem:[#allocation6 + $0x8] sm:$0xff]
    %v537 = vld [vmem:[#allocation6 + $0x10] sm:$0xff]
    %v538 = vld [vmem:[#allocation6 + $0x18] sm:$0xff]
    %v539 = vld [vmem:[#allocation8] sm:$0x1]
    %v541 = vlaneseq
    %v542 = vshrl.u32 %v541, 7
    %v543 = vsub.s32 0, %v542
    %v544 = vrot.slane %v539, %v543
    %v546 = vsel %vm73, %v529, 0
    %548 = vmatprep.subr.mxu0 0.0
    %549 = vmatpush1.msra.mxu0 %v535
    %550 = vmatprep.subr.mxu0 0.0
    %551 = vmatpush1.msra.mxu0 %v536
    %552 = vmatprep.subr.mxu0 0.0
    %553 = vmatpush1.msra.mxu0 %v537
    %554 = vmatprep.subr.mxu0 0.0
    %555 = vmatpush1.msra.mxu0 %v538
    %556 = vmatprep.subr.mxu0 0.0
    %557 = vmatpush1.msra.mxu0 0.0
    %558 = vmatprep.subr.mxu0 0.0
    %559 = vmatpush1.msra.mxu0 0.0
    %560 = vmatprep.subr.mxu0 0.0
    %561 = vmatpush1.msra.mxu0 0.0
    %562 = vmatprep.subr.mxu0 0.0
    %563 = vmatpush1.msra.mxu0 0.0
    %564 = vmatprep.subr.mxu0 0.0
    %565 = vmatpush1.msra.mxu0 0.0
    %566 = vmatprep.subr.mxu0 0.0
    %567 = vmatpush1.msra.mxu0 0.0
    %568 = vmatprep.subr.mxu0 0.0
    %569 = vmatpush1.msra.mxu0 0.0
    %570 = vmatprep.subr.mxu0 0.0
    %571 = vmatpush1.msra.mxu0 0.0
    %572 = vmatprep.subr.mxu0 0.0
    %573 = vmatpush1.msra.mxu0 0.0
    %574 = vmatprep.subr.mxu0 0.0
    %575 = vmatpush1.msra.mxu0 0.0
    %576 = vmatprep.subr.mxu0 0.0
    %577 = vmatpush1.msra.mxu0 0.0
    %578 = vmatprep.subr.mxu0 0.0
    %579 = vmatpush1.msra.mxu0 0.0
    %580 = vmatprep.subr.mxu0 0.0
    %581 = vmatpush1.msra.mxu0 0.0
    %582 = vmatprep.subr.mxu0 0.0
    %583 = vmatpush1.msra.mxu0 0.0
    %584 = vmatprep.subr.mxu0 0.0
    %585 = vmatpush1.msra.mxu0 0.0
    %586 = vmatprep.subr.mxu0 0.0
    %587 = vmatpush1.msra.mxu0 0.0
    %588 = vmatprep.subr.mxu0 0.0
    %589 = vmatpush1.msra.mxu0 0.0
    %590 = vmatprep.subr.mxu0 0.0
    %591 = vmatpush1.msra.mxu0 0.0
    %592 = vmatprep.subr.mxu0 0.0
    %593 = vmatpush1.msra.mxu0 0.0
    %594 = vmatprep.subr.mxu0 0.0
    %595 = vmatpush1.msra.mxu0 0.0
    %596 = vmatprep.subr.mxu0 0.0
    %597 = vmatpush1.msra.mxu0 0.0
    %598 = vmatprep.subr.mxu0 0.0
    %599 = vmatpush1.msra.mxu0 0.0
    %600 = vmatprep.subr.mxu0 0.0
    %601 = vmatpush1.msra.mxu0 0.0
    %602 = vmatprep.subr.mxu0 0.0
    %603 = vmatpush1.msra.mxu0 0.0
    %604 = vmatprep.subr.mxu0 0.0
    %605 = vmatpush1.msra.mxu0 0.0
    %606 = vmatprep.subr.mxu0 0.0
    %607 = vmatpush1.msra.mxu0 0.0
    %608 = vmatprep.subr.mxu0 0.0
    %609 = vmatpush1.msra.mxu0 0.0
    %610 = vmatprep.subr.mxu0 0.0
    %611 = vmatpush1.msra.mxu0 0.0
    %612 = vmatprep.mubr.f32.mxu0 0.0
    %613 = vmatmul.mubr.f32.gmra.mrb[0].mxu0 %v546
    %v614 = vpop.f32.mrb[0].mxu0
    %v615 = vadd.f32 %v544, %v614
    %v616 = vpop.f32.mrb[0].mxu0
    %617 = vdwg.mxu0
    %v618 = vadd.f32 %v534, %v615
    %v619 = vxor.u32 %v618, 2147483648
    %v620 = vmul.f32 %v619, 1.442695
    %v621 = vpow.pop %v620
    %v622 = vadd.f32 %v621, 1.0
    %v623 = vrcp.pop %v622
    %v624 = vmul.f32 1.0, %v623
    %626 = vrot.lane.b32.xlu0 %v615, 64
    %v627 = vpop.permute.xlu0 %626
    %v629 = vmul.f32 %v624, %v627
    %631 = vrot.lane.b32.xlu0 %v629, 64
    %v632 = vpop.permute.xlu0 %631
    %v634 = vadd.f32 %v534, %v632
    %v635 = vtanh.pop %v634
    %v636 = vsub.f32 1.0, %v624
    %638 = vrot.lane.b32.xlu0 %v635, 96
    %v639 = vpop.permute.xlu0 %638
    %v641 = vmul.f32 %v636, %v639
    %v642 = vmul.f32 %v624, %v526
    %v643 = vadd.f32 %v641, %v642
    %645 = vrot.lane.b32.xlu0 %v643, 96
    %v646 = vpop.permute.xlu0 %645
    %s648 = scalar_lea.vmem [#allocation9], 8
    %649 = vst.msk [vmem:[%s648] sm:$0x3] %vm180, %v646
    %s650 = scalar_lea.vmem [#allocation3], 10
    %v651 = vld [vmem:[%s650] sm:$0x3]
    %v652 = vld [vmem:[#allocation6] sm:$0xff]
    %v653 = vld [vmem:[#allocation6 + $0x8] sm:$0xff]
    %v654 = vld [vmem:[#allocation6 + $0x10] sm:$0xff]
    %v655 = vld [vmem:[#allocation6 + $0x18] sm:$0xff]
    %v656 = vld [vmem:[#allocation8] sm:$0x1]
    %v658 = vlaneseq
    %v659 = vshrl.u32 %v658, 7
    %v660 = vsub.s32 0, %v659
    %v661 = vrot.slane %v656, %v660
    %v663 = vsel %vm73, %v646, 0
    %665 = vmatprep.subr.mxu0 0.0
    %666 = vmatpush1.msra.mxu0 %v652
    %667 = vmatprep.subr.mxu0 0.0
    %668 = vmatpush1.msra.mxu0 %v653
    %669 = vmatprep.subr.mxu0 0.0
    %670 = vmatpush1.msra.mxu0 %v654
    %671 = vmatprep.subr.mxu0 0.0
    %672 = vmatpush1.msra.mxu0 %v655
    %673 = vmatprep.subr.mxu0 0.0
    %674 = vmatpush1.msra.mxu0 0.0
    %675 = vmatprep.subr.mxu0 0.0
    %676 = vmatpush1.msra.mxu0 0.0
    %677 = vmatprep.subr.mxu0 0.0
    %678 = vmatpush1.msra.mxu0 0.0
    %679 = vmatprep.subr.mxu0 0.0
    %680 = vmatpush1.msra.mxu0 0.0
    %681 = vmatprep.subr.mxu0 0.0
    %682 = vmatpush1.msra.mxu0 0.0
    %683 = vmatprep.subr.mxu0 0.0
    %684 = vmatpush1.msra.mxu0 0.0
    %685 = vmatprep.subr.mxu0 0.0
    %686 = vmatpush1.msra.mxu0 0.0
    %687 = vmatprep.subr.mxu0 0.0
    %688 = vmatpush1.msra.mxu0 0.0
    %689 = vmatprep.subr.mxu0 0.0
    %690 = vmatpush1.msra.mxu0 0.0
    %691 = vmatprep.subr.mxu0 0.0
    %692 = vmatpush1.msra.mxu0 0.0
    %693 = vmatprep.subr.mxu0 0.0
    %694 = vmatpush1.msra.mxu0 0.0
    %695 = vmatprep.subr.mxu0 0.0
    %696 = vmatpush1.msra.mxu0 0.0
    %697 = vmatprep.subr.mxu0 0.0
    %698 = vmatpush1.msra.mxu0 0.0
    %699 = vmatprep.subr.mxu0 0.0
    %700 = vmatpush1.msra.mxu0 0.0
    %701 = vmatprep.subr.mxu0 0.0
    %702 = vmatpush1.msra.mxu0 0.0
    %703 = vmatprep.subr.mxu0 0.0
    %704 = vmatpush1.msra.mxu0 0.0
    %705 = vmatprep.subr.mxu0 0.0
    %706 = vmatpush1.msra.mxu0 0.0
    %707 = vmatprep.subr.mxu0 0.0
    %708 = vmatpush1.msra.mxu0 0.0
    %709 = vmatprep.subr.mxu0 0.0
    %710 = vmatpush1.msra.mxu0 0.0
    %711 = vmatprep.subr.mxu0 0.0
    %712 = vmatpush1.msra.mxu0 0.0
    %713 = vmatprep.subr.mxu0 0.0
    %714 = vmatpush1.msra.mxu0 0.0
    %715 = vmatprep.subr.mxu0 0.0
    %716 = vmatpush1.msra.mxu0 0.0
    %717 = vmatprep.subr.mxu0 0.0
    %718 = vmatpush1.msra.mxu0 0.0
    %719 = vmatprep.subr.mxu0 0.0
    %720 = vmatpush1.msra.mxu0 0.0
    %721 = vmatprep.subr.mxu0 0.0
    %722 = vmatpush1.msra.mxu0 0.0
    %723 = vmatprep.subr.mxu0 0.0
    %724 = vmatpush1.msra.mxu0 0.0
    %725 = vmatprep.subr.mxu0 0.0
    %726 = vmatpush1.msra.mxu0 0.0
    %727 = vmatprep.subr.mxu0 0.0
    %728 = vmatpush1.msra.mxu0 0.0
    %729 = vmatprep.mubr.f32.mxu0 0.0
    %730 = vmatmul.mubr.f32.gmra.mrb[0].mxu0 %v663
    %v731 = vpop.f32.mrb[0].mxu0
    %v732 = vadd.f32 %v661, %v731
    %v733 = vpop.f32.mrb[0].mxu0
    %734 = vdwg.mxu0
    %v735 = vadd.f32 %v651, %v732
    %v736 = vxor.u32 %v735, 2147483648
    %v737 = vmul.f32 %v736, 1.442695
    %v738 = vpow.pop %v737
    %v739 = vadd.f32 %v738, 1.0
    %v740 = vrcp.pop %v739
    %v741 = vmul.f32 1.0, %v740
    %743 = vrot.lane.b32.xlu0 %v732, 64
    %v744 = vpop.permute.xlu0 %743
    %v746 = vmul.f32 %v741, %v744
    %748 = vrot.lane.b32.xlu0 %v746, 64
    %v749 = vpop.permute.xlu0 %748
    %v751 = vadd.f32 %v651, %v749
    %v752 = vtanh.pop %v751
    %v753 = vsub.f32 1.0, %v741
    %755 = vrot.lane.b32.xlu0 %v752, 96
    %v756 = vpop.permute.xlu0 %755
    %v758 = vmul.f32 %v753, %v756
    %v759 = vmul.f32 %v741, %v643
    %v760 = vadd.f32 %v758, %v759
    %762 = vrot.lane.b32.xlu0 %v760, 96
    %v763 = vpop.permute.xlu0 %762
    %s765 = scalar_lea.vmem [#allocation9], 10
    %766 = vst.msk [vmem:[%s765] sm:$0x3] %vm180, %v763
    %s767 = scalar_lea.vmem [#allocation3], 12
    %v768 = vld [vmem:[%s767] sm:$0x3]
    %v769 = vld [vmem:[#allocation6] sm:$0xff]
    %v770 = vld [vmem:[#allocation6 + $0x8] sm:$0xff]
    %v771 = vld [vmem:[#allocation6 + $0x10] sm:$0xff]
    %v772 = vld [vmem:[#allocation6 + $0x18] sm:$0xff]
    %v773 = vld [vmem:[#allocation8] sm:$0x1]
    %v775 = vlaneseq
    %v776 = vshrl.u32 %v775, 7
    %v777 = vsub.s32 0, %v776
    %v778 = vrot.slane %v773, %v777
    %v780 = vsel %vm73, %v763, 0
    %782 = vmatprep.subr.mxu0 0.0
    %783 = vmatpush1.msra.mxu0 %v769
    %784 = vmatprep.subr.mxu0 0.0
    %785 = vmatpush1.msra.mxu0 %v770
    %786 = vmatprep.subr.mxu0 0.0
    %787 = vmatpush1.msra.mxu0 %v771
    %788 = vmatprep.subr.mxu0 0.0
    %789 = vmatpush1.msra.mxu0 %v772
    %790 = vmatprep.subr.mxu0 0.0
    %791 = vmatpush1.msra.mxu0 0.0
    %792 = vmatprep.subr.mxu0 0.0
    %793 = vmatpush1.msra.mxu0 0.0
    %794 = vmatprep.subr.mxu0 0.0
    %795 = vmatpush1.msra.mxu0 0.0
    %796 = vmatprep.subr.mxu0 0.0
    %797 = vmatpush1.msra.mxu0 0.0
    %798 = vmatprep.subr.mxu0 0.0
    %799 = vmatpush1.msra.mxu0 0.0
    %800 = vmatprep.subr.mxu0 0.0
    %801 = vmatpush1.msra.mxu0 0.0
    %802 = vmatprep.subr.mxu0 0.0
    %803 = vmatpush1.msra.mxu0 0.0
    %804 = vmatprep.subr.mxu0 0.0
    %805 = vmatpush1.msra.mxu0 0.0
    %806 = vmatprep.subr.mxu0 0.0
    %807 = vmatpush1.msra.mxu0 0.0
    %808 = vmatprep.subr.mxu0 0.0
    %809 = vmatpush1.msra.mxu0 0.0
    %810 = vmatprep.subr.mxu0 0.0
    %811 = vmatpush1.msra.mxu0 0.0
    %812 = vmatprep.subr.mxu0 0.0
    %813 = vmatpush1.msra.mxu0 0.0
    %814 = vmatprep.subr.mxu0 0.0
    %815 = vmatpush1.msra.mxu0 0.0
    %816 = vmatprep.subr.mxu0 0.0
    %817 = vmatpush1.msra.mxu0 0.0
    %818 = vmatprep.subr.mxu0 0.0
    %819 = vmatpush1.msra.mxu0 0.0
    %820 = vmatprep.subr.mxu0 0.0
    %821 = vmatpush1.msra.mxu0 0.0
    %822 = vmatprep.subr.mxu0 0.0
    %823 = vmatpush1.msra.mxu0 0.0
    %824 = vmatprep.subr.mxu0 0.0
    %825 = vmatpush1.msra.mxu0 0.0
    %826 = vmatprep.subr.mxu0 0.0
    %827 = vmatpush1.msra.mxu0 0.0
    %828 = vmatprep.subr.mxu0 0.0
    %829 = vmatpush1.msra.mxu0 0.0
    %830 = vmatprep.subr.mxu0 0.0
    %831 = vmatpush1.msra.mxu0 0.0
    %832 = vmatprep.subr.mxu0 0.0
    %833 = vmatpush1.msra.mxu0 0.0
    %834 = vmatprep.subr.mxu0 0.0
    %835 = vmatpush1.msra.mxu0 0.0
    %836 = vmatprep.subr.mxu0 0.0
    %837 = vmatpush1.msra.mxu0 0.0
    %838 = vmatprep.subr.mxu0 0.0
    %839 = vmatpush1.msra.mxu0 0.0
    %840 = vmatprep.subr.mxu0 0.0
    %841 = vmatpush1.msra.mxu0 0.0
    %842 = vmatprep.subr.mxu0 0.0
    %843 = vmatpush1.msra.mxu0 0.0
    %844 = vmatprep.subr.mxu0 0.0
    %845 = vmatpush1.msra.mxu0 0.0
    %846 = vmatprep.mubr.f32.mxu0 0.0
    %847 = vmatmul.mubr.f32.gmra.mrb[0].mxu0 %v780
    %v848 = vpop.f32.mrb[0].mxu0
    %v849 = vadd.f32 %v778, %v848
    %v850 = vpop.f32.mrb[0].mxu0
    %851 = vdwg.mxu0
    %v852 = vadd.f32 %v768, %v849
    %v853 = vxor.u32 %v852, 2147483648
    %v854 = vmul.f32 %v853, 1.442695
    %v855 = vpow.pop %v854
    %v856 = vadd.f32 %v855, 1.0
    %v857 = vrcp.pop %v856
    %v858 = vmul.f32 1.0, %v857
    %860 = vrot.lane.b32.xlu0 %v849, 64
    %v861 = vpop.permute.xlu0 %860
    %v863 = vmul.f32 %v858, %v861
    %865 = vrot.lane.b32.xlu0 %v863, 64
    %v866 = vpop.permute.xlu0 %865
    %v868 = vadd.f32 %v768, %v866
    %v869 = vtanh.pop %v868
    %v870 = vsub.f32 1.0, %v858
    %872 = vrot.lane.b32.xlu0 %v869, 96
    %v873 = vpop.permute.xlu0 %872
    %v875 = vmul.f32 %v870, %v873
    %v876 = vmul.f32 %v858, %v760
    %v877 = vadd.f32 %v875, %v876
    %879 = vrot.lane.b32.xlu0 %v877, 96
    %v880 = vpop.permute.xlu0 %879
    %s882 = scalar_lea.vmem [#allocation9], 12
    %883 = vst.msk [vmem:[%s882] sm:$0x3] %vm180, %v880
    %s884 = scalar_lea.vmem [#allocation3], 14
    %v885 = vld [vmem:[%s884] sm:$0x3]
    %v886 = vld [vmem:[#allocation6] sm:$0xff]
    %v887 = vld [vmem:[#allocation6 + $0x8] sm:$0xff]
    %v888 = vld [vmem:[#allocation6 + $0x10] sm:$0xff]
    %v889 = vld [vmem:[#allocation6 + $0x18] sm:$0xff]
    %v890 = vld [vmem:[#allocation8] sm:$0x1]
    %v892 = vlaneseq
    %v893 = vshrl.u32 %v892, 7
    %v894 = vsub.s32 0, %v893
    %v895 = vrot.slane %v890, %v894
    %v897 = vsel %vm73, %v880, 0
    %899 = vmatprep.subr.mxu0 0.0
    %900 = vmatpush1.msra.mxu0 %v886
    %901 = vmatprep.subr.mxu0 0.0
    %902 = vmatpush1.msra.mxu0 %v887
    %903 = vmatprep.subr.mxu0 0.0
    %904 = vmatpush1.msra.mxu0 %v888
    %905 = vmatprep.subr.mxu0 0.0
    %906 = vmatpush1.msra.mxu0 %v889
    %907 = vmatprep.subr.mxu0 0.0
    %908 = vmatpush1.msra.mxu0 0.0
    %909 = vmatprep.subr.mxu0 0.0
    %910 = vmatpush1.msra.mxu0 0.0
    %911 = vmatprep.subr.mxu0 0.0
    %912 = vmatpush1.msra.mxu0 0.0
    %913 = vmatprep.subr.mxu0 0.0
    %914 = vmatpush1.msra.mxu0 0.0
    %915 = vmatprep.subr.mxu0 0.0
    %916 = vmatpush1.msra.mxu0 0.0
    %917 = vmatprep.subr.mxu0 0.0
    %918 = vmatpush1.msra.mxu0 0.0
    %919 = vmatprep.subr.mxu0 0.0
    %920 = vmatpush1.msra.mxu0 0.0
    %921 = vmatprep.subr.mxu0 0.0
    %922 = vmatpush1.msra.mxu0 0.0
    %923 = vmatprep.subr.mxu0 0.0
    %924 = vmatpush1.msra.mxu0 0.0
    %925 = vmatprep.subr.mxu0 0.0
    %926 = vmatpush1.msra.mxu0 0.0
    %927 = vmatprep.subr.mxu0 0.0
    %928 = vmatpush1.msra.mxu0 0.0
    %929 = vmatprep.subr.mxu0 0.0
    %930 = vmatpush1.msra.mxu0 0.0
    %931 = vmatprep.subr.mxu0 0.0
    %932 = vmatpush1.msra.mxu0 0.0
    %933 = vmatprep.subr.mxu0 0.0
    %934 = vmatpush1.msra.mxu0 0.0
    %935 = vmatprep.subr.mxu0 0.0
    %936 = vmatpush1.msra.mxu0 0.0
    %937 = vmatprep.subr.mxu0 0.0
    %938 = vmatpush1.msra.mxu0 0.0
    %939 = vmatprep.subr.mxu0 0.0
    %940 = vmatpush1.msra.mxu0 0.0
    %941 = vmatprep.subr.mxu0 0.0
    %942 = vmatpush1.msra.mxu0 0.0
    %943 = vmatprep.subr.mxu0 0.0
    %944 = vmatpush1.msra.mxu0 0.0
    %945 = vmatprep.subr.mxu0 0.0
    %946 = vmatpush1.msra.mxu0 0.0
    %947 = vmatprep.subr.mxu0 0.0
    %948 = vmatpush1.msra.mxu0 0.0
    %949 = vmatprep.subr.mxu0 0.0
    %950 = vmatpush1.msra.mxu0 0.0
    %951 = vmatprep.subr.mxu0 0.0
    %952 = vmatpush1.msra.mxu0 0.0
    %953 = vmatprep.subr.mxu0 0.0
    %954 = vmatpush1.msra.mxu0 0.0
    %955 = vmatprep.subr.mxu0 0.0
    %956 = vmatpush1.msra.mxu0 0.0
    %957 = vmatprep.subr.mxu0 0.0
    %958 = vmatpush1.msra.mxu0 0.0
    %959 = vmatprep.subr.mxu0 0.0
    %960 = vmatpush1.msra.mxu0 0.0
    %961 = vmatprep.subr.mxu0 0.0
    %962 = vmatpush1.msra.mxu0 0.0
    %963 = vmatprep.mubr.f32.mxu0 0.0
    %964 = vmatmul.mubr.f32.gmra.mrb[0].mxu0 %v897
    %v965 = vpop.f32.mrb[0].mxu0
    %v966 = vadd.f32 %v895, %v965
    %v967 = vpop.f32.mrb[0].mxu0
    %968 = vdwg.mxu0
    %v969 = vadd.f32 %v885, %v966
    %v970 = vxor.u32 %v969, 2147483648
    %v971 = vmul.f32 %v970, 1.442695
    %v972 = vpow.pop %v971
    %v973 = vadd.f32 %v972, 1.0
    %v974 = vrcp.pop %v973
    %v975 = vmul.f32 1.0, %v974
    %977 = vrot.lane.b32.xlu0 %v966, 64
    %v978 = vpop.permute.xlu0 %977
    %v980 = vmul.f32 %v975, %v978
    %982 = vrot.lane.b32.xlu0 %v980, 64
    %v983 = vpop.permute.xlu0 %982
    %v985 = vadd.f32 %v885, %v983
    %v986 = vtanh.pop %v985
    %v987 = vsub.f32 1.0, %v975
    %989 = vrot.lane.b32.xlu0 %v986, 96
    %v990 = vpop.permute.xlu0 %989
    %v992 = vmul.f32 %v987, %v990
    %v993 = vmul.f32 %v975, %v877
    %v994 = vadd.f32 %v992, %v993
    %996 = vrot.lane.b32.xlu0 %v994, 96
    %v997 = vpop.permute.xlu0 %996
    %s999 = scalar_lea.vmem [#allocation9], 14
    %1000 = vst.msk [vmem:[%s999] sm:$0x3] %vm180, %v997
    %1001 = vst.msk [vmem:[#allocation2] sm:$0x3] %vm180, %v997
    // Predicated region
    $region30: #{seq2seq_forward.5} parent=1 // pred_check
      _
    $region31: #{seq2seq_forward.5} parent=1 // pred_check_branch
      %1003 = sbr.rel (0) target = $region33
    $region32: #{seq2seq_forward.5} parent=1 // pred_region
      %s1005 = ssub.s32 256, 256
      %1006 = vsyncadd [#allocation5], %s1005
      %s1007 = sshll.u32 [#allocation9], 4
      %s1008 = int_to_ptr.vmem [resolvable:$true] %s1007
      %1013 = dma.vmem_to_hbm [thread:$0]  %s1008, 256, %s3, [#allocation5], 32, 32, 2
    $region33: #{seq2seq_forward.5} parent=1 // pred_fallthru
      _
    // Predicated region
    $region34: #{seq2seq_forward.5} parent=1 // pred_check
      _
    $region35: #{seq2seq_forward.5} parent=1 // pred_check_branch
      %1015 = sbr.rel (0) target = $region37
    $region36: #{seq2seq_forward.5} parent=1 // pred_region
      %1016 = dma.done [#allocation5], 256
    $region37: #{seq2seq_forward.5} parent=1 // pred_fallthru
      _
    %1017 = vsyncpa [#allocation4], 1
    %1018 = vsyncpa [#allocation7], 1
    %1019 = vsyncpa [#allocation5], 1

// kernel: seq2seq_forward.6
$region0: #{seq2seq_forward.6}
  #allocation0 [shape = 'u32[]', space=smem, size = 0x4, offset = 0x4, fixed_abs, tag = 'smem constant byte address 0x4 - core index']
  #allocation1 [shape = 'u32[144,128]{1,0:T(1,128)}', space=vmem, size = 0x12000, scoped, tag = 'internal scratch']
  #allocation2 [shape = 'f32[2,32]{1,0:T(2,128)}', space=vmem, size = 0x400, scoped, tag = 'scratch operand']
  %s0 = inlined_call_operand.hbm [shape: f32[8,2,96], index: 0, kind: input, shape index: {}]
  %s1 = inlined_call_operand.hbm [shape: f32[32,96], index: 1, kind: input, shape index: {}]
  %s2 = inlined_call_operand.hbm [shape: f32[1,96], index: 2, kind: input, shape index: {}]
  %s3 = inlined_call_operand.hbm [shape: f32[8,2,32], index: 3, kind: output, shape index: {}]
  %s4 = sld [smem:[#allocation0]]
  $region38: #{seq2seq_forward.6} parent=0
    _
  %s6 = ssub.s32 1, %s4
  %s7 = scalar_select 0, %s6, %s4
  $region1: #{seq2seq_forward.6} parent=0
    #allocation3 [shape = 'u8[8192]{0}', space=vmem, size = 0x2000, scoped, tag = 'input window, operand 0, single buffered']
    #allocation4 [shape = 's32[1]{0}', space=sflag, size = 0x4, scoped, tag = 'scoped memory for seq2seq_forward.6']
    #allocation5 [shape = 's32[1]{0}', space=sflag, size = 0x4, scoped, tag = 'scoped memory for seq2seq_forward.6']
    #allocation6 [shape = 'u8[16384]{0}', space=vmem, size = 0x4000, scoped, tag = 'input window, operand 1, single buffered']
    #allocation7 [shape = 's32[1]{0}', space=sflag, size = 0x4, scoped, tag = 'scoped memory for seq2seq_forward.6']
    #allocation8 [shape = 'u8[512]{0}', space=vmem, size = 0x400, scoped, tag = 'input window, operand 2, single buffered']
    #allocation9 [shape = 'u8[8192]{0}', space=vmem, size = 0x2000, scoped, tag = 'output window, operand 0, single buffered']
    %8 = vsyncpa [#allocation4], 0
    %9 = vsyncpa [#allocation7], 0
    %10 = vsyncpa [#allocation5], 0
    // Predicated region
    $region2: #{seq2seq_forward.6} parent=1 // pred_check
      _
    $region3: #{seq2seq_forward.6} parent=1 // pred_check_branch
      %12 = sbr.rel (0) target = $region5
    $region4: #{seq2seq_forward.6} parent=1 // pred_region
      %s13 = ssub.s32 0, 0
      %s14 = smul.u32 8, %s13
      %s16 = ssub.s32 256, 256
      %17 = vsyncadd [#allocation4], %s16
      %s18 = smul.addr %s14, 32
      %s19 = scalar_lea.hbm %s0, %s18
      %s20 = sshll.u32 [#allocation3], 4
      %s21 = int_to_ptr.vmem [resolvable:$true] %s20
      %26 = dma.hbm_to_vmem [thread:$0]  %s19, 256, %s21, [#allocation4], 32, 32, 2
    $region5: #{seq2seq_forward.6} parent=1 // pred_fallthru
      _
    // Predicated region
    $region6: #{seq2seq_forward.6} parent=1 // pred_check
      _
    $region7: #{seq2seq_forward.6} parent=1 // pred_check_branch
      %28 = sbr.rel (0) target = $region9
    $region8: #{seq2seq_forward.6} parent=1 // pred_region
      %s30 = ssub.s32 512, 512
      %31 = vsyncadd [#allocation7], %s30
      %s32 = sshll.u32 [#allocation6], 4
      %s33 = int_to_ptr.vmem [resolvable:$true] %s32
      %38 = dma.hbm_to_vmem [thread:$0]  %s1, 512, %s33, [#allocation7], 128, 128, 8
    $region9: #{seq2seq_forward.6} parent=1 // pred_fallthru
      _
    // Predicated region
    $region10: #{seq2seq_forward.6} parent=1 // pred_check
      _
    $region11: #{seq2seq_forward.6} parent=1 // pred_check_branch
      %40 = sbr.rel (0) target = $region13
    $region12: #{seq2seq_forward.6} parent=1 // pred_region
      %s42 = ssub.s32 16, 16
      %43 = vsyncadd [#allocation7], %s42
      %s45 = sshll.u32 [#allocation8], 4
      %s46 = int_to_ptr.vmem [resolvable:$true] %s45
      %48 = dma.hbm_to_vmem [thread:$0]  %s2, 16, %s46, [#allocation7]
    $region13: #{seq2seq_forward.6} parent=1 // pred_fallthru
      _
    // Predicated region
    $region14: #{seq2seq_forward.6} parent=1 // pred_check
      _
    $region15: #{seq2seq_forward.6} parent=1 // pred_check_branch
      %50 = sbr.rel (0) target = $region17
    $region16: #{seq2seq_forward.6} parent=1 // pred_region
      %51 = dma.done [#allocation4], 256
    $region17: #{seq2seq_forward.6} parent=1 // pred_fallthru
      _
    // Predicated region
    $region18: #{seq2seq_forward.6} parent=1 // pred_check
      _
    $region19: #{seq2seq_forward.6} parent=1 // pred_check_branch
      %53 = sbr.rel (0) target = $region21
    $region20: #{seq2seq_forward.6} parent=1 // pred_region
      %54 = dma.done [#allocation7], 512
    $region21: #{seq2seq_forward.6} parent=1 // pred_fallthru
      _
    // Predicated region
    $region22: #{seq2seq_forward.6} parent=1 // pred_check
      _
    $region23: #{seq2seq_forward.6} parent=1 // pred_check_branch
      %56 = sbr.rel (0) target = $region25
    $region24: #{seq2seq_forward.6} parent=1 // pred_region
      %57 = dma.done [#allocation7], 16
    $region25: #{seq2seq_forward.6} parent=1 // pred_fallthru
      _
    %s58 = ssub.s32 0, 0
    %s59 = smul.u32 8, %s58
    %s60 = ssub.s32 0, 0
    %s61 = smul.u32 8, %s60
    %p62 = scmp.eq.s32.totalorder 0, 0
    // Predicated region
    $region26: #{seq2seq_forward.6} parent=1 // pred_check
      %p63 = pneg %p62
    $region27: #{seq2seq_forward.6} parent=1 // pred_check_branch
      %65 = sbr.rel (%p63) target = $region29
    $region28: #{seq2seq_forward.6} parent=1 // pred_region
      %vm66 = vcmask 254976
      %67 = vst.msk [vmem:[#allocation2] sm:$0x3] %vm66, 0.0
    $region29: #{seq2seq_forward.6} parent=1 // pred_fallthru
      _
    %v68 = vld [vmem:[#allocation2] sm:$0x3]
    %s69 = scalar_lea.vmem [#allocation3], 14
    %v70 = vld [vmem:[%s69] sm:$0x3]
    %v71 = vld [vmem:[#allocation6] sm:$0xff]
    %v72 = vld [vmem:[#allocation6 + $0x8] sm:$0xff]
    %v73 = vld [vmem:[#allocation6 + $0x10] sm:$0xff]
    %v74 = vld [vmem:[#allocation6 + $0x18] sm:$0xff]
    %v75 = vld [vmem:[#allocation8] sm:$0x1]
    %v77 = vlaneseq
    %v78 = vshrl.u32 %v77, 7
    %v79 = vsub.s32 0, %v78
    %v80 = vrot.slane %v75, %v79
    %vm82 = vcmask 261120
    %v84 = vsel %vm82, %v68, 0
    %86 = vmatprep.subr.mxu0 0.0
    %87 = vmatpush1.msra.mxu0 %v71
    %88 = vmatprep.subr.mxu0 0.0
    %89 = vmatpush1.msra.mxu0 %v72
    %90 = vmatprep.subr.mxu0 0.0
    %91 = vmatpush1.msra.mxu0 %v73
    %92 = vmatprep.subr.mxu0 0.0
    %93 = vmatpush1.msra.mxu0 %v74
    %94 = vmatprep.subr.mxu0 0.0
    %95 = vmatpush1.msra.mxu0 0.0
    %96 = vmatprep.subr.mxu0 0.0
    %97 = vmatpush1.msra.mxu0 0.0
    %98 = vmatprep.subr.mxu0 0.0
    %99 = vmatpush1.msra.mxu0 0.0
    %100 = vmatprep.subr.mxu0 0.0
    %101 = vmatpush1.msra.mxu0 0.0
    %102 = vmatprep.subr.mxu0 0.0
    %103 = vmatpush1.msra.mxu0 0.0
    %104 = vmatprep.subr.mxu0 0.0
    %105 = vmatpush1.msra.mxu0 0.0
    %106 = vmatprep.subr.mxu0 0.0
    %107 = vmatpush1.msra.mxu0 0.0
    %108 = vmatprep.subr.mxu0 0.0
    %109 = vmatpush1.msra.mxu0 0.0
    %110 = vmatprep.subr.mxu0 0.0
    %111 = vmatpush1.msra.mxu0 0.0
    %112 = vmatprep.subr.mxu0 0.0
    %113 = vmatpush1.msra.mxu0 0.0
    %114 = vmatprep.subr.mxu0 0.0
    %115 = vmatpush1.msra.mxu0 0.0
    %116 = vmatprep.subr.mxu0 0.0
    %117 = vmatpush1.msra.mxu0 0.0
    %118 = vmatprep.subr.mxu0 0.0
    %119 = vmatpush1.msra.mxu0 0.0
    %120 = vmatprep.subr.mxu0 0.0
    %121 = vmatpush1.msra.mxu0 0.0
    %122 = vmatprep.subr.mxu0 0.0
    %123 = vmatpush1.msra.mxu0 0.0
    %124 = vmatprep.subr.mxu0 0.0
    %125 = vmatpush1.msra.mxu0 0.0
    %126 = vmatprep.subr.mxu0 0.0
    %127 = vmatpush1.msra.mxu0 0.0
    %128 = vmatprep.subr.mxu0 0.0
    %129 = vmatpush1.msra.mxu0 0.0
    %130 = vmatprep.subr.mxu0 0.0
    %131 = vmatpush1.msra.mxu0 0.0
    %132 = vmatprep.subr.mxu0 0.0
    %133 = vmatpush1.msra.mxu0 0.0
    %134 = vmatprep.subr.mxu0 0.0
    %135 = vmatpush1.msra.mxu0 0.0
    %136 = vmatprep.subr.mxu0 0.0
    %137 = vmatpush1.msra.mxu0 0.0
    %138 = vmatprep.subr.mxu0 0.0
    %139 = vmatpush1.msra.mxu0 0.0
    %140 = vmatprep.subr.mxu0 0.0
    %141 = vmatpush1.msra.mxu0 0.0
    %142 = vmatprep.subr.mxu0 0.0
    %143 = vmatpush1.msra.mxu0 0.0
    %144 = vmatprep.subr.mxu0 0.0
    %145 = vmatpush1.msra.mxu0 0.0
    %146 = vmatprep.subr.mxu0 0.0
    %147 = vmatpush1.msra.mxu0 0.0
    %148 = vmatprep.subr.mxu0 0.0
    %149 = vmatpush1.msra.mxu0 0.0
    %150 = vmatprep.mubr.f32.mxu0 0.0
    %151 = vmatmul.mubr.f32.gmra.mrb[0].mxu0 %v84
    %v152 = vpop.f32.mrb[0].mxu0
    %v153 = vadd.f32 %v80, %v152
    %v154 = vpop.f32.mrb[0].mxu0
    %155 = vdwg.mxu0
    %v156 = vadd.f32 %v70, %v153
    %v157 = vxor.u32 %v156, 2147483648
    %v158 = vmul.f32 %v157, 1.442695
    %v159 = vpow.pop %v158
    %v160 = vadd.f32 %v159, 1.0
    %v161 = vrcp.pop %v160
    %v162 = vmul.f32 1.0, %v161
    %164 = vrot.lane.b32.xlu0 %v153, 64
    %v165 = vpop.permute.xlu0 %164
    %v167 = vmul.f32 %v162, %v165
    %169 = vrot.lane.b32.xlu0 %v167, 64
    %v170 = vpop.permute.xlu0 %169
    %v172 = vadd.f32 %v70, %v170
    %v173 = vtanh.pop %v172
    %v174 = vsub.f32 1.0, %v162
    %176 = vrot.lane.b32.xlu0 %v173, 96
    %v177 = vpop.permute.xlu0 %176
    %v179 = vmul.f32 %v174, %v177
    %180 = vrot.lane.b32.xlu0 %v68, 32
    %v181 = vpop.permute.xlu0 %180
    %v183 = vmul.f32 %v162, %v181
    %v184 = vadd.f32 %v179, %v183
    %186 = vrot.lane.b32.xlu0 %v184, 96
    %v187 = vpop.permute.xlu0 %186
    %s189 = scalar_lea.vmem [#allocation9], 14
    %vm190 = vcmask 254976
    %191 = vst.msk [vmem:[%s189] sm:$0x3] %vm190, %v187
    %s192 = scalar_lea.vmem [#allocation3], 12
    %v193 = vld [vmem:[%s192] sm:$0x3]
    %v194 = vld [vmem:[#allocation6] sm:$0xff]
    %v195 = vld [vmem:[#allocation6 + $0x8] sm:$0xff]
    %v196 = vld [vmem:[#allocation6 + $0x10] sm:$0xff]
    %v197 = vld [vmem:[#allocation6 + $0x18] sm:$0xff]
    %v198 = vld [vmem:[#allocation8] sm:$0x1]
    %v200 = vlaneseq
    %v201 = vshrl.u32 %v200, 7
    %v202 = vsub.s32 0, %v201
    %v203 = vrot.slane %v198, %v202
    %v205 = vsel %vm82, %v187, 0
    %207 = vmatprep.subr.mxu0 0.0
    %208 = vmatpush1.msra.mxu0 %v194
    %209 = vmatprep.subr.mxu0 0.0
    %210 = vmatpush1.msra.mxu0 %v195
    %211 = vmatprep.subr.mxu0 0.0
    %212 = vmatpush1.msra.mxu0 %v196
    %213 = vmatprep.subr.mxu0 0.0
    %214 = vmatpush1.msra.mxu0 %v197
    %215 = vmatprep.subr.mxu0 0.0
    %216 = vmatpush1.msra.mxu0 0.0
    %217 = vmatprep.subr.mxu0 0.0
    %218 = vmatpush1.msra.mxu0 0.0
    %219 = vmatprep.subr.mxu0 0.0
    %220 = vmatpush1.msra.mxu0 0.0
    %221 = vmatprep.subr.mxu0 0.0
    %222 = vmatpush1.msra.mxu0 0.0
    %223 = vmatprep.subr.mxu0 0.0
    %224 = vmatpush1.msra.mxu0 0.0
    %225 = vmatprep.subr.mxu0 0.0
    %226 = vmatpush1.msra.mxu0 0.0
    %227 = vmatprep.subr.mxu0 0.0
    %228 = vmatpush1.msra.mxu0 0.0
    %229 = vmatprep.subr.mxu0 0.0
    %230 = vmatpush1.msra.mxu0 0.0
    %231 = vmatprep.subr.mxu0 0.0
    %232 = vmatpush1.msra.mxu0 0.0
    %233 = vmatprep.subr.mxu0 0.0
    %234 = vmatpush1.msra.mxu0 0.0
    %235 = vmatprep.subr.mxu0 0.0
    %236 = vmatpush1.msra.mxu0 0.0
    %237 = vmatprep.subr.mxu0 0.0
    %238 = vmatpush1.msra.mxu0 0.0
    %239 = vmatprep.subr.mxu0 0.0
    %240 = vmatpush1.msra.mxu0 0.0
    %241 = vmatprep.subr.mxu0 0.0
    %242 = vmatpush1.msra.mxu0 0.0
    %243 = vmatprep.subr.mxu0 0.0
    %244 = vmatpush1.msra.mxu0 0.0
    %245 = vmatprep.subr.mxu0 0.0
    %246 = vmatpush1.msra.mxu0 0.0
    %247 = vmatprep.subr.mxu0 0.0
    %248 = vmatpush1.msra.mxu0 0.0
    %249 = vmatprep.subr.mxu0 0.0
    %250 = vmatpush1.msra.mxu0 0.0
    %251 = vmatprep.subr.mxu0 0.0
    %252 = vmatpush1.msra.mxu0 0.0
    %253 = vmatprep.subr.mxu0 0.0
    %254 = vmatpush1.msra.mxu0 0.0
    %255 = vmatprep.subr.mxu0 0.0
    %256 = vmatpush1.msra.mxu0 0.0
    %257 = vmatprep.subr.mxu0 0.0
    %258 = vmatpush1.msra.mxu0 0.0
    %259 = vmatprep.subr.mxu0 0.0
    %260 = vmatpush1.msra.mxu0 0.0
    %261 = vmatprep.subr.mxu0 0.0
    %262 = vmatpush1.msra.mxu0 0.0
    %263 = vmatprep.subr.mxu0 0.0
    %264 = vmatpush1.msra.mxu0 0.0
    %265 = vmatprep.subr.mxu0 0.0
    %266 = vmatpush1.msra.mxu0 0.0
    %267 = vmatprep.subr.mxu0 0.0
    %268 = vmatpush1.msra.mxu0 0.0
    %269 = vmatprep.subr.mxu0 0.0
    %270 = vmatpush1.msra.mxu0 0.0
    %271 = vmatprep.mubr.f32.mxu0 0.0
    %272 = vmatmul.mubr.f32.gmra.mrb[0].mxu0 %v205
    %v273 = vpop.f32.mrb[0].mxu0
    %v274 = vadd.f32 %v203, %v273
    %v275 = vpop.f32.mrb[0].mxu0
    %276 = vdwg.mxu0
    %v277 = vadd.f32 %v193, %v274
    %v278 = vxor.u32 %v277, 2147483648
    %v279 = vmul.f32 %v278, 1.442695
    %v280 = vpow.pop %v279
    %v281 = vadd.f32 %v280, 1.0
    %v282 = vrcp.pop %v281
    %v283 = vmul.f32 1.0, %v282
    %285 = vrot.lane.b32.xlu0 %v274, 64
    %v286 = vpop.permute.xlu0 %285
    %v288 = vmul.f32 %v283, %v286
    %290 = vrot.lane.b32.xlu0 %v288, 64
    %v291 = vpop.permute.xlu0 %290
    %v293 = vadd.f32 %v193, %v291
    %v294 = vtanh.pop %v293
    %v295 = vsub.f32 1.0, %v283
    %297 = vrot.lane.b32.xlu0 %v294, 96
    %v298 = vpop.permute.xlu0 %297
    %v300 = vmul.f32 %v295, %v298
    %v301 = vmul.f32 %v283, %v184
    %v302 = vadd.f32 %v300, %v301
    %304 = vrot.lane.b32.xlu0 %v302, 96
    %v305 = vpop.permute.xlu0 %304
    %s307 = scalar_lea.vmem [#allocation9], 12
    %308 = vst.msk [vmem:[%s307] sm:$0x3] %vm190, %v305
    %s309 = scalar_lea.vmem [#allocation3], 10
    %v310 = vld [vmem:[%s309] sm:$0x3]
    %v311 = vld [vmem:[#allocation6] sm:$0xff]
    %v312 = vld [vmem:[#allocation6 + $0x8] sm:$0xff]
    %v313 = vld [vmem:[#allocation6 + $0x10] sm:$0xff]
    %v314 = vld [vmem:[#allocation6 + $0x18] sm:$0xff]
    %v315 = vld [vmem:[#allocation8] sm:$0x1]
    %v317 = vlaneseq
    %v318 = vshrl.u32 %v317, 7
    %v319 = vsub.s32 0, %v318
    %v320 = vrot.slane %v315, %v319
    %v322 = vsel %vm82, %v305, 0
    %324 = vmatprep.subr.mxu0 0.0
    %325 = vmatpush1.msra.mxu0 %v311
    %326 = vmatprep.subr.mxu0 0.0
    %327 = vmatpush1.msra.mxu0 %v312
    %328 = vmatprep.subr.mxu0 0.0
    %329 = vmatpush1.msra.mxu0 %v313
    %330 = vmatprep.subr.mxu0 0.0
    %331 = vmatpush1.msra.mxu0 %v314
    %332 = vmatprep.subr.mxu0 0.0
    %333 = vmatpush1.msra.mxu0 0.0
    %334 = vmatprep.subr.mxu0 0.0
    %335 = vmatpush1.msra.mxu0 0.0
    %336 = vmatprep.subr.mxu0 0.0
    %337 = vmatpush1.msra.mxu0 0.0
    %338 = vmatprep.subr.mxu0 0.0
    %339 = vmatpush1.msra.mxu0 0.0
    %340 = vmatprep.subr.mxu0 0.0
    %341 = vmatpush1.msra.mxu0 0.0
    %342 = vmatprep.subr.mxu0 0.0
    %343 = vmatpush1.msra.mxu0 0.0
    %344 = vmatprep.subr.mxu0 0.0
    %345 = vmatpush1.msra.mxu0 0.0
    %346 = vmatprep.subr.mxu0 0.0
    %347 = vmatpush1.msra.mxu0 0.0
    %348 = vmatprep.subr.mxu0 0.0
    %349 = vmatpush1.msra.mxu0 0.0
    %350 = vmatprep.subr.mxu0 0.0
    %351 = vmatpush1.msra.mxu0 0.0
    %352 = vmatprep.subr.mxu0 0.0
    %353 = vmatpush1.msra.mxu0 0.0
    %354 = vmatprep.subr.mxu0 0.0
    %355 = vmatpush1.msra.mxu0 0.0
    %356 = vmatprep.subr.mxu0 0.0
    %357 = vmatpush1.msra.mxu0 0.0
    %358 = vmatprep.subr.mxu0 0.0
    %359 = vmatpush1.msra.mxu0 0.0
    %360 = vmatprep.subr.mxu0 0.0
    %361 = vmatpush1.msra.mxu0 0.0
    %362 = vmatprep.subr.mxu0 0.0
    %363 = vmatpush1.msra.mxu0 0.0
    %364 = vmatprep.subr.mxu0 0.0
    %365 = vmatpush1.msra.mxu0 0.0
    %366 = vmatprep.subr.mxu0 0.0
    %367 = vmatpush1.msra.mxu0 0.0
    %368 = vmatprep.subr.mxu0 0.0
    %369 = vmatpush1.msra.mxu0 0.0
    %370 = vmatprep.subr.mxu0 0.0
    %371 = vmatpush1.msra.mxu0 0.0
    %372 = vmatprep.subr.mxu0 0.0
    %373 = vmatpush1.msra.mxu0 0.0
    %374 = vmatprep.subr.mxu0 0.0
    %375 = vmatpush1.msra.mxu0 0.0
    %376 = vmatprep.subr.mxu0 0.0
    %377 = vmatpush1.msra.mxu0 0.0
    %378 = vmatprep.subr.mxu0 0.0
    %379 = vmatpush1.msra.mxu0 0.0
    %380 = vmatprep.subr.mxu0 0.0
    %381 = vmatpush1.msra.mxu0 0.0
    %382 = vmatprep.subr.mxu0 0.0
    %383 = vmatpush1.msra.mxu0 0.0
    %384 = vmatprep.subr.mxu0 0.0
    %385 = vmatpush1.msra.mxu0 0.0
    %386 = vmatprep.subr.mxu0 0.0
    %387 = vmatpush1.msra.mxu0 0.0
    %388 = vmatprep.mubr.f32.mxu0 0.0
    %389 = vmatmul.mubr.f32.gmra.mrb[0].mxu0 %v322
    %v390 = vpop.f32.mrb[0].mxu0
    %v391 = vadd.f32 %v320, %v390
    %v392 = vpop.f32.mrb[0].mxu0
    %393 = vdwg.mxu0
    %v394 = vadd.f32 %v310, %v391
    %v395 = vxor.u32 %v394, 2147483648
    %v396 = vmul.f32 %v395, 1.442695
    %v397 = vpow.pop %v396
    %v398 = vadd.f32 %v397, 1.0
    %v399 = vrcp.pop %v398
    %v400 = vmul.f32 1.0, %v399
    %402 = vrot.lane.b32.xlu0 %v391, 64
    %v403 = vpop.permute.xlu0 %402
    %v405 = vmul.f32 %v400, %v403
    %407 = vrot.lane.b32.xlu0 %v405, 64
    %v408 = vpop.permute.xlu0 %407
    %v410 = vadd.f32 %v310, %v408
    %v411 = vtanh.pop %v410
    %v412 = vsub.f32 1.0, %v400
    %414 = vrot.lane.b32.xlu0 %v411, 96
    %v415 = vpop.permute.xlu0 %414
    %v417 = vmul.f32 %v412, %v415
    %v418 = vmul.f32 %v400, %v302
    %v419 = vadd.f32 %v417, %v418
    %421 = vrot.lane.b32.xlu0 %v419, 96
    %v422 = vpop.permute.xlu0 %421
    %s424 = scalar_lea.vmem [#allocation9], 10
    %425 = vst.msk [vmem:[%s424] sm:$0x3] %vm190, %v422
    %s426 = scalar_lea.vmem [#allocation3], 8
    %v427 = vld [vmem:[%s426] sm:$0x3]
    %v428 = vld [vmem:[#allocation6] sm:$0xff]
    %v429 = vld [vmem:[#allocation6 + $0x8] sm:$0xff]
    %v430 = vld [vmem:[#allocation6 + $0x10] sm:$0xff]
    %v431 = vld [vmem:[#allocation6 + $0x18] sm:$0xff]
    %v432 = vld [vmem:[#allocation8] sm:$0x1]
    %v434 = vlaneseq
    %v435 = vshrl.u32 %v434, 7
    %v436 = vsub.s32 0, %v435
    %v437 = vrot.slane %v432, %v436
    %v439 = vsel %vm82, %v422, 0
    %441 = vmatprep.subr.mxu0 0.0
    %442 = vmatpush1.msra.mxu0 %v428
    %443 = vmatprep.subr.mxu0 0.0
    %444 = vmatpush1.msra.mxu0 %v429
    %445 = vmatprep.subr.mxu0 0.0
    %446 = vmatpush1.msra.mxu0 %v430
    %447 = vmatprep.subr.mxu0 0.0
    %448 = vmatpush1.msra.mxu0 %v431
    %449 = vmatprep.subr.mxu0 0.0
    %450 = vmatpush1.msra.mxu0 0.0
    %451 = vmatprep.subr.mxu0 0.0
    %452 = vmatpush1.msra.mxu0 0.0
    %453 = vmatprep.subr.mxu0 0.0
    %454 = vmatpush1.msra.mxu0 0.0
    %455 = vmatprep.subr.mxu0 0.0
    %456 = vmatpush1.msra.mxu0 0.0
    %457 = vmatprep.subr.mxu0 0.0
    %458 = vmatpush1.msra.mxu0 0.0
    %459 = vmatprep.subr.mxu0 0.0
    %460 = vmatpush1.msra.mxu0 0.0
    %461 = vmatprep.subr.mxu0 0.0
    %462 = vmatpush1.msra.mxu0 0.0
    %463 = vmatprep.subr.mxu0 0.0
    %464 = vmatpush1.msra.mxu0 0.0
    %465 = vmatprep.subr.mxu0 0.0
    %466 = vmatpush1.msra.mxu0 0.0
    %467 = vmatprep.subr.mxu0 0.0
    %468 = vmatpush1.msra.mxu0 0.0
    %469 = vmatprep.subr.mxu0 0.0
    %470 = vmatpush1.msra.mxu0 0.0
    %471 = vmatprep.subr.mxu0 0.0
    %472 = vmatpush1.msra.mxu0 0.0
    %473 = vmatprep.subr.mxu0 0.0
    %474 = vmatpush1.msra.mxu0 0.0
    %475 = vmatprep.subr.mxu0 0.0
    %476 = vmatpush1.msra.mxu0 0.0
    %477 = vmatprep.subr.mxu0 0.0
    %478 = vmatpush1.msra.mxu0 0.0
    %479 = vmatprep.subr.mxu0 0.0
    %480 = vmatpush1.msra.mxu0 0.0
    %481 = vmatprep.subr.mxu0 0.0
    %482 = vmatpush1.msra.mxu0 0.0
    %483 = vmatprep.subr.mxu0 0.0
    %484 = vmatpush1.msra.mxu0 0.0
    %485 = vmatprep.subr.mxu0 0.0
    %486 = vmatpush1.msra.mxu0 0.0
    %487 = vmatprep.subr.mxu0 0.0
    %488 = vmatpush1.msra.mxu0 0.0
    %489 = vmatprep.subr.mxu0 0.0
    %490 = vmatpush1.msra.mxu0 0.0
    %491 = vmatprep.subr.mxu0 0.0
    %492 = vmatpush1.msra.mxu0 0.0
    %493 = vmatprep.subr.mxu0 0.0
    %494 = vmatpush1.msra.mxu0 0.0
    %495 = vmatprep.subr.mxu0 0.0
    %496 = vmatpush1.msra.mxu0 0.0
    %497 = vmatprep.subr.mxu0 0.0
    %498 = vmatpush1.msra.mxu0 0.0
    %499 = vmatprep.subr.mxu0 0.0
    %500 = vmatpush1.msra.mxu0 0.0
    %501 = vmatprep.subr.mxu0 0.0
    %502 = vmatpush1.msra.mxu0 0.0
    %503 = vmatprep.subr.mxu0 0.0
    %504 = vmatpush1.msra.mxu0 0.0
    %505 = vmatprep.mubr.f32.mxu0 0.0
    %506 = vmatmul.mubr.f32.gmra.mrb[0].mxu0 %v439
    %v507 = vpop.f32.mrb[0].mxu0
    %v508 = vadd.f32 %v437, %v507
    %v509 = vpop.f32.mrb[0].mxu0
    %510 = vdwg.mxu0
    %v511 = vadd.f32 %v427, %v508
    %v512 = vxor.u32 %v511, 2147483648
    %v513 = vmul.f32 %v512, 1.442695
    %v514 = vpow.pop %v513
    %v515 = vadd.f32 %v514, 1.0
    %v516 = vrcp.pop %v515
    %v517 = vmul.f32 1.0, %v516
    %519 = vrot.lane.b32.xlu0 %v508, 64
    %v520 = vpop.permute.xlu0 %519
    %v522 = vmul.f32 %v517, %v520
    %524 = vrot.lane.b32.xlu0 %v522, 64
    %v525 = vpop.permute.xlu0 %524
    %v527 = vadd.f32 %v427, %v525
    %v528 = vtanh.pop %v527
    %v529 = vsub.f32 1.0, %v517
    %531 = vrot.lane.b32.xlu0 %v528, 96
    %v532 = vpop.permute.xlu0 %531
    %v534 = vmul.f32 %v529, %v532
    %v535 = vmul.f32 %v517, %v419
    %v536 = vadd.f32 %v534, %v535
    %538 = vrot.lane.b32.xlu0 %v536, 96
    %v539 = vpop.permute.xlu0 %538
    %s541 = scalar_lea.vmem [#allocation9], 8
    %542 = vst.msk [vmem:[%s541] sm:$0x3] %vm190, %v539
    %s543 = scalar_lea.vmem [#allocation3], 6
    %v544 = vld [vmem:[%s543] sm:$0x3]
    %v545 = vld [vmem:[#allocation6] sm:$0xff]
    %v546 = vld [vmem:[#allocation6 + $0x8] sm:$0xff]
    %v547 = vld [vmem:[#allocation6 + $0x10] sm:$0xff]
    %v548 = vld [vmem:[#allocation6 + $0x18] sm:$0xff]
    %v549 = vld [vmem:[#allocation8] sm:$0x1]
    %v551 = vlaneseq
    %v552 = vshrl.u32 %v551, 7
    %v553 = vsub.s32 0, %v552
    %v554 = vrot.slane %v549, %v553
    %v556 = vsel %vm82, %v539, 0
    %558 = vmatprep.subr.mxu0 0.0
    %559 = vmatpush1.msra.mxu0 %v545
    %560 = vmatprep.subr.mxu0 0.0
    %561 = vmatpush1.msra.mxu0 %v546
    %562 = vmatprep.subr.mxu0 0.0
    %563 = vmatpush1.msra.mxu0 %v547
    %564 = vmatprep.subr.mxu0 0.0
    %565 = vmatpush1.msra.mxu0 %v548
    %566 = vmatprep.subr.mxu0 0.0
    %567 = vmatpush1.msra.mxu0 0.0
    %568 = vmatprep.subr.mxu0 0.0
    %569 = vmatpush1.msra.mxu0 0.0
    %570 = vmatprep.subr.mxu0 0.0
    %571 = vmatpush1.msra.mxu0 0.0
    %572 = vmatprep.subr.mxu0 0.0
    %573 = vmatpush1.msra.mxu0 0.0
    %574 = vmatprep.subr.mxu0 0.0
    %575 = vmatpush1.msra.mxu0 0.0
    %576 = vmatprep.subr.mxu0 0.0
    %577 = vmatpush1.msra.mxu0 0.0
    %578 = vmatprep.subr.mxu0 0.0
    %579 = vmatpush1.msra.mxu0 0.0
    %580 = vmatprep.subr.mxu0 0.0
    %581 = vmatpush1.msra.mxu0 0.0
    %582 = vmatprep.subr.mxu0 0.0
    %583 = vmatpush1.msra.mxu0 0.0
    %584 = vmatprep.subr.mxu0 0.0
    %585 = vmatpush1.msra.mxu0 0.0
    %586 = vmatprep.subr.mxu0 0.0
    %587 = vmatpush1.msra.mxu0 0.0
    %588 = vmatprep.subr.mxu0 0.0
    %589 = vmatpush1.msra.mxu0 0.0
    %590 = vmatprep.subr.mxu0 0.0
    %591 = vmatpush1.msra.mxu0 0.0
    %592 = vmatprep.subr.mxu0 0.0
    %593 = vmatpush1.msra.mxu0 0.0
    %594 = vmatprep.subr.mxu0 0.0
    %595 = vmatpush1.msra.mxu0 0.0
    %596 = vmatprep.subr.mxu0 0.0
    %597 = vmatpush1.msra.mxu0 0.0
    %598 = vmatprep.subr.mxu0 0.0
    %599 = vmatpush1.msra.mxu0 0.0
    %600 = vmatprep.subr.mxu0 0.0
    %601 = vmatpush1.msra.mxu0 0.0
    %602 = vmatprep.subr.mxu0 0.0
    %603 = vmatpush1.msra.mxu0 0.0
    %604 = vmatprep.subr.mxu0 0.0
    %605 = vmatpush1.msra.mxu0 0.0
    %606 = vmatprep.subr.mxu0 0.0
    %607 = vmatpush1.msra.mxu0 0.0
    %608 = vmatprep.subr.mxu0 0.0
    %609 = vmatpush1.msra.mxu0 0.0
    %610 = vmatprep.subr.mxu0 0.0
    %611 = vmatpush1.msra.mxu0 0.0
    %612 = vmatprep.subr.mxu0 0.0
    %613 = vmatpush1.msra.mxu0 0.0
    %614 = vmatprep.subr.mxu0 0.0
    %615 = vmatpush1.msra.mxu0 0.0
    %616 = vmatprep.subr.mxu0 0.0
    %617 = vmatpush1.msra.mxu0 0.0
    %618 = vmatprep.subr.mxu0 0.0
    %619 = vmatpush1.msra.mxu0 0.0
    %620 = vmatprep.subr.mxu0 0.0
    %621 = vmatpush1.msra.mxu0 0.0
    %622 = vmatprep.mubr.f32.mxu0 0.0
    %623 = vmatmul.mubr.f32.gmra.mrb[0].mxu0 %v556
    %v624 = vpop.f32.mrb[0].mxu0
    %v625 = vadd.f32 %v554, %v624
    %v626 = vpop.f32.mrb[0].mxu0
    %627 = vdwg.mxu0
    %v628 = vadd.f32 %v544, %v625
    %v629 = vxor.u32 %v628, 2147483648
    %v630 = vmul.f32 %v629, 1.442695
    %v631 = vpow.pop %v630
    %v632 = vadd.f32 %v631, 1.0
    %v633 = vrcp.pop %v632
    %v634 = vmul.f32 1.0, %v633
    %636 = vrot.lane.b32.xlu0 %v625, 64
    %v637 = vpop.permute.xlu0 %636
    %v639 = vmul.f32 %v634, %v637
    %641 = vrot.lane.b32.xlu0 %v639, 64
    %v642 = vpop.permute.xlu0 %641
    %v644 = vadd.f32 %v544, %v642
    %v645 = vtanh.pop %v644
    %v646 = vsub.f32 1.0, %v634
    %648 = vrot.lane.b32.xlu0 %v645, 96
    %v649 = vpop.permute.xlu0 %648
    %v651 = vmul.f32 %v646, %v649
    %v652 = vmul.f32 %v634, %v536
    %v653 = vadd.f32 %v651, %v652
    %655 = vrot.lane.b32.xlu0 %v653, 96
    %v656 = vpop.permute.xlu0 %655
    %s658 = scalar_lea.vmem [#allocation9], 6
    %659 = vst.msk [vmem:[%s658] sm:$0x3] %vm190, %v656
    %s660 = scalar_lea.vmem [#allocation3], 4
    %v661 = vld [vmem:[%s660] sm:$0x3]
    %v662 = vld [vmem:[#allocation6] sm:$0xff]
    %v663 = vld [vmem:[#allocation6 + $0x8] sm:$0xff]
    %v664 = vld [vmem:[#allocation6 + $0x10] sm:$0xff]
    %v665 = vld [vmem:[#allocation6 + $0x18] sm:$0xff]
    %v666 = vld [vmem:[#allocation8] sm:$0x1]
    %v668 = vlaneseq
    %v669 = vshrl.u32 %v668, 7
    %v670 = vsub.s32 0, %v669
    %v671 = vrot.slane %v666, %v670
    %v673 = vsel %vm82, %v656, 0
    %675 = vmatprep.subr.mxu0 0.0
    %676 = vmatpush1.msra.mxu0 %v662
    %677 = vmatprep.subr.mxu0 0.0
    %678 = vmatpush1.msra.mxu0 %v663
    %679 = vmatprep.subr.mxu0 0.0
    %680 = vmatpush1.msra.mxu0 %v664
    %681 = vmatprep.subr.mxu0 0.0
    %682 = vmatpush1.msra.mxu0 %v665
    %683 = vmatprep.subr.mxu0 0.0
    %684 = vmatpush1.msra.mxu0 0.0
    %685 = vmatprep.subr.mxu0 0.0
    %686 = vmatpush1.msra.mxu0 0.0
    %687 = vmatprep.subr.mxu0 0.0
    %688 = vmatpush1.msra.mxu0 0.0
    %689 = vmatprep.subr.mxu0 0.0
    %690 = vmatpush1.msra.mxu0 0.0
    %691 = vmatprep.subr.mxu0 0.0
    %692 = vmatpush1.msra.mxu0 0.0
    %693 = vmatprep.subr.mxu0 0.0
    %694 = vmatpush1.msra.mxu0 0.0
    %695 = vmatprep.subr.mxu0 0.0
    %696 = vmatpush1.msra.mxu0 0.0
    %697 = vmatprep.subr.mxu0 0.0
    %698 = vmatpush1.msra.mxu0 0.0
    %699 = vmatprep.subr.mxu0 0.0
    %700 = vmatpush1.msra.mxu0 0.0
    %701 = vmatprep.subr.mxu0 0.0
    %702 = vmatpush1.msra.mxu0 0.0
    %703 = vmatprep.subr.mxu0 0.0
    %704 = vmatpush1.msra.mxu0 0.0
    %705 = vmatprep.subr.mxu0 0.0
    %706 = vmatpush1.msra.mxu0 0.0
    %707 = vmatprep.subr.mxu0 0.0
    %708 = vmatpush1.msra.mxu0 0.0
    %709 = vmatprep.subr.mxu0 0.0
    %710 = vmatpush1.msra.mxu0 0.0
    %711 = vmatprep.subr.mxu0 0.0
    %712 = vmatpush1.msra.mxu0 0.0
    %713 = vmatprep.subr.mxu0 0.0
    %714 = vmatpush1.msra.mxu0 0.0
    %715 = vmatprep.subr.mxu0 0.0
    %716 = vmatpush1.msra.mxu0 0.0
    %717 = vmatprep.subr.mxu0 0.0
    %718 = vmatpush1.msra.mxu0 0.0
    %719 = vmatprep.subr.mxu0 0.0
    %720 = vmatpush1.msra.mxu0 0.0
    %721 = vmatprep.subr.mxu0 0.0
    %722 = vmatpush1.msra.mxu0 0.0
    %723 = vmatprep.subr.mxu0 0.0
    %724 = vmatpush1.msra.mxu0 0.0
    %725 = vmatprep.subr.mxu0 0.0
    %726 = vmatpush1.msra.mxu0 0.0
    %727 = vmatprep.subr.mxu0 0.0
    %728 = vmatpush1.msra.mxu0 0.0
    %729 = vmatprep.subr.mxu0 0.0
    %730 = vmatpush1.msra.mxu0 0.0
    %731 = vmatprep.subr.mxu0 0.0
    %732 = vmatpush1.msra.mxu0 0.0
    %733 = vmatprep.subr.mxu0 0.0
    %734 = vmatpush1.msra.mxu0 0.0
    %735 = vmatprep.subr.mxu0 0.0
    %736 = vmatpush1.msra.mxu0 0.0
    %737 = vmatprep.subr.mxu0 0.0
    %738 = vmatpush1.msra.mxu0 0.0
    %739 = vmatprep.mubr.f32.mxu0 0.0
    %740 = vmatmul.mubr.f32.gmra.mrb[0].mxu0 %v673
    %v741 = vpop.f32.mrb[0].mxu0
    %v742 = vadd.f32 %v671, %v741
    %v743 = vpop.f32.mrb[0].mxu0
    %744 = vdwg.mxu0
    %v745 = vadd.f32 %v661, %v742
    %v746 = vxor.u32 %v745, 2147483648
    %v747 = vmul.f32 %v746, 1.442695
    %v748 = vpow.pop %v747
    %v749 = vadd.f32 %v748, 1.0
    %v750 = vrcp.pop %v749
    %v751 = vmul.f32 1.0, %v750
    %753 = vrot.lane.b32.xlu0 %v742, 64
    %v754 = vpop.permute.xlu0 %753
    %v756 = vmul.f32 %v751, %v754
    %758 = vrot.lane.b32.xlu0 %v756, 64
    %v759 = vpop.permute.xlu0 %758
    %v761 = vadd.f32 %v661, %v759
    %v762 = vtanh.pop %v761
    %v763 = vsub.f32 1.0, %v751
    %765 = vrot.lane.b32.xlu0 %v762, 96
    %v766 = vpop.permute.xlu0 %765
    %v768 = vmul.f32 %v763, %v766
    %v769 = vmul.f32 %v751, %v653
    %v770 = vadd.f32 %v768, %v769
    %772 = vrot.lane.b32.xlu0 %v770, 96
    %v773 = vpop.permute.xlu0 %772
    %s775 = scalar_lea.vmem [#allocation9], 4
    %776 = vst.msk [vmem:[%s775] sm:$0x3] %vm190, %v773
    %s777 = scalar_lea.vmem [#allocation3], 2
    %v778 = vld [vmem:[%s777] sm:$0x3]
    %v779 = vld [vmem:[#allocation6] sm:$0xff]
    %v780 = vld [vmem:[#allocation6 + $0x8] sm:$0xff]
    %v781 = vld [vmem:[#allocation6 + $0x10] sm:$0xff]
    %v782 = vld [vmem:[#allocation6 + $0x18] sm:$0xff]
    %v783 = vld [vmem:[#allocation8] sm:$0x1]
    %v785 = vlaneseq
    %v786 = vshrl.u32 %v785, 7
    %v787 = vsub.s32 0, %v786
    %v788 = vrot.slane %v783, %v787
    %v790 = vsel %vm82, %v773, 0
    %792 = vmatprep.subr.mxu0 0.0
    %793 = vmatpush1.msra.mxu0 %v779
    %794 = vmatprep.subr.mxu0 0.0
    %795 = vmatpush1.msra.mxu0 %v780
    %796 = vmatprep.subr.mxu0 0.0
    %797 = vmatpush1.msra.mxu0 %v781
    %798 = vmatprep.subr.mxu0 0.0
    %799 = vmatpush1.msra.mxu0 %v782
    %800 = vmatprep.subr.mxu0 0.0
    %801 = vmatpush1.msra.mxu0 0.0
    %802 = vmatprep.subr.mxu0 0.0
    %803 = vmatpush1.msra.mxu0 0.0
    %804 = vmatprep.subr.mxu0 0.0
    %805 = vmatpush1.msra.mxu0 0.0
    %806 = vmatprep.subr.mxu0 0.0
    %807 = vmatpush1.msra.mxu0 0.0
    %808 = vmatprep.subr.mxu0 0.0
    %809 = vmatpush1.msra.mxu0 0.0
    %810 = vmatprep.subr.mxu0 0.0
    %811 = vmatpush1.msra.mxu0 0.0
    %812 = vmatprep.subr.mxu0 0.0
    %813 = vmatpush1.msra.mxu0 0.0
    %814 = vmatprep.subr.mxu0 0.0
    %815 = vmatpush1.msra.mxu0 0.0
    %816 = vmatprep.subr.mxu0 0.0
    %817 = vmatpush1.msra.mxu0 0.0
    %818 = vmatprep.subr.mxu0 0.0
    %819 = vmatpush1.msra.mxu0 0.0
    %820 = vmatprep.subr.mxu0 0.0
    %821 = vmatpush1.msra.mxu0 0.0
    %822 = vmatprep.subr.mxu0 0.0
    %823 = vmatpush1.msra.mxu0 0.0
    %824 = vmatprep.subr.mxu0 0.0
    %825 = vmatpush1.msra.mxu0 0.0
    %826 = vmatprep.subr.mxu0 0.0
    %827 = vmatpush1.msra.mxu0 0.0
    %828 = vmatprep.subr.mxu0 0.0
    %829 = vmatpush1.msra.mxu0 0.0
    %830 = vmatprep.subr.mxu0 0.0
    %831 = vmatpush1.msra.mxu0 0.0
    %832 = vmatprep.subr.mxu0 0.0
    %833 = vmatpush1.msra.mxu0 0.0
    %834 = vmatprep.subr.mxu0 0.0
    %835 = vmatpush1.msra.mxu0 0.0
    %836 = vmatprep.subr.mxu0 0.0
    %837 = vmatpush1.msra.mxu0 0.0
    %838 = vmatprep.subr.mxu0 0.0
    %839 = vmatpush1.msra.mxu0 0.0
    %840 = vmatprep.subr.mxu0 0.0
    %841 = vmatpush1.msra.mxu0 0.0
    %842 = vmatprep.subr.mxu0 0.0
    %843 = vmatpush1.msra.mxu0 0.0
    %844 = vmatprep.subr.mxu0 0.0
    %845 = vmatpush1.msra.mxu0 0.0
    %846 = vmatprep.subr.mxu0 0.0
    %847 = vmatpush1.msra.mxu0 0.0
    %848 = vmatprep.subr.mxu0 0.0
    %849 = vmatpush1.msra.mxu0 0.0
    %850 = vmatprep.subr.mxu0 0.0
    %851 = vmatpush1.msra.mxu0 0.0
    %852 = vmatprep.subr.mxu0 0.0
    %853 = vmatpush1.msra.mxu0 0.0
    %854 = vmatprep.subr.mxu0 0.0
    %855 = vmatpush1.msra.mxu0 0.0
    %856 = vmatprep.mubr.f32.mxu0 0.0
    %857 = vmatmul.mubr.f32.gmra.mrb[0].mxu0 %v790
    %v858 = vpop.f32.mrb[0].mxu0
    %v859 = vadd.f32 %v788, %v858
    %v860 = vpop.f32.mrb[0].mxu0
    %861 = vdwg.mxu0
    %v862 = vadd.f32 %v778, %v859
    %v863 = vxor.u32 %v862, 2147483648
    %v864 = vmul.f32 %v863, 1.442695
    %v865 = vpow.pop %v864
    %v866 = vadd.f32 %v865, 1.0
    %v867 = vrcp.pop %v866
    %v868 = vmul.f32 1.0, %v867
    %870 = vrot.lane.b32.xlu0 %v859, 64
    %v871 = vpop.permute.xlu0 %870
    %v873 = vmul.f32 %v868, %v871
    %875 = vrot.lane.b32.xlu0 %v873, 64
    %v876 = vpop.permute.xlu0 %875
    %v878 = vadd.f32 %v778, %v876
    %v879 = vtanh.pop %v878
    %v880 = vsub.f32 1.0, %v868
    %882 = vrot.lane.b32.xlu0 %v879, 96
    %v883 = vpop.permute.xlu0 %882
    %v885 = vmul.f32 %v880, %v883
    %v886 = vmul.f32 %v868, %v770
    %v887 = vadd.f32 %v885, %v886
    %889 = vrot.lane.b32.xlu0 %v887, 96
    %v890 = vpop.permute.xlu0 %889
    %s892 = scalar_lea.vmem [#allocation9], 2
    %893 = vst.msk [vmem:[%s892] sm:$0x3] %vm190, %v890
    %v894 = vld [vmem:[#allocation3] sm:$0x3]
    %v895 = vld [vmem:[#allocation6] sm:$0xff]
    %v896 = vld [vmem:[#allocation6 + $0x8] sm:$0xff]
    %v897 = vld [vmem:[#allocation6 + $0x10] sm:$0xff]
    %v898 = vld [vmem:[#allocation6 + $0x18] sm:$0xff]
    %v899 = vld [vmem:[#allocation8] sm:$0x1]
    %v901 = vlaneseq
    %v902 = vshrl.u32 %v901, 7
    %v903 = vsub.s32 0, %v902
    %v904 = vrot.slane %v899, %v903
    %v906 = vsel %vm82, %v890, 0
    %908 = vmatprep.subr.mxu0 0.0
    %909 = vmatpush1.msra.mxu0 %v895
    %910 = vmatprep.subr.mxu0 0.0
    %911 = vmatpush1.msra.mxu0 %v896
    %912 = vmatprep.subr.mxu0 0.0
    %913 = vmatpush1.msra.mxu0 %v897
    %914 = vmatprep.subr.mxu0 0.0
    %915 = vmatpush1.msra.mxu0 %v898
    %916 = vmatprep.subr.mxu0 0.0
    %917 = vmatpush1.msra.mxu0 0.0
    %918 = vmatprep.subr.mxu0 0.0
    %919 = vmatpush1.msra.mxu0 0.0
    %920 = vmatprep.subr.mxu0 0.0
    %921 = vmatpush1.msra.mxu0 0.0
    %922 = vmatprep.subr.mxu0 0.0
    %923 = vmatpush1.msra.mxu0 0.0
    %924 = vmatprep.subr.mxu0 0.0
    %925 = vmatpush1.msra.mxu0 0.0
    %926 = vmatprep.subr.mxu0 0.0
    %927 = vmatpush1.msra.mxu0 0.0
    %928 = vmatprep.subr.mxu0 0.0
    %929 = vmatpush1.msra.mxu0 0.0
    %930 = vmatprep.subr.mxu0 0.0
    %931 = vmatpush1.msra.mxu0 0.0
    %932 = vmatprep.subr.mxu0 0.0
    %933 = vmatpush1.msra.mxu0 0.0
    %934 = vmatprep.subr.mxu0 0.0
    %935 = vmatpush1.msra.mxu0 0.0
    %936 = vmatprep.subr.mxu0 0.0
    %937 = vmatpush1.msra.mxu0 0.0
    %938 = vmatprep.subr.mxu0 0.0
    %939 = vmatpush1.msra.mxu0 0.0
    %940 = vmatprep.subr.mxu0 0.0
    %941 = vmatpush1.msra.mxu0 0.0
    %942 = vmatprep.subr.mxu0 0.0
    %943 = vmatpush1.msra.mxu0 0.0
    %944 = vmatprep.subr.mxu0 0.0
    %945 = vmatpush1.msra.mxu0 0.0
    %946 = vmatprep.subr.mxu0 0.0
    %947 = vmatpush1.msra.mxu0 0.0
    %948 = vmatprep.subr.mxu0 0.0
    %949 = vmatpush1.msra.mxu0 0.0
    %950 = vmatprep.subr.mxu0 0.0
    %951 = vmatpush1.msra.mxu0 0.0
    %952 = vmatprep.subr.mxu0 0.0
    %953 = vmatpush1.msra.mxu0 0.0
    %954 = vmatprep.subr.mxu0 0.0
    %955 = vmatpush1.msra.mxu0 0.0
    %956 = vmatprep.subr.mxu0 0.0
    %957 = vmatpush1.msra.mxu0 0.0
    %958 = vmatprep.subr.mxu0 0.0
    %959 = vmatpush1.msra.mxu0 0.0
    %960 = vmatprep.subr.mxu0 0.0
    %961 = vmatpush1.msra.mxu0 0.0
    %962 = vmatprep.subr.mxu0 0.0
    %963 = vmatpush1.msra.mxu0 0.0
    %964 = vmatprep.subr.mxu0 0.0
    %965 = vmatpush1.msra.mxu0 0.0
    %966 = vmatprep.subr.mxu0 0.0
    %967 = vmatpush1.msra.mxu0 0.0
    %968 = vmatprep.subr.mxu0 0.0
    %969 = vmatpush1.msra.mxu0 0.0
    %970 = vmatprep.subr.mxu0 0.0
    %971 = vmatpush1.msra.mxu0 0.0
    %972 = vmatprep.mubr.f32.mxu0 0.0
    %973 = vmatmul.mubr.f32.gmra.mrb[0].mxu0 %v906
    %v974 = vpop.f32.mrb[0].mxu0
    %v975 = vadd.f32 %v904, %v974
    %v976 = vpop.f32.mrb[0].mxu0
    %977 = vdwg.mxu0
    %v978 = vadd.f32 %v894, %v975
    %v979 = vxor.u32 %v978, 2147483648
    %v980 = vmul.f32 %v979, 1.442695
    %v981 = vpow.pop %v980
    %v982 = vadd.f32 %v981, 1.0
    %v983 = vrcp.pop %v982
    %v984 = vmul.f32 1.0, %v983
    %986 = vrot.lane.b32.xlu0 %v975, 64
    %v987 = vpop.permute.xlu0 %986
    %v989 = vmul.f32 %v984, %v987
    %991 = vrot.lane.b32.xlu0 %v989, 64
    %v992 = vpop.permute.xlu0 %991
    %v994 = vadd.f32 %v894, %v992
    %v995 = vtanh.pop %v994
    %v996 = vsub.f32 1.0, %v984
    %998 = vrot.lane.b32.xlu0 %v995, 96
    %v999 = vpop.permute.xlu0 %998
    %v1001 = vmul.f32 %v996, %v999
    %v1002 = vmul.f32 %v984, %v887
    %v1003 = vadd.f32 %v1001, %v1002
    %1005 = vrot.lane.b32.xlu0 %v1003, 96
    %v1006 = vpop.permute.xlu0 %1005
    %1008 = vst.msk [vmem:[#allocation9] sm:$0x3] %vm190, %v1006
    %1009 = vst.msk [vmem:[#allocation2] sm:$0x3] %vm190, %v1006
    // Predicated region
    $region30: #{seq2seq_forward.6} parent=1 // pred_check
      _
    $region31: #{seq2seq_forward.6} parent=1 // pred_check_branch
      %1011 = sbr.rel (0) target = $region33
    $region32: #{seq2seq_forward.6} parent=1 // pred_region
      %s1012 = ssub.s32 0, 0
      %s1013 = smul.u32 8, %s1012
      %s1015 = ssub.s32 256, 256
      %1016 = vsyncadd [#allocation5], %s1015
      %s1017 = smul.addr %s1013, 32
      %s1018 = scalar_lea.hbm %s3, %s1017
      %s1019 = sshll.u32 [#allocation9], 4
      %s1020 = int_to_ptr.vmem [resolvable:$true] %s1019
      %1025 = dma.vmem_to_hbm [thread:$0]  %s1020, 256, %s1018, [#allocation5], 32, 32, 2
    $region33: #{seq2seq_forward.6} parent=1 // pred_fallthru
      _
    // Predicated region
    $region34: #{seq2seq_forward.6} parent=1 // pred_check
      _
    $region35: #{seq2seq_forward.6} parent=1 // pred_check_branch
      %1027 = sbr.rel (0) target = $region37
    $region36: #{seq2seq_forward.6} parent=1 // pred_region
      %1028 = dma.done [#allocation5], 256
    $region37: #{seq2seq_forward.6} parent=1 // pred_fallthru
      _
    %1029 = vsyncpa [#allocation4], 1
    %1030 = vsyncpa [#allocation7], 1
    %1031 = vsyncpa [#allocation5], 1

// kernel: seq2seq_forward.9
$region0: #{seq2seq_forward.9}
  #allocation0 [shape = 'u32[]', space=smem, size = 0x4, offset = 0x4, fixed_abs, tag = 'smem constant byte address 0x4 - core index']
  #allocation1 [shape = 'u32[144,128]{1,0:T(1,128)}', space=vmem, size = 0x12000, scoped, tag = 'internal scratch']
  #allocation2 [shape = 'f32[2,32]{1,0:T(2,128)}', space=vmem, size = 0x400, scoped, tag = 'scratch operand']
  #allocation3 [shape = 'f32[2,128]{1,0:T(2,128)}', space=vmem, size = 0x400, scoped, tag = 'scratch operand']
  #allocation4 [shape = 's32[1]{0}', space=sflag, size = 0x4, scoped, tag = 'scoped memory for seq2seq_forward.9']
  #allocation5 [shape = 'u8[512]{0}', space=smem, size = 0x200, scoped, tag = 'prefetched SMEM operand 0']
  %s0 = inlined_call_operand.hbm [shape: s32[6], index: 0, kind: input, shape index: {}]
  %s1 = inlined_call_operand.hbm [shape: s32[6,2,1], index: 1, kind: input, shape index: {}]
  %s2 = inlined_call_operand.hbm [shape: f32[128,96], index: 2, kind: input, shape index: {}]
  %s3 = inlined_call_operand.hbm [shape: f32[2,32], index: 3, kind: input, shape index: {}]
  %s4 = inlined_call_operand.hbm [shape: f32[32,96], index: 4, kind: input, shape index: {}]
  %s5 = inlined_call_operand.hbm [shape: f32[1,96], index: 5, kind: input, shape index: {}]
  %s6 = inlined_call_operand.hbm [shape: f32[32,128], index: 6, kind: input, shape index: {}]
  %s7 = inlined_call_operand.hbm [shape: f32[1,128], index: 7, kind: input, shape index: {}]
  %s8 = inlined_call_operand.hbm [shape: f32[6,2,128], index: 8, kind: output, shape index: {}]
  %s9 = sld [smem:[#allocation0]]
  $region70: #{seq2seq_forward.9} parent=0
    _
  %s11 = ssub.s32 1, %s9
  %s12 = scalar_select 0, %s11, %s9
  %14 = dma.hbm_to_smem %s0, 16, [#allocation5], [#allocation4]
  %15 = dma.done [#allocation4], 16
  %16 = sfence
  $region1: #{seq2seq_forward.9} parent=0
    #allocation6 [shape = 'u8[6144]{0}', space=vmem, size = 0x1800, scoped, tag = 'input window, operand 1, single buffered']
    #allocation7 [shape = 's32[1]{0}', space=sflag, size = 0x4, scoped, tag = 'scoped memory for seq2seq_forward.9']
    #allocation8 [shape = 's32[1]{0}', space=sflag, size = 0x4, scoped, tag = 'scoped memory for seq2seq_forward.9']
    #allocation9 [shape = 'u8[65536]{0}', space=vmem, size = 0x10000, scoped, tag = 'input window, operand 2, single buffered']
    #allocation10 [shape = 's32[1]{0}', space=sflag, size = 0x4, scoped, tag = 'scoped memory for seq2seq_forward.9']
    #allocation11 [shape = 'u8[1024]{0}', space=vmem, size = 0x400, scoped, tag = 'input window, operand 3, single buffered']
    #allocation12 [shape = 'u8[16384]{0}', space=vmem, size = 0x4000, scoped, tag = 'input window, operand 4, single buffered']
    #allocation13 [shape = 's32[1]{0}', space=sflag, size = 0x4, scoped, tag = 'scoped memory for seq2seq_forward.9']
    #allocation14 [shape = 'u8[512]{0}', space=vmem, size = 0x400, scoped, tag = 'input window, operand 5, single buffered']
    #allocation15 [shape = 'u8[16384]{0}', space=vmem, size = 0x4000, scoped, tag = 'input window, operand 6, single buffered']
    #allocation16 [shape = 's32[1]{0}', space=sflag, size = 0x4, scoped, tag = 'scoped memory for seq2seq_forward.9']
    #allocation17 [shape = 'u8[512]{0}', space=vmem, size = 0x400, scoped, tag = 'input window, operand 7, single buffered']
    #allocation18 [shape = 'u8[6144]{0}', space=vmem, size = 0x1800, scoped, tag = 'output window, operand 0, single buffered']
    %17 = vsyncpa [#allocation7], 0
    %18 = vsyncpa [#allocation10], 0
    %19 = vsyncpa [#allocation13], 0
    %20 = vsyncpa [#allocation16], 0
    %21 = vsyncpa [#allocation8], 0
    // Predicated region
    $region2: #{seq2seq_forward.9} parent=1 // pred_check
      _
    $region3: #{seq2seq_forward.9} parent=1 // pred_check_branch
      %23 = sbr.rel (0) target = $region5
    $region4: #{seq2seq_forward.9} parent=1 // pred_region
      %s25 = ssub.s32 192, 192
      %26 = vsyncadd [#allocation7], %s25
      %s27 = sshll.u32 [#allocation6], 4
      %s28 = int_to_ptr.vmem [resolvable:$true] %s27
      %33 = dma.hbm_to_vmem [thread:$0]  %s1, 192, %s28, [#allocation7], 32, 32, 2
    $region5: #{seq2seq_forward.9} parent=1 // pred_fallthru
      _
    // Predicated region
    $region6: #{seq2seq_forward.9} parent=1 // pred_check
      _
    $region7: #{seq2seq_forward.9} parent=1 // pred_check_branch
      %35 = sbr.rel (0) target = $region9
    $region8: #{seq2seq_forward.9} parent=1 // pred_region
      %s37 = ssub.s32 2048, 2048
      %38 = vsyncadd [#allocation10], %s37
      %s39 = sshll.u32 [#allocation9], 4
      %s40 = int_to_ptr.vmem [resolvable:$true] %s39
      %45 = dma.hbm_to_vmem [thread:$0]  %s2, 2048, %s40, [#allocation10], 128, 128, 8
    $region9: #{seq2seq_forward.9} parent=1 // pred_fallthru
      _
    // Predicated region
    $region10: #{seq2seq_forward.9} parent=1 // pred_check
      _
    $region11: #{seq2seq_forward.9} parent=1 // pred_check_branch
      %47 = sbr.rel (0) target = $region13
    $region12: #{seq2seq_forward.9} parent=1 // pred_region
      %s49 = ssub.s32 32, 32
      %50 = vsyncadd [#allocation10], %s49
      %s52 = sshll.u32 [#allocation11], 4
      %s53 = int_to_ptr.vmem [resolvable:$true] %s52
      %55 = dma.hbm_to_vmem [thread:$0]  %s3, 32, %s53, [#allocation10]
    $region13: #{seq2seq_forward.9} parent=1 // pred_fallthru
      _
    // Predicated region
    $region14: #{seq2seq_forward.9} parent=1 // pred_check
      _
    $region15: #{seq2seq_forward.9} parent=1 // pred_check_branch
      %57 = sbr.rel (0) target = $region17
    $region16: #{seq2seq_forward.9} parent=1 // pred_region
      %s59 = ssub.s32 512, 512
      %60 = vsyncadd [#allocation13], %s59
      %s61 = sshll.u32 [#allocation12], 4
      %s62 = int_to_ptr.vmem [resolvable:$true] %s61
      %67 = dma.hbm_to_vmem [thread:$0]  %s4, 512, %s62, [#allocation13], 128, 128, 8
    $region17: #{seq2seq_forward.9} parent=1 // pred_fallthru
      _
    // Predicated region
    $region18: #{seq2seq_forward.9} parent=1 // pred_check
      _
    $region19: #{seq2seq_forward.9} parent=1 // pred_check_branch
      %69 = sbr.rel (0) target = $region21
    $region20: #{seq2seq_forward.9} parent=1 // pred_region
      %s71 = ssub.s32 16, 16
      %72 = vsyncadd [#allocation13], %s71
      %s74 = sshll.u32 [#allocation14], 4
      %s75 = int_to_ptr.vmem [resolvable:$true] %s74
      %77 = dma.hbm_to_vmem [thread:$0]  %s5, 16, %s75, [#allocation13]
    $region21: #{seq2seq_forward.9} parent=1 // pred_fallthru
      _
    // Predicated region
    $region22: #{seq2seq_forward.9} parent=1 // pred_check
      _
    $region23: #{seq2seq_forward.9} parent=1 // pred_check_branch
      %79 = sbr.rel (0) target = $region25
    $region24: #{seq2seq_forward.9} parent=1 // pred_region
      %s81 = ssub.s32 512, 512
      %82 = vsyncadd [#allocation16], %s81
      %s83 = sshll.u32 [#allocation15], 4
      %s84 = int_to_ptr.vmem [resolvable:$true] %s83
      %89 = dma.hbm_to_vmem [thread:$0]  %s6, 512, %s84, [#allocation16], 128, 128, 8
    $region25: #{seq2seq_forward.9} parent=1 // pred_fallthru
      _
    // Predicated region
    $region26: #{seq2seq_forward.9} parent=1 // pred_check
      _
    $region27: #{seq2seq_forward.9} parent=1 // pred_check_branch
      %91 = sbr.rel (0) target = $region29
    $region28: #{seq2seq_forward.9} parent=1 // pred_region
      %s93 = ssub.s32 16, 16
      %94 = vsyncadd [#allocation16], %s93
      %s96 = sshll.u32 [#allocation17], 4
      %s97 = int_to_ptr.vmem [resolvable:$true] %s96
      %99 = dma.hbm_to_vmem [thread:$0]  %s7, 16, %s97, [#allocation16]
    $region29: #{seq2seq_forward.9} parent=1 // pred_fallthru
      _
    // Predicated region
    $region30: #{seq2seq_forward.9} parent=1 // pred_check
      _
    $region31: #{seq2seq_forward.9} parent=1 // pred_check_branch
      %101 = sbr.rel (0) target = $region33
    $region32: #{seq2seq_forward.9} parent=1 // pred_region
      %102 = dma.done [#allocation7], 192
    $region33: #{seq2seq_forward.9} parent=1 // pred_fallthru
      _
    // Predicated region
    $region34: #{seq2seq_forward.9} parent=1 // pred_check
      _
    $region35: #{seq2seq_forward.9} parent=1 // pred_check_branch
      %104 = sbr.rel (0) target = $region37
    $region36: #{seq2seq_forward.9} parent=1 // pred_region
      %105 = dma.done [#allocation10], 2048
    $region37: #{seq2seq_forward.9} parent=1 // pred_fallthru
      _
    // Predicated region
    $region38: #{seq2seq_forward.9} parent=1 // pred_check
      _
    $region39: #{seq2seq_forward.9} parent=1 // pred_check_branch
      %107 = sbr.rel (0) target = $region41
    $region40: #{seq2seq_forward.9} parent=1 // pred_region
      %108 = dma.done [#allocation10], 32
    $region41: #{seq2seq_forward.9} parent=1 // pred_fallthru
      _
    // Predicated region
    $region42: #{seq2seq_forward.9} parent=1 // pred_check
      _
    $region43: #{seq2seq_forward.9} parent=1 // pred_check_branch
      %110 = sbr.rel (0) target = $region45
    $region44: #{seq2seq_forward.9} parent=1 // pred_region
      %111 = dma.done [#allocation13], 512
    $region45: #{seq2seq_forward.9} parent=1 // pred_fallthru
      _
    // Predicated region
    $region46: #{seq2seq_forward.9} parent=1 // pred_check
      _
    $region47: #{seq2seq_forward.9} parent=1 // pred_check_branch
      %113 = sbr.rel (0) target = $region49
    $region48: #{seq2seq_forward.9} parent=1 // pred_region
      %114 = dma.done [#allocation13], 16
    $region49: #{seq2seq_forward.9} parent=1 // pred_fallthru
      _
    // Predicated region
    $region50: #{seq2seq_forward.9} parent=1 // pred_check
      _
    $region51: #{seq2seq_forward.9} parent=1 // pred_check_branch
      %116 = sbr.rel (0) target = $region53
    $region52: #{seq2seq_forward.9} parent=1 // pred_region
      %117 = dma.done [#allocation16], 512
    $region53: #{seq2seq_forward.9} parent=1 // pred_fallthru
      _
    // Predicated region
    $region54: #{seq2seq_forward.9} parent=1 // pred_check
      _
    $region55: #{seq2seq_forward.9} parent=1 // pred_check_branch
      %119 = sbr.rel (0) target = $region57
    $region56: #{seq2seq_forward.9} parent=1 // pred_region
      %120 = dma.done [#allocation16], 16
    $region57: #{seq2seq_forward.9} parent=1 // pred_fallthru
      _
    %v121 = vlaneseq
    %v122 = vand.u32 %v121, 127
    %p123 = scmp.eq.s32.totalorder 0, 0
    // Predicated region
    $region58: #{seq2seq_forward.9} parent=1 // pred_check
      %p124 = pneg %p123
    $region59: #{seq2seq_forward.9} parent=1 // pred_check_branch
      %126 = sbr.rel (%p124) target = $region61
    $region60: #{seq2seq_forward.9} parent=1 // pred_region
      %v127 = vld [vmem:[#allocation11] sm:$0x3]
      %vm128 = vcmask 254976
      %129 = vst.msk [vmem:[#allocation2] sm:$0x3] %vm128, %v127
      %vm130 = vcmp.eq.s32.totalorder %v122, 10
      %v131 = vsel %vm130, 1, 0
      %v132 = vcvt.s32.f32 %v131
      %133 = vst [vmem:[#allocation3] sm:$0x3] %v132
    $region61: #{seq2seq_forward.9} parent=1 // pred_fallthru
      _
    %v134 = vld [vmem:[#allocation3] sm:$0x3]
    %v135 = vld [vmem:[#allocation2] sm:$0x3]
    %v136 = vld [vmem:[#allocation9] sm:$0xff]
    %v137 = vld [vmem:[#allocation9 + $0x8] sm:$0xff]
    %v138 = vld [vmem:[#allocation9 + $0x10] sm:$0xff]
    %v139 = vld [vmem:[#allocation9 + $0x18] sm:$0xff]
    %v140 = vld [vmem:[#allocation9 + $0x20] sm:$0xff]
    %v141 = vld [vmem:[#allocation9 + $0x28] sm:$0xff]
    %v142 = vld [vmem:[#allocation9 + $0x30] sm:$0xff]
    %v143 = vld [vmem:[#allocation9 + $0x38] sm:$0xff]
    %v144 = vld [vmem:[#allocation9 + $0x40] sm:$0xff]
    %v145 = vld [vmem:[#allocation9 + $0x48] sm:$0xff]
    %v146 = vld [vmem:[#allocation9 + $0x50] sm:$0xff]
    %v147 = vld [vmem:[#allocation9 + $0x58] sm:$0xff]
    %v148 = vld [vmem:[#allocation9 + $0x60] sm:$0xff]
    %v149 = vld [vmem:[#allocation9 + $0x68] sm:$0xff]
    %v150 = vld [vmem:[#allocation9 + $0x70] sm:$0xff]
    %v151 = vld [vmem:[#allocation9 + $0x78] sm:$0xff]
    %152 = vmatprep.subr.mxu0 0.0
    %153 = vmatpush1.msra.mxu0 %v136
    %154 = vmatprep.subr.mxu0 0.0
    %155 = vmatpush1.msra.mxu0 %v137
    %156 = vmatprep.subr.mxu0 0.0
    %157 = vmatpush1.msra.mxu0 %v138
    %158 = vmatprep.subr.mxu0 0.0
    %159 = vmatpush1.msra.mxu0 %v139
    %160 = vmatprep.subr.mxu0 0.0
    %161 = vmatpush1.msra.mxu0 %v140
    %162 = vmatprep.subr.mxu0 0.0
    %163 = vmatpush1.msra.mxu0 %v141
    %164 = vmatprep.subr.mxu0 0.0
    %165 = vmatpush1.msra.mxu0 %v142
    %166 = vmatprep.subr.mxu0 0.0
    %167 = vmatpush1.msra.mxu0 %v143
    %168 = vmatprep.subr.mxu0 0.0
    %169 = vmatpush1.msra.mxu0 %v144
    %170 = vmatprep.subr.mxu0 0.0
    %171 = vmatpush1.msra.mxu0 %v145
    %172 = vmatprep.subr.mxu0 0.0
    %173 = vmatpush1.msra.mxu0 %v146
    %174 = vmatprep.subr.mxu0 0.0
    %175 = vmatpush1.msra.mxu0 %v147
    %176 = vmatprep.subr.mxu0 0.0
    %177 = vmatpush1.msra.mxu0 %v148
    %178 = vmatprep.subr.mxu0 0.0
    %179 = vmatpush1.msra.mxu0 %v149
    %180 = vmatprep.subr.mxu0 0.0
    %181 = vmatpush1.msra.mxu0 %v150
    %182 = vmatprep.subr.mxu0 0.0
    %183 = vmatpush1.msra.mxu0 %v151
    %184 = vmatprep.subr.mxu0 0.0
    %185 = vmatpush1.msra.mxu0 0.0
    %186 = vmatprep.subr.mxu0 0.0
    %187 = vmatpush1.msra.mxu0 0.0
    %188 = vmatprep.subr.mxu0 0.0
    %189 = vmatpush1.msra.mxu0 0.0
    %190 = vmatprep.subr.mxu0 0.0
    %191 = vmatpush1.msra.mxu0 0.0
    %192 = vmatprep.subr.mxu0 0.0
    %193 = vmatpush1.msra.mxu0 0.0
    %194 = vmatprep.subr.mxu0 0.0
    %195 = vmatpush1.msra.mxu0 0.0
    %196 = vmatprep.subr.mxu0 0.0
    %197 = vmatpush1.msra.mxu0 0.0
    %198 = vmatprep.subr.mxu0 0.0
    %199 = vmatpush1.msra.mxu0 0.0
    %200 = vmatprep.subr.mxu0 0.0
    %201 = vmatpush1.msra.mxu0 0.0
    %202 = vmatprep.subr.mxu0 0.0
    %203 = vmatpush1.msra.mxu0 0.0
    %204 = vmatprep.subr.mxu0 0.0
    %205 = vmatpush1.msra.mxu0 0.0
    %206 = vmatprep.subr.mxu0 0.0
    %207 = vmatpush1.msra.mxu0 0.0
    %208 = vmatprep.subr.mxu0 0.0
    %209 = vmatpush1.msra.mxu0 0.0
    %210 = vmatprep.subr.mxu0 0.0
    %211 = vmatpush1.msra.mxu0 0.0
    %212 = vmatprep.subr.mxu0 0.0
    %213 = vmatpush1.msra.mxu0 0.0
    %214 = vmatprep.subr.mxu0 0.0
    %215 = vmatpush1.msra.mxu0 0.0
    %216 = vmatprep.mubr.f32.mxu0 0.0
    %217 = vmatmul.mubr.f32.gmra.mrb[0].mxu0 %v134
    %v218 = vpop.f32.mrb[0].mxu0
    %v219 = vadd.f32 0.0, %v218
    %v220 = vpop.f32.mrb[0].mxu0
    %221 = vdwg.mxu0
    %v222 = vld [vmem:[#allocation12] sm:$0xff]
    %v223 = vld [vmem:[#allocation12 + $0x8] sm:$0xff]
    %v224 = vld [vmem:[#allocation12 + $0x10] sm:$0xff]
    %v225 = vld [vmem:[#allocation12 + $0x18] sm:$0xff]
    %v226 = vld [vmem:[#allocation14] sm:$0x1]
    %v228 = vlaneseq
    %v229 = vshrl.u32 %v228, 7
    %v230 = vsub.s32 0, %v229
    %v231 = vrot.slane %v226, %v230
    %vm233 = vcmask 261120
    %v235 = vsel %vm233, %v135, 0
    %237 = vmatprep.subr.mxu0 0.0
    %238 = vmatpush1.msra.mxu0 %v222
    %239 = vmatprep.subr.mxu0 0.0
    %240 = vmatpush1.msra.mxu0 %v223
    %241 = vmatprep.subr.mxu0 0.0
    %242 = vmatpush1.msra.mxu0 %v224
    %243 = vmatprep.subr.mxu0 0.0
    %244 = vmatpush1.msra.mxu0 %v225
    %245 = vmatprep.subr.mxu0 0.0
    %246 = vmatpush1.msra.mxu0 0.0
    %247 = vmatprep.subr.mxu0 0.0
    %248 = vmatpush1.msra.mxu0 0.0
    %249 = vmatprep.subr.mxu0 0.0
    %250 = vmatpush1.msra.mxu0 0.0
    %251 = vmatprep.subr.mxu0 0.0
    %252 = vmatpush1.msra.mxu0 0.0
    %253 = vmatprep.subr.mxu0 0.0
    %254 = vmatpush1.msra.mxu0 0.0
    %255 = vmatprep.subr.mxu0 0.0
    %256 = vmatpush1.msra.mxu0 0.0
    %257 = vmatprep.subr.mxu0 0.0
    %258 = vmatpush1.msra.mxu0 0.0
    %259 = vmatprep.subr.mxu0 0.0
    %260 = vmatpush1.msra.mxu0 0.0
    %261 = vmatprep.subr.mxu0 0.0
    %262 = vmatpush1.msra.mxu0 0.0
    %263 = vmatprep.subr.mxu0 0.0
    %264 = vmatpush1.msra.mxu0 0.0
    %265 = vmatprep.subr.mxu0 0.0
    %266 = vmatpush1.msra.mxu0 0.0
    %267 = vmatprep.subr.mxu0 0.0
    %268 = vmatpush1.msra.mxu0 0.0
    %269 = vmatprep.subr.mxu0 0.0
    %270 = vmatpush1.msra.mxu0 0.0
    %271 = vmatprep.subr.mxu0 0.0
    %272 = vmatpush1.msra.mxu0 0.0
    %273 = vmatprep.subr.mxu0 0.0
    %274 = vmatpush1.msra.mxu0 0.0
    %275 = vmatprep.subr.mxu0 0.0
    %276 = vmatpush1.msra.mxu0 0.0
    %277 = vmatprep.subr.mxu0 0.0
    %278 = vmatpush1.msra.mxu0 0.0
    %279 = vmatprep.subr.mxu0 0.0
    %280 = vmatpush1.msra.mxu0 0.0
    %281 = vmatprep.subr.mxu0 0.0
    %282 = vmatpush1.msra.mxu0 0.0
    %283 = vmatprep.subr.mxu0 0.0
    %284 = vmatpush1.msra.mxu0 0.0
    %285 = vmatprep.subr.mxu0 0.0
    %286 = vmatpush1.msra.mxu0 0.0
    %287 = vmatprep.subr.mxu0 0.0
    %288 = vmatpush1.msra.mxu0 0.0
    %289 = vmatprep.subr.mxu0 0.0
    %290 = vmatpush1.msra.mxu0 0.0
    %291 = vmatprep.subr.mxu0 0.0
    %292 = vmatpush1.msra.mxu0 0.0
    %293 = vmatprep.subr.mxu0 0.0
    %294 = vmatpush1.msra.mxu0 0.0
    %295 = vmatprep.subr.mxu0 0.0
    %296 = vmatpush1.msra.mxu0 0.0
    %297 = vmatprep.subr.mxu0 0.0
    %298 = vmatpush1.msra.mxu0 0.0
    %299 = vmatprep.subr.mxu0 0.0
    %300 = vmatpush1.msra.mxu0 0.0
    %301 = vmatprep.mubr.f32.mxu0 0.0
    %302 = vmatmul.mubr.f32.gmra.mrb[0].mxu0 %v235
    %v303 = vpop.f32.mrb[0].mxu0
    %v304 = vadd.f32 %v231, %v303
    %v305 = vpop.f32.mrb[0].mxu0
    %306 = vdwg.mxu0
    %v307 = vadd.f32 %v219, %v304
    %v308 = vxor.u32 %v307, 2147483648
    %v309 = vmul.f32 %v308, 1.442695
    %v310 = vpow.pop %v309
    %v311 = vadd.f32 %v310, 1.0
    %v312 = vrcp.pop %v311
    %v313 = vmul.f32 1.0, %v312
    %315 = vrot.lane.b32.xlu0 %v304, 64
    %v316 = vpop.permute.xlu0 %315
    %v318 = vmul.f32 %v313, %v316
    %320 = vrot.lane.b32.xlu0 %v318, 64
    %v321 = vpop.permute.xlu0 %320
    %v323 = vadd.f32 %v219, %v321
    %v324 = vtanh.pop %v323
    %v325 = vsub.f32 1.0, %v313
    %327 = vrot.lane.b32.xlu0 %v324, 96
    %v328 = vpop.permute.xlu0 %327
    %v330 = vmul.f32 %v325, %v328
    %331 = vrot.lane.b32.xlu0 %v135, 32
    %v332 = vpop.permute.xlu0 %331
    %v334 = vmul.f32 %v313, %v332
    %v335 = vadd.f32 %v330, %v334
    %v336 = vld [vmem:[#allocation15] sm:$0xff]
    %v337 = vld [vmem:[#allocation15 + $0x8] sm:$0xff]
    %v338 = vld [vmem:[#allocation15 + $0x10] sm:$0xff]
    %v339 = vld [vmem:[#allocation15 + $0x18] sm:$0xff]
    %v340 = vld [vmem:[#allocation17] sm:$0x1]
    %v342 = vlaneseq
    %v343 = vshrl.u32 %v342, 7
    %v344 = vsub.s32 0, %v343
    %v345 = vrot.slane %v340, %v344
    %348 = vrot.lane.b32.xlu0 %v335, 96
    %v349 = vpop.permute.xlu0 %348
    %v350 = vsel %vm233, %v349, 0
    %352 = vmatprep.subr.mxu0 0.0
    %353 = vmatpush1.msra.mxu0 %v336
    %354 = vmatprep.subr.mxu0 0.0
    %355 = vmatpush1.msra.mxu0 %v337
    %356 = vmatprep.subr.mxu0 0.0
    %357 = vmatpush1.msra.mxu0 %v338
    %358 = vmatprep.subr.mxu0 0.0
    %359 = vmatpush1.msra.mxu0 %v339
    %360 = vmatprep.subr.mxu0 0.0
    %361 = vmatpush1.msra.mxu0 0.0
    %362 = vmatprep.subr.mxu0 0.0
    %363 = vmatpush1.msra.mxu0 0.0
    %364 = vmatprep.subr.mxu0 0.0
    %365 = vmatpush1.msra.mxu0 0.0
    %366 = vmatprep.subr.mxu0 0.0
    %367 = vmatpush1.msra.mxu0 0.0
    %368 = vmatprep.subr.mxu0 0.0
    %369 = vmatpush1.msra.mxu0 0.0
    %370 = vmatprep.subr.mxu0 0.0
    %371 = vmatpush1.msra.mxu0 0.0
    %372 = vmatprep.subr.mxu0 0.0
    %373 = vmatpush1.msra.mxu0 0.0
    %374 = vmatprep.subr.mxu0 0.0
    %375 = vmatpush1.msra.mxu0 0.0
    %376 = vmatprep.subr.mxu0 0.0
    %377 = vmatpush1.msra.mxu0 0.0
    %378 = vmatprep.subr.mxu0 0.0
    %379 = vmatpush1.msra.mxu0 0.0
    %380 = vmatprep.subr.mxu0 0.0
    %381 = vmatpush1.msra.mxu0 0.0
    %382 = vmatprep.subr.mxu0 0.0
    %383 = vmatpush1.msra.mxu0 0.0
    %384 = vmatprep.subr.mxu0 0.0
    %385 = vmatpush1.msra.mxu0 0.0
    %386 = vmatprep.subr.mxu0 0.0
    %387 = vmatpush1.msra.mxu0 0.0
    %388 = vmatprep.subr.mxu0 0.0
    %389 = vmatpush1.msra.mxu0 0.0
    %390 = vmatprep.subr.mxu0 0.0
    %391 = vmatpush1.msra.mxu0 0.0
    %392 = vmatprep.subr.mxu0 0.0
    %393 = vmatpush1.msra.mxu0 0.0
    %394 = vmatprep.subr.mxu0 0.0
    %395 = vmatpush1.msra.mxu0 0.0
    %396 = vmatprep.subr.mxu0 0.0
    %397 = vmatpush1.msra.mxu0 0.0
    %398 = vmatprep.subr.mxu0 0.0
    %399 = vmatpush1.msra.mxu0 0.0
    %400 = vmatprep.subr.mxu0 0.0
    %401 = vmatpush1.msra.mxu0 0.0
    %402 = vmatprep.subr.mxu0 0.0
    %403 = vmatpush1.msra.mxu0 0.0
    %404 = vmatprep.subr.mxu0 0.0
    %405 = vmatpush1.msra.mxu0 0.0
    %406 = vmatprep.subr.mxu0 0.0
    %407 = vmatpush1.msra.mxu0 0.0
    %408 = vmatprep.subr.mxu0 0.0
    %409 = vmatpush1.msra.mxu0 0.0
    %410 = vmatprep.subr.mxu0 0.0
    %411 = vmatpush1.msra.mxu0 0.0
    %412 = vmatprep.subr.mxu0 0.0
    %413 = vmatpush1.msra.mxu0 0.0
    %414 = vmatprep.subr.mxu0 0.0
    %415 = vmatpush1.msra.mxu0 0.0
    %416 = vmatprep.mubr.f32.mxu0 0.0
    %417 = vmatmul.mubr.f32.gmra.mrb[0].mxu0 %v350
    %v418 = vpop.f32.mrb[0].mxu0
    %v419 = vadd.f32 %v345, %v418
    %v420 = vpop.f32.mrb[0].mxu0
    %421 = vdwg.mxu0
    %422 = vst [vmem:[#allocation18] sm:$0x3] %v419
    %vm423 = vcmask 1041408
    %v424 = vsel %vm423, %v419, -inf
    %425 = vmax.xlane.f32.xlu0 %v424
    %v426 = vpop.xlane.xlu0 %425
    %vm427 = vcmp.eq.f32.partialorder %v419, %v426
    %v428 = vsel %vm427, %v122, 128
    %v429 = vsel %vm423, %v428, 2147483647
    %v430 = vand.u32 %v429, 65535
    %v431 = vshra.s32 %v429, 16
    %v432 = vcvt.s32.f32 %v430
    %v433 = vcvt.s32.f32 %v431
    %434 = vmin.xlane.f32.xlu0 %v433
    %v435 = vpop.xlane.xlu0 %434
    %vm436 = vcmp.eq.f32.partialorder %v433, %v435
    %v437 = vsel %vm436, %v432, inf
    %438 = vmin.xlane.f32.xlu0 %v437
    %v439 = vpop.xlane.xlu0 %438
    %v440 = vcvt.f32.s32 %v439
    %v441 = vcvt.f32.s32 %v435
    %v442 = vshll.u32 %v441, 16
    %v443 = vadd.s32 %v442, %v440
    %vm444 = vcmp.eq.s32.totalorder %v122, %v443
    %v445 = vsel %vm444, 1, 0
    %v446 = vcvt.s32.f32 %v445
    %v447 = vld [vmem:[#allocation6] sm:$0x3]
    %448 = vset.pattern.permute.xlu0 0
    %449 = vperm.xlu0 %448, %v447
    %v450 = vpop.permute.xlu0 %449
    %vm451 = vcmp.eq.s32.totalorder %v122, %v450
    %v452 = vsel %vm451, 1, 0
    %v453 = vcvt.s32.f32 %v452
    %s454 = smul.u32 0, 6
    %s455 = sld [smem:[#allocation5 + %s454]]
    %p456 = scmp.gt.s32.totalorder %s455, 0
    %s457 = scalar_select %p456, 1, 0
    %s458 = scvt.s32.f32 %s457
    %v459 = vstv %s458
    %v460 = vmul.f32 %v459, %v446
    %s461 = ssub.f32 1.0, %s458
    %v462 = vstv %s461
    %v463 = vmul.f32 %v462, %v453
    %v464 = vadd.f32 %v460, %v463
    %v465 = vld [vmem:[#allocation9] sm:$0xff]
    %v466 = vld [vmem:[#allocation9 + $0x8] sm:$0xff]
    %v467 = vld [vmem:[#allocation9 + $0x10] sm:$0xff]
    %v468 = vld [vmem:[#allocation9 + $0x18] sm:$0xff]
    %v469 = vld [vmem:[#allocation9 + $0x20] sm:$0xff]
    %v470 = vld [vmem:[#allocation9 + $0x28] sm:$0xff]
    %v471 = vld [vmem:[#allocation9 + $0x30] sm:$0xff]
    %v472 = vld [vmem:[#allocation9 + $0x38] sm:$0xff]
    %v473 = vld [vmem:[#allocation9 + $0x40] sm:$0xff]
    %v474 = vld [vmem:[#allocation9 + $0x48] sm:$0xff]
    %v475 = vld [vmem:[#allocation9 + $0x50] sm:$0xff]
    %v476 = vld [vmem:[#allocation9 + $0x58] sm:$0xff]
    %v477 = vld [vmem:[#allocation9 + $0x60] sm:$0xff]
    %v478 = vld [vmem:[#allocation9 + $0x68] sm:$0xff]
    %v479 = vld [vmem:[#allocation9 + $0x70] sm:$0xff]
    %v480 = vld [vmem:[#allocation9 + $0x78] sm:$0xff]
    %481 = vmatprep.subr.mxu0 0.0
    %482 = vmatpush1.msra.mxu0 %v465
    %483 = vmatprep.subr.mxu0 0.0
    %484 = vmatpush1.msra.mxu0 %v466
    %485 = vmatprep.subr.mxu0 0.0
    %486 = vmatpush1.msra.mxu0 %v467
    %487 = vmatprep.subr.mxu0 0.0
    %488 = vmatpush1.msra.mxu0 %v468
    %489 = vmatprep.subr.mxu0 0.0
    %490 = vmatpush1.msra.mxu0 %v469
    %491 = vmatprep.subr.mxu0 0.0
    %492 = vmatpush1.msra.mxu0 %v470
    %493 = vmatprep.subr.mxu0 0.0
    %494 = vmatpush1.msra.mxu0 %v471
    %495 = vmatprep.subr.mxu0 0.0
    %496 = vmatpush1.msra.mxu0 %v472
    %497 = vmatprep.subr.mxu0 0.0
    %498 = vmatpush1.msra.mxu0 %v473
    %499 = vmatprep.subr.mxu0 0.0
    %500 = vmatpush1.msra.mxu0 %v474
    %501 = vmatprep.subr.mxu0 0.0
    %502 = vmatpush1.msra.mxu0 %v475
    %503 = vmatprep.subr.mxu0 0.0
    %504 = vmatpush1.msra.mxu0 %v476
    %505 = vmatprep.subr.mxu0 0.0
    %506 = vmatpush1.msra.mxu0 %v477
    %507 = vmatprep.subr.mxu0 0.0
    %508 = vmatpush1.msra.mxu0 %v478
    %509 = vmatprep.subr.mxu0 0.0
    %510 = vmatpush1.msra.mxu0 %v479
    %511 = vmatprep.subr.mxu0 0.0
    %512 = vmatpush1.msra.mxu0 %v480
    %513 = vmatprep.subr.mxu0 0.0
    %514 = vmatpush1.msra.mxu0 0.0
    %515 = vmatprep.subr.mxu0 0.0
    %516 = vmatpush1.msra.mxu0 0.0
    %517 = vmatprep.subr.mxu0 0.0
    %518 = vmatpush1.msra.mxu0 0.0
    %519 = vmatprep.subr.mxu0 0.0
    %520 = vmatpush1.msra.mxu0 0.0
    %521 = vmatprep.subr.mxu0 0.0
    %522 = vmatpush1.msra.mxu0 0.0
    %523 = vmatprep.subr.mxu0 0.0
    %524 = vmatpush1.msra.mxu0 0.0
    %525 = vmatprep.subr.mxu0 0.0
    %526 = vmatpush1.msra.mxu0 0.0
    %527 = vmatprep.subr.mxu0 0.0
    %528 = vmatpush1.msra.mxu0 0.0
    %529 = vmatprep.subr.mxu0 0.0
    %530 = vmatpush1.msra.mxu0 0.0
    %531 = vmatprep.subr.mxu0 0.0
    %532 = vmatpush1.msra.mxu0 0.0
    %533 = vmatprep.subr.mxu0 0.0
    %534 = vmatpush1.msra.mxu0 0.0
    %535 = vmatprep.subr.mxu0 0.0
    %536 = vmatpush1.msra.mxu0 0.0
    %537 = vmatprep.subr.mxu0 0.0
    %538 = vmatpush1.msra.mxu0 0.0
    %539 = vmatprep.subr.mxu0 0.0
    %540 = vmatpush1.msra.mxu0 0.0
    %541 = vmatprep.subr.mxu0 0.0
    %542 = vmatpush1.msra.mxu0 0.0
    %543 = vmatprep.subr.mxu0 0.0
    %544 = vmatpush1.msra.mxu0 0.0
    %545 = vmatprep.mubr.f32.mxu0 0.0
    %546 = vmatmul.mubr.f32.gmra.mrb[0].mxu0 %v464
    %v547 = vpop.f32.mrb[0].mxu0
    %v548 = vadd.f32 0.0, %v547
    %v549 = vpop.f32.mrb[0].mxu0
    %550 = vdwg.mxu0
    %v551 = vld [vmem:[#allocation12] sm:$0xff]
    %v552 = vld [vmem:[#allocation12 + $0x8] sm:$0xff]
    %v553 = vld [vmem:[#allocation12 + $0x10] sm:$0xff]
    %v554 = vld [vmem:[#allocation12 + $0x18] sm:$0xff]
    %v555 = vld [vmem:[#allocation14] sm:$0x1]
    %v557 = vlaneseq
    %v558 = vshrl.u32 %v557, 7
    %v559 = vsub.s32 0, %v558
    %v560 = vrot.slane %v555, %v559
    %562 = vmatprep.subr.mxu0 0.0
    %563 = vmatpush1.msra.mxu0 %v551
    %564 = vmatprep.subr.mxu0 0.0
    %565 = vmatpush1.msra.mxu0 %v552
    %566 = vmatprep.subr.mxu0 0.0
    %567 = vmatpush1.msra.mxu0 %v553
    %568 = vmatprep.subr.mxu0 0.0
    %569 = vmatpush1.msra.mxu0 %v554
    %570 = vmatprep.subr.mxu0 0.0
    %571 = vmatpush1.msra.mxu0 0.0
    %572 = vmatprep.subr.mxu0 0.0
    %573 = vmatpush1.msra.mxu0 0.0
    %574 = vmatprep.subr.mxu0 0.0
    %575 = vmatpush1.msra.mxu0 0.0
    %576 = vmatprep.subr.mxu0 0.0
    %577 = vmatpush1.msra.mxu0 0.0
    %578 = vmatprep.subr.mxu0 0.0
    %579 = vmatpush1.msra.mxu0 0.0
    %580 = vmatprep.subr.mxu0 0.0
    %581 = vmatpush1.msra.mxu0 0.0
    %582 = vmatprep.subr.mxu0 0.0
    %583 = vmatpush1.msra.mxu0 0.0
    %584 = vmatprep.subr.mxu0 0.0
    %585 = vmatpush1.msra.mxu0 0.0
    %586 = vmatprep.subr.mxu0 0.0
    %587 = vmatpush1.msra.mxu0 0.0
    %588 = vmatprep.subr.mxu0 0.0
    %589 = vmatpush1.msra.mxu0 0.0
    %590 = vmatprep.subr.mxu0 0.0
    %591 = vmatpush1.msra.mxu0 0.0
    %592 = vmatprep.subr.mxu0 0.0
    %593 = vmatpush1.msra.mxu0 0.0
    %594 = vmatprep.subr.mxu0 0.0
    %595 = vmatpush1.msra.mxu0 0.0
    %596 = vmatprep.subr.mxu0 0.0
    %597 = vmatpush1.msra.mxu0 0.0
    %598 = vmatprep.subr.mxu0 0.0
    %599 = vmatpush1.msra.mxu0 0.0
    %600 = vmatprep.subr.mxu0 0.0
    %601 = vmatpush1.msra.mxu0 0.0
    %602 = vmatprep.subr.mxu0 0.0
    %603 = vmatpush1.msra.mxu0 0.0
    %604 = vmatprep.subr.mxu0 0.0
    %605 = vmatpush1.msra.mxu0 0.0
    %606 = vmatprep.subr.mxu0 0.0
    %607 = vmatpush1.msra.mxu0 0.0
    %608 = vmatprep.subr.mxu0 0.0
    %609 = vmatpush1.msra.mxu0 0.0
    %610 = vmatprep.subr.mxu0 0.0
    %611 = vmatpush1.msra.mxu0 0.0
    %612 = vmatprep.subr.mxu0 0.0
    %613 = vmatpush1.msra.mxu0 0.0
    %614 = vmatprep.subr.mxu0 0.0
    %615 = vmatpush1.msra.mxu0 0.0
    %616 = vmatprep.subr.mxu0 0.0
    %617 = vmatpush1.msra.mxu0 0.0
    %618 = vmatprep.subr.mxu0 0.0
    %619 = vmatpush1.msra.mxu0 0.0
    %620 = vmatprep.subr.mxu0 0.0
    %621 = vmatpush1.msra.mxu0 0.0
    %622 = vmatprep.subr.mxu0 0.0
    %623 = vmatpush1.msra.mxu0 0.0
    %624 = vmatprep.subr.mxu0 0.0
    %625 = vmatpush1.msra.mxu0 0.0
    %626 = vmatprep.mubr.f32.mxu0 0.0
    %627 = vmatmul.mubr.f32.gmra.mrb[0].mxu0 %v350
    %v628 = vpop.f32.mrb[0].mxu0
    %v629 = vadd.f32 %v560, %v628
    %v630 = vpop.f32.mrb[0].mxu0
    %631 = vdwg.mxu0
    %v632 = vadd.f32 %v548, %v629
    %v633 = vxor.u32 %v632, 2147483648
    %v634 = vmul.f32 %v633, 1.442695
    %v635 = vpow.pop %v634
    %v636 = vadd.f32 %v635, 1.0
    %v637 = vrcp.pop %v636
    %v638 = vmul.f32 1.0, %v637
    %640 = vrot.lane.b32.xlu0 %v629, 64
    %v641 = vpop.permute.xlu0 %640
    %v643 = vmul.f32 %v638, %v641
    %645 = vrot.lane.b32.xlu0 %v643, 64
    %v646 = vpop.permute.xlu0 %645
    %v648 = vadd.f32 %v548, %v646
    %v649 = vtanh.pop %v648
    %v650 = vsub.f32 1.0, %v638
    %652 = vrot.lane.b32.xlu0 %v649, 96
    %v653 = vpop.permute.xlu0 %652
    %v655 = vmul.f32 %v650, %v653
    %v656 = vmul.f32 %v638, %v335
    %v657 = vadd.f32 %v655, %v656
    %v658 = vld [vmem:[#allocation15] sm:$0xff]
    %v659 = vld [vmem:[#allocation15 + $0x8] sm:$0xff]
    %v660 = vld [vmem:[#allocation15 + $0x10] sm:$0xff]
    %v661 = vld [vmem:[#allocation15 + $0x18] sm:$0xff]
    %v662 = vld [vmem:[#allocation17] sm:$0x1]
    %v664 = vlaneseq
    %v665 = vshrl.u32 %v664, 7
    %v666 = vsub.s32 0, %v665
    %v667 = vrot.slane %v662, %v666
    %670 = vrot.lane.b32.xlu0 %v657, 96
    %v671 = vpop.permute.xlu0 %670
    %v672 = vsel %vm233, %v671, 0
    %674 = vmatprep.subr.mxu0 0.0
    %675 = vmatpush1.msra.mxu0 %v658
    %676 = vmatprep.subr.mxu0 0.0
    %677 = vmatpush1.msra.mxu0 %v659
    %678 = vmatprep.subr.mxu0 0.0
    %679 = vmatpush1.msra.mxu0 %v660
    %680 = vmatprep.subr.mxu0 0.0
    %681 = vmatpush1.msra.mxu0 %v661
    %682 = vmatprep.subr.mxu0 0.0
    %683 = vmatpush1.msra.mxu0 0.0
    %684 = vmatprep.subr.mxu0 0.0
    %685 = vmatpush1.msra.mxu0 0.0
    %686 = vmatprep.subr.mxu0 0.0
    %687 = vmatpush1.msra.mxu0 0.0
    %688 = vmatprep.subr.mxu0 0.0
    %689 = vmatpush1.msra.mxu0 0.0
    %690 = vmatprep.subr.mxu0 0.0
    %691 = vmatpush1.msra.mxu0 0.0
    %692 = vmatprep.subr.mxu0 0.0
    %693 = vmatpush1.msra.mxu0 0.0
    %694 = vmatprep.subr.mxu0 0.0
    %695 = vmatpush1.msra.mxu0 0.0
    %696 = vmatprep.subr.mxu0 0.0
    %697 = vmatpush1.msra.mxu0 0.0
    %698 = vmatprep.subr.mxu0 0.0
    %699 = vmatpush1.msra.mxu0 0.0
    %700 = vmatprep.subr.mxu0 0.0
    %701 = vmatpush1.msra.mxu0 0.0
    %702 = vmatprep.subr.mxu0 0.0
    %703 = vmatpush1.msra.mxu0 0.0
    %704 = vmatprep.subr.mxu0 0.0
    %705 = vmatpush1.msra.mxu0 0.0
    %706 = vmatprep.subr.mxu0 0.0
    %707 = vmatpush1.msra.mxu0 0.0
    %708 = vmatprep.subr.mxu0 0.0
    %709 = vmatpush1.msra.mxu0 0.0
    %710 = vmatprep.subr.mxu0 0.0
    %711 = vmatpush1.msra.mxu0 0.0
    %712 = vmatprep.subr.mxu0 0.0
    %713 = vmatpush1.msra.mxu0 0.0
    %714 = vmatprep.subr.mxu0 0.0
    %715 = vmatpush1.msra.mxu0 0.0
    %716 = vmatprep.subr.mxu0 0.0
    %717 = vmatpush1.msra.mxu0 0.0
    %718 = vmatprep.subr.mxu0 0.0
    %719 = vmatpush1.msra.mxu0 0.0
    %720 = vmatprep.subr.mxu0 0.0
    %721 = vmatpush1.msra.mxu0 0.0
    %722 = vmatprep.subr.mxu0 0.0
    %723 = vmatpush1.msra.mxu0 0.0
    %724 = vmatprep.subr.mxu0 0.0
    %725 = vmatpush1.msra.mxu0 0.0
    %726 = vmatprep.subr.mxu0 0.0
    %727 = vmatpush1.msra.mxu0 0.0
    %728 = vmatprep.subr.mxu0 0.0
    %729 = vmatpush1.msra.mxu0 0.0
    %730 = vmatprep.subr.mxu0 0.0
    %731 = vmatpush1.msra.mxu0 0.0
    %732 = vmatprep.subr.mxu0 0.0
    %733 = vmatpush1.msra.mxu0 0.0
    %734 = vmatprep.subr.mxu0 0.0
    %735 = vmatpush1.msra.mxu0 0.0
    %736 = vmatprep.subr.mxu0 0.0
    %737 = vmatpush1.msra.mxu0 0.0
    %738 = vmatprep.mubr.f32.mxu0 0.0
    %739 = vmatmul.mubr.f32.gmra.mrb[0].mxu0 %v672
    %v740 = vpop.f32.mrb[0].mxu0
    %v741 = vadd.f32 %v667, %v740
    %v742 = vpop.f32.mrb[0].mxu0
    %743 = vdwg.mxu0
    %s744 = scalar_lea.vmem [#allocation18], 2
    %745 = vst [vmem:[%s744] sm:$0x3] %v741
    %v746 = vsel %vm423, %v741, -inf
    %747 = vmax.xlane.f32.xlu0 %v746
    %v748 = vpop.xlane.xlu0 %747
    %vm749 = vcmp.eq.f32.partialorder %v741, %v748
    %v750 = vsel %vm749, %v122, 128
    %v751 = vsel %vm423, %v750, 2147483647
    %v752 = vand.u32 %v751, 65535
    %v753 = vshra.s32 %v751, 16
    %v754 = vcvt.s32.f32 %v752
    %v755 = vcvt.s32.f32 %v753
    %756 = vmin.xlane.f32.xlu0 %v755
    %v757 = vpop.xlane.xlu0 %756
    %vm758 = vcmp.eq.f32.partialorder %v755, %v757
    %v759 = vsel %vm758, %v754, inf
    %760 = vmin.xlane.f32.xlu0 %v759
    %v761 = vpop.xlane.xlu0 %760
    %v762 = vcvt.f32.s32 %v761
    %v763 = vcvt.f32.s32 %v757
    %v764 = vshll.u32 %v763, 16
    %v765 = vadd.s32 %v764, %v762
    %vm766 = vcmp.eq.s32.totalorder %v122, %v765
    %v767 = vsel %vm766, 1, 0
    %v768 = vcvt.s32.f32 %v767
    %s769 = scalar_lea.vmem [#allocation6], 2
    %v770 = vld [vmem:[%s769] sm:$0x3]
    %771 = vset.pattern.permute.xlu0 0
    %772 = vperm.xlu0 %771, %v770
    %v773 = vpop.permute.xlu0 %772
    %vm774 = vcmp.eq.s32.totalorder %v122, %v773
    %v775 = vsel %vm774, 1, 0
    %v776 = vcvt.s32.f32 %v775
    %s777 = sadd.s32 %s454, 1
    %s778 = sld [smem:[#allocation5 + %s777]]
    %p779 = scmp.gt.s32.totalorder %s778, 0
    %s780 = scalar_select %p779, 1, 0
    %s781 = scvt.s32.f32 %s780
    %v782 = vstv %s781
    %v783 = vmul.f32 %v782, %v768
    %s784 = ssub.f32 1.0, %s781
    %v785 = vstv %s784
    %v786 = vmul.f32 %v785, %v776
    %v787 = vadd.f32 %v783, %v786
    %v788 = vld [vmem:[#allocation9] sm:$0xff]
    %v789 = vld [vmem:[#allocation9 + $0x8] sm:$0xff]
    %v790 = vld [vmem:[#allocation9 + $0x10] sm:$0xff]
    %v791 = vld [vmem:[#allocation9 + $0x18] sm:$0xff]
    %v792 = vld [vmem:[#allocation9 + $0x20] sm:$0xff]
    %v793 = vld [vmem:[#allocation9 + $0x28] sm:$0xff]
    %v794 = vld [vmem:[#allocation9 + $0x30] sm:$0xff]
    %v795 = vld [vmem:[#allocation9 + $0x38] sm:$0xff]
    %v796 = vld [vmem:[#allocation9 + $0x40] sm:$0xff]
    %v797 = vld [vmem:[#allocation9 + $0x48] sm:$0xff]
    %v798 = vld [vmem:[#allocation9 + $0x50] sm:$0xff]
    %v799 = vld [vmem:[#allocation9 + $0x58] sm:$0xff]
    %v800 = vld [vmem:[#allocation9 + $0x60] sm:$0xff]
    %v801 = vld [vmem:[#allocation9 + $0x68] sm:$0xff]
    %v802 = vld [vmem:[#allocation9 + $0x70] sm:$0xff]
    %v803 = vld [vmem:[#allocation9 + $0x78] sm:$0xff]
    %804 = vmatprep.subr.mxu0 0.0
    %805 = vmatpush1.msra.mxu0 %v788
    %806 = vmatprep.subr.mxu0 0.0
    %807 = vmatpush1.msra.mxu0 %v789
    %808 = vmatprep.subr.mxu0 0.0
    %809 = vmatpush1.msra.mxu0 %v790
    %810 = vmatprep.subr.mxu0 0.0
    %811 = vmatpush1.msra.mxu0 %v791
    %812 = vmatprep.subr.mxu0 0.0
    %813 = vmatpush1.msra.mxu0 %v792
    %814 = vmatprep.subr.mxu0 0.0
    %815 = vmatpush1.msra.mxu0 %v793
    %816 = vmatprep.subr.mxu0 0.0
    %817 = vmatpush1.msra.mxu0 %v794
    %818 = vmatprep.subr.mxu0 0.0
    %819 = vmatpush1.msra.mxu0 %v795
    %820 = vmatprep.subr.mxu0 0.0
    %821 = vmatpush1.msra.mxu0 %v796
    %822 = vmatprep.subr.mxu0 0.0
    %823 = vmatpush1.msra.mxu0 %v797
    %824 = vmatprep.subr.mxu0 0.0
    %825 = vmatpush1.msra.mxu0 %v798
    %826 = vmatprep.subr.mxu0 0.0
    %827 = vmatpush1.msra.mxu0 %v799
    %828 = vmatprep.subr.mxu0 0.0
    %829 = vmatpush1.msra.mxu0 %v800
    %830 = vmatprep.subr.mxu0 0.0
    %831 = vmatpush1.msra.mxu0 %v801
    %832 = vmatprep.subr.mxu0 0.0
    %833 = vmatpush1.msra.mxu0 %v802
    %834 = vmatprep.subr.mxu0 0.0
    %835 = vmatpush1.msra.mxu0 %v803
    %836 = vmatprep.subr.mxu0 0.0
    %837 = vmatpush1.msra.mxu0 0.0
    %838 = vmatprep.subr.mxu0 0.0
    %839 = vmatpush1.msra.mxu0 0.0
    %840 = vmatprep.subr.mxu0 0.0
    %841 = vmatpush1.msra.mxu0 0.0
    %842 = vmatprep.subr.mxu0 0.0
    %843 = vmatpush1.msra.mxu0 0.0
    %844 = vmatprep.subr.mxu0 0.0
    %845 = vmatpush1.msra.mxu0 0.0
    %846 = vmatprep.subr.mxu0 0.0
    %847 = vmatpush1.msra.mxu0 0.0
    %848 = vmatprep.subr.mxu0 0.0
    %849 = vmatpush1.msra.mxu0 0.0
    %850 = vmatprep.subr.mxu0 0.0
    %851 = vmatpush1.msra.mxu0 0.0
    %852 = vmatprep.subr.mxu0 0.0
    %853 = vmatpush1.msra.mxu0 0.0
    %854 = vmatprep.subr.mxu0 0.0
    %855 = vmatpush1.msra.mxu0 0.0
    %856 = vmatprep.subr.mxu0 0.0
    %857 = vmatpush1.msra.mxu0 0.0
    %858 = vmatprep.subr.mxu0 0.0
    %859 = vmatpush1.msra.mxu0 0.0
    %860 = vmatprep.subr.mxu0 0.0
    %861 = vmatpush1.msra.mxu0 0.0
    %862 = vmatprep.subr.mxu0 0.0
    %863 = vmatpush1.msra.mxu0 0.0
    %864 = vmatprep.subr.mxu0 0.0
    %865 = vmatpush1.msra.mxu0 0.0
    %866 = vmatprep.subr.mxu0 0.0
    %867 = vmatpush1.msra.mxu0 0.0
    %868 = vmatprep.mubr.f32.mxu0 0.0
    %869 = vmatmul.mubr.f32.gmra.mrb[0].mxu0 %v787
    %v870 = vpop.f32.mrb[0].mxu0
    %v871 = vadd.f32 0.0, %v870
    %v872 = vpop.f32.mrb[0].mxu0
    %873 = vdwg.mxu0
    %v874 = vld [vmem:[#allocation12] sm:$0xff]
    %v875 = vld [vmem:[#allocation12 + $0x8] sm:$0xff]
    %v876 = vld [vmem:[#allocation12 + $0x10] sm:$0xff]
    %v877 = vld [vmem:[#allocation12 + $0x18] sm:$0xff]
    %v878 = vld [vmem:[#allocation14] sm:$0x1]
    %v880 = vlaneseq
    %v881 = vshrl.u32 %v880, 7
    %v882 = vsub.s32 0, %v881
    %v883 = vrot.slane %v878, %v882
    %885 = vmatprep.subr.mxu0 0.0
    %886 = vmatpush1.msra.mxu0 %v874
    %887 = vmatprep.subr.mxu0 0.0
    %888 = vmatpush1.msra.mxu0 %v875
    %889 = vmatprep.subr.mxu0 0.0
    %890 = vmatpush1.msra.mxu0 %v876
    %891 = vmatprep.subr.mxu0 0.0
    %892 = vmatpush1.msra.mxu0 %v877
    %893 = vmatprep.subr.mxu0 0.0
    %894 = vmatpush1.msra.mxu0 0.0
    %895 = vmatprep.subr.mxu0 0.0
    %896 = vmatpush1.msra.mxu0 0.0
    %897 = vmatprep.subr.mxu0 0.0
    %898 = vmatpush1.msra.mxu0 0.0
    %899 = vmatprep.subr.mxu0 0.0
    %900 = vmatpush1.msra.mxu0 0.0
    %901 = vmatprep.subr.mxu0 0.0
    %902 = vmatpush1.msra.mxu0 0.0
    %903 = vmatprep.subr.mxu0 0.0
    %904 = vmatpush1.msra.mxu0 0.0
    %905 = vmatprep.subr.mxu0 0.0
    %906 = vmatpush1.msra.mxu0 0.0
    %907 = vmatprep.subr.mxu0 0.0
    %908 = vmatpush1.msra.mxu0 0.0
    %909 = vmatprep.subr.mxu0 0.0
    %910 = vmatpush1.msra.mxu0 0.0
    %911 = vmatprep.subr.mxu0 0.0
    %912 = vmatpush1.msra.mxu0 0.0
    %913 = vmatprep.subr.mxu0 0.0
    %914 = vmatpush1.msra.mxu0 0.0
    %915 = vmatprep.subr.mxu0 0.0
    %916 = vmatpush1.msra.mxu0 0.0
    %917 = vmatprep.subr.mxu0 0.0
    %918 = vmatpush1.msra.mxu0 0.0
    %919 = vmatprep.subr.mxu0 0.0
    %920 = vmatpush1.msra.mxu0 0.0
    %921 = vmatprep.subr.mxu0 0.0
    %922 = vmatpush1.msra.mxu0 0.0
    %923 = vmatprep.subr.mxu0 0.0
    %924 = vmatpush1.msra.mxu0 0.0
    %925 = vmatprep.subr.mxu0 0.0
    %926 = vmatpush1.msra.mxu0 0.0
    %927 = vmatprep.subr.mxu0 0.0
    %928 = vmatpush1.msra.mxu0 0.0
    %929 = vmatprep.subr.mxu0 0.0
    %930 = vmatpush1.msra.mxu0 0.0
    %931 = vmatprep.subr.mxu0 0.0
    %932 = vmatpush1.msra.mxu0 0.0
    %933 = vmatprep.subr.mxu0 0.0
    %934 = vmatpush1.msra.mxu0 0.0
    %935 = vmatprep.subr.mxu0 0.0
    %936 = vmatpush1.msra.mxu0 0.0
    %937 = vmatprep.subr.mxu0 0.0
    %938 = vmatpush1.msra.mxu0 0.0
    %939 = vmatprep.subr.mxu0 0.0
    %940 = vmatpush1.msra.mxu0 0.0
    %941 = vmatprep.subr.mxu0 0.0
    %942 = vmatpush1.msra.mxu0 0.0
    %943 = vmatprep.subr.mxu0 0.0
    %944 = vmatpush1.msra.mxu0 0.0
    %945 = vmatprep.subr.mxu0 0.0
    %946 = vmatpush1.msra.mxu0 0.0
    %947 = vmatprep.subr.mxu0 0.0
    %948 = vmatpush1.msra.mxu0 0.0
    %949 = vmatprep.mubr.f32.mxu0 0.0
    %950 = vmatmul.mubr.f32.gmra.mrb[0].mxu0 %v672
    %v951 = vpop.f32.mrb[0].mxu0
    %v952 = vadd.f32 %v883, %v951
    %v953 = vpop.f32.mrb[0].mxu0
    %954 = vdwg.mxu0
    %v955 = vadd.f32 %v871, %v952
    %v956 = vxor.u32 %v955, 2147483648
    %v957 = vmul.f32 %v956, 1.442695
    %v958 = vpow.pop %v957
    %v959 = vadd.f32 %v958, 1.0
    %v960 = vrcp.pop %v959
    %v961 = vmul.f32 1.0, %v960
    %963 = vrot.lane.b32.xlu0 %v952, 64
    %v964 = vpop.permute.xlu0 %963
    %v966 = vmul.f32 %v961, %v964
    %968 = vrot.lane.b32.xlu0 %v966, 64
    %v969 = vpop.permute.xlu0 %968
    %v971 = vadd.f32 %v871, %v969
    %v972 = vtanh.pop %v971
    %v973 = vsub.f32 1.0, %v961
    %975 = vrot.lane.b32.xlu0 %v972, 96
    %v976 = vpop.permute.xlu0 %975
    %v978 = vmul.f32 %v973, %v976
    %v979 = vmul.f32 %v961, %v657
    %v980 = vadd.f32 %v978, %v979
    %v981 = vld [vmem:[#allocation15] sm:$0xff]
    %v982 = vld [vmem:[#allocation15 + $0x8] sm:$0xff]
    %v983 = vld [vmem:[#allocation15 + $0x10] sm:$0xff]
    %v984 = vld [vmem:[#allocation15 + $0x18] sm:$0xff]
    %v985 = vld [vmem:[#allocation17] sm:$0x1]
    %v987 = vlaneseq
    %v988 = vshrl.u32 %v987, 7
    %v989 = vsub.s32 0, %v988
    %v990 = vrot.slane %v985, %v989
    %993 = vrot.lane.b32.xlu0 %v980, 96
    %v994 = vpop.permute.xlu0 %993
    %v995 = vsel %vm233, %v994, 0
    %997 = vmatprep.subr.mxu0 0.0
    %998 = vmatpush1.msra.mxu0 %v981
    %999 = vmatprep.subr.mxu0 0.0
    %1000 = vmatpush1.msra.mxu0 %v982
    %1001 = vmatprep.subr.mxu0 0.0
    %1002 = vmatpush1.msra.mxu0 %v983
    %1003 = vmatprep.subr.mxu0 0.0
    %1004 = vmatpush1.msra.mxu0 %v984
    %1005 = vmatprep.subr.mxu0 0.0
    %1006 = vmatpush1.msra.mxu0 0.0
    %1007 = vmatprep.subr.mxu0 0.0
    %1008 = vmatpush1.msra.mxu0 0.0
    %1009 = vmatprep.subr.mxu0 0.0
    %1010 = vmatpush1.msra.mxu0 0.0
    %1011 = vmatprep.subr.mxu0 0.0
    %1012 = vmatpush1.msra.mxu0 0.0
    %1013 = vmatprep.subr.mxu0 0.0
    %1014 = vmatpush1.msra.mxu0 0.0
    %1015 = vmatprep.subr.mxu0 0.0
    %1016 = vmatpush1.msra.mxu0 0.0
    %1017 = vmatprep.subr.mxu0 0.0
    %1018 = vmatpush1.msra.mxu0 0.0
    %1019 = vmatprep.subr.mxu0 0.0
    %1020 = vmatpush1.msra.mxu0 0.0
    %1021 = vmatprep.subr.mxu0 0.0
    %1022 = vmatpush1.msra.mxu0 0.0
    %1023 = vmatprep.subr.mxu0 0.0
    %1024 = vmatpush1.msra.mxu0 0.0
    %1025 = vmatprep.subr.mxu0 0.0
    %1026 = vmatpush1.msra.mxu0 0.0
    %1027 = vmatprep.subr.mxu0 0.0
    %1028 = vmatpush1.msra.mxu0 0.0
    %1029 = vmatprep.subr.mxu0 0.0
    %1030 = vmatpush1.msra.mxu0 0.0
    %1031 = vmatprep.subr.mxu0 0.0
    %1032 = vmatpush1.msra.mxu0 0.0
    %1033 = vmatprep.subr.mxu0 0.0
    %1034 = vmatpush1.msra.mxu0 0.0
    %1035 = vmatprep.subr.mxu0 0.0
    %1036 = vmatpush1.msra.mxu0 0.0
    %1037 = vmatprep.subr.mxu0 0.0
    %1038 = vmatpush1.msra.mxu0 0.0
    %1039 = vmatprep.subr.mxu0 0.0
    %1040 = vmatpush1.msra.mxu0 0.0
    %1041 = vmatprep.subr.mxu0 0.0
    %1042 = vmatpush1.msra.mxu0 0.0
    %1043 = vmatprep.subr.mxu0 0.0
    %1044 = vmatpush1.msra.mxu0 0.0
    %1045 = vmatprep.subr.mxu0 0.0
    %1046 = vmatpush1.msra.mxu0 0.0
    %1047 = vmatprep.subr.mxu0 0.0
    %1048 = vmatpush1.msra.mxu0 0.0
    %1049 = vmatprep.subr.mxu0 0.0
    %1050 = vmatpush1.msra.mxu0 0.0
    %1051 = vmatprep.subr.mxu0 0.0
    %1052 = vmatpush1.msra.mxu0 0.0
    %1053 = vmatprep.subr.mxu0 0.0
    %1054 = vmatpush1.msra.mxu0 0.0
    %1055 = vmatprep.subr.mxu0 0.0
    %1056 = vmatpush1.msra.mxu0 0.0
    %1057 = vmatprep.subr.mxu0 0.0
    %1058 = vmatpush1.msra.mxu0 0.0
    %1059 = vmatprep.subr.mxu0 0.0
    %1060 = vmatpush1.msra.mxu0 0.0
    %1061 = vmatprep.mubr.f32.mxu0 0.0
    %1062 = vmatmul.mubr.f32.gmra.mrb[0].mxu0 %v995
    %v1063 = vpop.f32.mrb[0].mxu0
    %v1064 = vadd.f32 %v990, %v1063
    %v1065 = vpop.f32.mrb[0].mxu0
    %1066 = vdwg.mxu0
    %s1067 = scalar_lea.vmem [#allocation18], 4
    %1068 = vst [vmem:[%s1067] sm:$0x3] %v1064
    %v1069 = vsel %vm423, %v1064, -inf
    %1070 = vmax.xlane.f32.xlu0 %v1069
    %v1071 = vpop.xlane.xlu0 %1070
    %vm1072 = vcmp.eq.f32.partialorder %v1064, %v1071
    %v1073 = vsel %vm1072, %v122, 128
    %v1074 = vsel %vm423, %v1073, 2147483647
    %v1075 = vand.u32 %v1074, 65535
    %v1076 = vshra.s32 %v1074, 16
    %v1077 = vcvt.s32.f32 %v1075
    %v1078 = vcvt.s32.f32 %v1076
    %1079 = vmin.xlane.f32.xlu0 %v1078
    %v1080 = vpop.xlane.xlu0 %1079
    %vm1081 = vcmp.eq.f32.partialorder %v1078, %v1080
    %v1082 = vsel %vm1081, %v1077, inf
    %1083 = vmin.xlane.f32.xlu0 %v1082
    %v1084 = vpop.xlane.xlu0 %1083
    %v1085 = vcvt.f32.s32 %v1084
    %v1086 = vcvt.f32.s32 %v1080
    %v1087 = vshll.u32 %v1086, 16
    %v1088 = vadd.s32 %v1087, %v1085
    %vm1089 = vcmp.eq.s32.totalorder %v122, %v1088
    %v1090 = vsel %vm1089, 1, 0
    %v1091 = vcvt.s32.f32 %v1090
    %s1092 = scalar_lea.vmem [#allocation6], 4
    %v1093 = vld [vmem:[%s1092] sm:$0x3]
    %1094 = vset.pattern.permute.xlu0 0
    %1095 = vperm.xlu0 %1094, %v1093
    %v1096 = vpop.permute.xlu0 %1095
    %vm1097 = vcmp.eq.s32.totalorder %v122, %v1096
    %v1098 = vsel %vm1097, 1, 0
    %v1099 = vcvt.s32.f32 %v1098
    %s1100 = sadd.s32 %s454, 2
    %s1101 = sld [smem:[#allocation5 + %s1100]]
    %p1102 = scmp.gt.s32.totalorder %s1101, 0
    %s1103 = scalar_select %p1102, 1, 0
    %s1104 = scvt.s32.f32 %s1103
    %v1105 = vstv %s1104
    %v1106 = vmul.f32 %v1105, %v1091
    %s1107 = ssub.f32 1.0, %s1104
    %v1108 = vstv %s1107
    %v1109 = vmul.f32 %v1108, %v1099
    %v1110 = vadd.f32 %v1106, %v1109
    %v1111 = vld [vmem:[#allocation9] sm:$0xff]
    %v1112 = vld [vmem:[#allocation9 + $0x8] sm:$0xff]
    %v1113 = vld [vmem:[#allocation9 + $0x10] sm:$0xff]
    %v1114 = vld [vmem:[#allocation9 + $0x18] sm:$0xff]
    %v1115 = vld [vmem:[#allocation9 + $0x20] sm:$0xff]
    %v1116 = vld [vmem:[#allocation9 + $0x28] sm:$0xff]
    %v1117 = vld [vmem:[#allocation9 + $0x30] sm:$0xff]
    %v1118 = vld [vmem:[#allocation9 + $0x38] sm:$0xff]
    %v1119 = vld [vmem:[#allocation9 + $0x40] sm:$0xff]
    %v1120 = vld [vmem:[#allocation9 + $0x48] sm:$0xff]
    %v1121 = vld [vmem:[#allocation9 + $0x50] sm:$0xff]
    %v1122 = vld [vmem:[#allocation9 + $0x58] sm:$0xff]
    %v1123 = vld [vmem:[#allocation9 + $0x60] sm:$0xff]
    %v1124 = vld [vmem:[#allocation9 + $0x68] sm:$0xff]
    %v1125 = vld [vmem:[#allocation9 + $0x70] sm:$0xff]
    %v1126 = vld [vmem:[#allocation9 + $0x78] sm:$0xff]
    %1127 = vmatprep.subr.mxu0 0.0
    %1128 = vmatpush1.msra.mxu0 %v1111
    %1129 = vmatprep.subr.mxu0 0.0
    %1130 = vmatpush1.msra.mxu0 %v1112
    %1131 = vmatprep.subr.mxu0 0.0
    %1132 = vmatpush1.msra.mxu0 %v1113
    %1133 = vmatprep.subr.mxu0 0.0
    %1134 = vmatpush1.msra.mxu0 %v1114
    %1135 = vmatprep.subr.mxu0 0.0
    %1136 = vmatpush1.msra.mxu0 %v1115
    %1137 = vmatprep.subr.mxu0 0.0
    %1138 = vmatpush1.msra.mxu0 %v1116
    %1139 = vmatprep.subr.mxu0 0.0
    %1140 = vmatpush1.msra.mxu0 %v1117
    %1141 = vmatprep.subr.mxu0 0.0
    %1142 = vmatpush1.msra.mxu0 %v1118
    %1143 = vmatprep.subr.mxu0 0.0
    %1144 = vmatpush1.msra.mxu0 %v1119
    %1145 = vmatprep.subr.mxu0 0.0
    %1146 = vmatpush1.msra.mxu0 %v1120
    %1147 = vmatprep.subr.mxu0 0.0
    %1148 = vmatpush1.msra.mxu0 %v1121
    %1149 = vmatprep.subr.mxu0 0.0
    %1150 = vmatpush1.msra.mxu0 %v1122
    %1151 = vmatprep.subr.mxu0 0.0
    %1152 = vmatpush1.msra.mxu0 %v1123
    %1153 = vmatprep.subr.mxu0 0.0
    %1154 = vmatpush1.msra.mxu0 %v1124
    %1155 = vmatprep.subr.mxu0 0.0
    %1156 = vmatpush1.msra.mxu0 %v1125
    %1157 = vmatprep.subr.mxu0 0.0
    %1158 = vmatpush1.msra.mxu0 %v1126
    %1159 = vmatprep.subr.mxu0 0.0
    %1160 = vmatpush1.msra.mxu0 0.0
    %1161 = vmatprep.subr.mxu0 0.0
    %1162 = vmatpush1.msra.mxu0 0.0
    %1163 = vmatprep.subr.mxu0 0.0
    %1164 = vmatpush1.msra.mxu0 0.0
    %1165 = vmatprep.subr.mxu0 0.0
    %1166 = vmatpush1.msra.mxu0 0.0
    %1167 = vmatprep.subr.mxu0 0.0
    %1168 = vmatpush1.msra.mxu0 0.0
    %1169 = vmatprep.subr.mxu0 0.0
    %1170 = vmatpush1.msra.mxu0 0.0
    %1171 = vmatprep.subr.mxu0 0.0
    %1172 = vmatpush1.msra.mxu0 0.0
    %1173 = vmatprep.subr.mxu0 0.0
    %1174 = vmatpush1.msra.mxu0 0.0
    %1175 = vmatprep.subr.mxu0 0.0
    %1176 = vmatpush1.msra.mxu0 0.0
    %1177 = vmatprep.subr.mxu0 0.0
    %1178 = vmatpush1.msra.mxu0 0.0
    %1179 = vmatprep.subr.mxu0 0.0
    %1180 = vmatpush1.msra.mxu0 0.0
    %1181 = vmatprep.subr.mxu0 0.0
    %1182 = vmatpush1.msra.mxu0 0.0
    %1183 = vmatprep.subr.mxu0 0.0
    %1184 = vmatpush1.msra.mxu0 0.0
    %1185 = vmatprep.subr.mxu0 0.0
    %1186 = vmatpush1.msra.mxu0 0.0
    %1187 = vmatprep.subr.mxu0 0.0
    %1188 = vmatpush1.msra.mxu0 0.0
    %1189 = vmatprep.subr.mxu0 0.0
    %1190 = vmatpush1.msra.mxu0 0.0
    %1191 = vmatprep.mubr.f32.mxu0 0.0
    %1192 = vmatmul.mubr.f32.gmra.mrb[0].mxu0 %v1110
    %v1193 = vpop.f32.mrb[0].mxu0
    %v1194 = vadd.f32 0.0, %v1193
    %v1195 = vpop.f32.mrb[0].mxu0
    %1196 = vdwg.mxu0
    %v1197 = vld [vmem:[#allocation12] sm:$0xff]
    %v1198 = vld [vmem:[#allocation12 + $0x8] sm:$0xff]
    %v1199 = vld [vmem:[#allocation12 + $0x10] sm:$0xff]
    %v1200 = vld [vmem:[#allocation12 + $0x18] sm:$0xff]
    %v1201 = vld [vmem:[#allocation14] sm:$0x1]
    %v1203 = vlaneseq
    %v1204 = vshrl.u32 %v1203, 7
    %v1205 = vsub.s32 0, %v1204
    %v1206 = vrot.slane %v1201, %v1205
    %1208 = vmatprep.subr.mxu0 0.0
    %1209 = vmatpush1.msra.mxu0 %v1197
    %1210 = vmatprep.subr.mxu0 0.0
    %1211 = vmatpush1.msra.mxu0 %v1198
    %1212 = vmatprep.subr.mxu0 0.0
    %1213 = vmatpush1.msra.mxu0 %v1199
    %1214 = vmatprep.subr.mxu0 0.0
    %1215 = vmatpush1.msra.mxu0 %v1200
    %1216 = vmatprep.subr.mxu0 0.0
    %1217 = vmatpush1.msra.mxu0 0.0
    %1218 = vmatprep.subr.mxu0 0.0
    %1219 = vmatpush1.msra.mxu0 0.0
    %1220 = vmatprep.subr.mxu0 0.0
    %1221 = vmatpush1.msra.mxu0 0.0
    %1222 = vmatprep.subr.mxu0 0.0
    %1223 = vmatpush1.msra.mxu0 0.0
    %1224 = vmatprep.subr.mxu0 0.0
    %1225 = vmatpush1.msra.mxu0 0.0
    %1226 = vmatprep.subr.mxu0 0.0
    %1227 = vmatpush1.msra.mxu0 0.0
    %1228 = vmatprep.subr.mxu0 0.0
    %1229 = vmatpush1.msra.mxu0 0.0
    %1230 = vmatprep.subr.mxu0 0.0
    %1231 = vmatpush1.msra.mxu0 0.0
    %1232 = vmatprep.subr.mxu0 0.0
    %1233 = vmatpush1.msra.mxu0 0.0
    %1234 = vmatprep.subr.mxu0 0.0
    %1235 = vmatpush1.msra.mxu0 0.0
    %1236 = vmatprep.subr.mxu0 0.0
    %1237 = vmatpush1.msra.mxu0 0.0
    %1238 = vmatprep.subr.mxu0 0.0
    %1239 = vmatpush1.msra.mxu0 0.0
    %1240 = vmatprep.subr.mxu0 0.0
    %1241 = vmatpush1.msra.mxu0 0.0
    %1242 = vmatprep.subr.mxu0 0.0
    %1243 = vmatpush1.msra.mxu0 0.0
    %1244 = vmatprep.subr.mxu0 0.0
    %1245 = vmatpush1.msra.mxu0 0.0
    %1246 = vmatprep.subr.mxu0 0.0
    %1247 = vmatpush1.msra.mxu0 0.0
    %1248 = vmatprep.subr.mxu0 0.0
    %1249 = vmatpush1.msra.mxu0 0.0
    %1250 = vmatprep.subr.mxu0 0.0
    %1251 = vmatpush1.msra.mxu0 0.0
    %1252 = vmatprep.subr.mxu0 0.0
    %1253 = vmatpush1.msra.mxu0 0.0
    %1254 = vmatprep.subr.mxu0 0.0
    %1255 = vmatpush1.msra.mxu0 0.0
    %1256 = vmatprep.subr.mxu0 0.0
    %1257 = vmatpush1.msra.mxu0 0.0
    %1258 = vmatprep.subr.mxu0 0.0
    %1259 = vmatpush1.msra.mxu0 0.0
    %1260 = vmatprep.subr.mxu0 0.0
    %1261 = vmatpush1.msra.mxu0 0.0
    %1262 = vmatprep.subr.mxu0 0.0
    %1263 = vmatpush1.msra.mxu0 0.0
    %1264 = vmatprep.subr.mxu0 0.0
    %1265 = vmatpush1.msra.mxu0 0.0
    %1266 = vmatprep.subr.mxu0 0.0
    %1267 = vmatpush1.msra.mxu0 0.0
    %1268 = vmatprep.subr.mxu0 0.0
    %1269 = vmatpush1.msra.mxu0 0.0
    %1270 = vmatprep.subr.mxu0 0.0
    %1271 = vmatpush1.msra.mxu0 0.0
    %1272 = vmatprep.mubr.f32.mxu0 0.0
    %1273 = vmatmul.mubr.f32.gmra.mrb[0].mxu0 %v995
    %v1274 = vpop.f32.mrb[0].mxu0
    %v1275 = vadd.f32 %v1206, %v1274
    %v1276 = vpop.f32.mrb[0].mxu0
    %1277 = vdwg.mxu0
    %v1278 = vadd.f32 %v1194, %v1275
    %v1279 = vxor.u32 %v1278, 2147483648
    %v1280 = vmul.f32 %v1279, 1.442695
    %v1281 = vpow.pop %v1280
    %v1282 = vadd.f32 %v1281, 1.0
    %v1283 = vrcp.pop %v1282
    %v1284 = vmul.f32 1.0, %v1283
    %1286 = vrot.lane.b32.xlu0 %v1275, 64
    %v1287 = vpop.permute.xlu0 %1286
    %v1289 = vmul.f32 %v1284, %v1287
    %1291 = vrot.lane.b32.xlu0 %v1289, 64
    %v1292 = vpop.permute.xlu0 %1291
    %v1294 = vadd.f32 %v1194, %v1292
    %v1295 = vtanh.pop %v1294
    %v1296 = vsub.f32 1.0, %v1284
    %1298 = vrot.lane.b32.xlu0 %v1295, 96
    %v1299 = vpop.permute.xlu0 %1298
    %v1301 = vmul.f32 %v1296, %v1299
    %v1302 = vmul.f32 %v1284, %v980
    %v1303 = vadd.f32 %v1301, %v1302
    %v1304 = vld [vmem:[#allocation15] sm:$0xff]
    %v1305 = vld [vmem:[#allocation15 + $0x8] sm:$0xff]
    %v1306 = vld [vmem:[#allocation15 + $0x10] sm:$0xff]
    %v1307 = vld [vmem:[#allocation15 + $0x18] sm:$0xff]
    %v1308 = vld [vmem:[#allocation17] sm:$0x1]
    %v1310 = vlaneseq
    %v1311 = vshrl.u32 %v1310, 7
    %v1312 = vsub.s32 0, %v1311
    %v1313 = vrot.slane %v1308, %v1312
    %1316 = vrot.lane.b32.xlu0 %v1303, 96
    %v1317 = vpop.permute.xlu0 %1316
    %v1318 = vsel %vm233, %v1317, 0
    %1320 = vmatprep.subr.mxu0 0.0
    %1321 = vmatpush1.msra.mxu0 %v1304
    %1322 = vmatprep.subr.mxu0 0.0
    %1323 = vmatpush1.msra.mxu0 %v1305
    %1324 = vmatprep.subr.mxu0 0.0
    %1325 = vmatpush1.msra.mxu0 %v1306
    %1326 = vmatprep.subr.mxu0 0.0
    %1327 = vmatpush1.msra.mxu0 %v1307
    %1328 = vmatprep.subr.mxu0 0.0
    %1329 = vmatpush1.msra.mxu0 0.0
    %1330 = vmatprep.subr.mxu0 0.0
    %1331 = vmatpush1.msra.mxu0 0.0
    %1332 = vmatprep.subr.mxu0 0.0
    %1333 = vmatpush1.msra.mxu0 0.0
    %1334 = vmatprep.subr.mxu0 0.0
    %1335 = vmatpush1.msra.mxu0 0.0
    %1336 = vmatprep.subr.mxu0 0.0
    %1337 = vmatpush1.msra.mxu0 0.0
    %1338 = vmatprep.subr.mxu0 0.0
    %1339 = vmatpush1.msra.mxu0 0.0
    %1340 = vmatprep.subr.mxu0 0.0
    %1341 = vmatpush1.msra.mxu0 0.0
    %1342 = vmatprep.subr.mxu0 0.0
    %1343 = vmatpush1.msra.mxu0 0.0
    %1344 = vmatprep.subr.mxu0 0.0
    %1345 = vmatpush1.msra.mxu0 0.0
    %1346 = vmatprep.subr.mxu0 0.0
    %1347 = vmatpush1.msra.mxu0 0.0
    %1348 = vmatprep.subr.mxu0 0.0
    %1349 = vmatpush1.msra.mxu0 0.0
    %1350 = vmatprep.subr.mxu0 0.0
    %1351 = vmatpush1.msra.mxu0 0.0
    %1352 = vmatprep.subr.mxu0 0.0
    %1353 = vmatpush1.msra.mxu0 0.0
    %1354 = vmatprep.subr.mxu0 0.0
    %1355 = vmatpush1.msra.mxu0 0.0
    %1356 = vmatprep.subr.mxu0 0.0
    %1357 = vmatpush1.msra.mxu0 0.0
    %1358 = vmatprep.subr.mxu0 0.0
    %1359 = vmatpush1.msra.mxu0 0.0
    %1360 = vmatprep.subr.mxu0 0.0
    %1361 = vmatpush1.msra.mxu0 0.0
    %1362 = vmatprep.subr.mxu0 0.0
    %1363 = vmatpush1.msra.mxu0 0.0
    %1364 = vmatprep.subr.mxu0 0.0
    %1365 = vmatpush1.msra.mxu0 0.0
    %1366 = vmatprep.subr.mxu0 0.0
    %1367 = vmatpush1.msra.mxu0 0.0
    %1368 = vmatprep.subr.mxu0 0.0
    %1369 = vmatpush1.msra.mxu0 0.0
    %1370 = vmatprep.subr.mxu0 0.0
    %1371 = vmatpush1.msra.mxu0 0.0
    %1372 = vmatprep.subr.mxu0 0.0
    %1373 = vmatpush1.msra.mxu0 0.0
    %1374 = vmatprep.subr.mxu0 0.0
    %1375 = vmatpush1.msra.mxu0 0.0
    %1376 = vmatprep.subr.mxu0 0.0
    %1377 = vmatpush1.msra.mxu0 0.0
    %1378 = vmatprep.subr.mxu0 0.0
    %1379 = vmatpush1.msra.mxu0 0.0
    %1380 = vmatprep.subr.mxu0 0.0
    %1381 = vmatpush1.msra.mxu0 0.0
    %1382 = vmatprep.subr.mxu0 0.0
    %1383 = vmatpush1.msra.mxu0 0.0
    %1384 = vmatprep.mubr.f32.mxu0 0.0
    %1385 = vmatmul.mubr.f32.gmra.mrb[0].mxu0 %v1318
    %v1386 = vpop.f32.mrb[0].mxu0
    %v1387 = vadd.f32 %v1313, %v1386
    %v1388 = vpop.f32.mrb[0].mxu0
    %1389 = vdwg.mxu0
    %s1390 = scalar_lea.vmem [#allocation18], 6
    %1391 = vst [vmem:[%s1390] sm:$0x3] %v1387
    %v1392 = vsel %vm423, %v1387, -inf
    %1393 = vmax.xlane.f32.xlu0 %v1392
    %v1394 = vpop.xlane.xlu0 %1393
    %vm1395 = vcmp.eq.f32.partialorder %v1387, %v1394
    %v1396 = vsel %vm1395, %v122, 128
    %v1397 = vsel %vm423, %v1396, 2147483647
    %v1398 = vand.u32 %v1397, 65535
    %v1399 = vshra.s32 %v1397, 16
    %v1400 = vcvt.s32.f32 %v1398
    %v1401 = vcvt.s32.f32 %v1399
    %1402 = vmin.xlane.f32.xlu0 %v1401
    %v1403 = vpop.xlane.xlu0 %1402
    %vm1404 = vcmp.eq.f32.partialorder %v1401, %v1403
    %v1405 = vsel %vm1404, %v1400, inf
    %1406 = vmin.xlane.f32.xlu0 %v1405
    %v1407 = vpop.xlane.xlu0 %1406
    %v1408 = vcvt.f32.s32 %v1407
    %v1409 = vcvt.f32.s32 %v1403
    %v1410 = vshll.u32 %v1409, 16
    %v1411 = vadd.s32 %v1410, %v1408
    %vm1412 = vcmp.eq.s32.totalorder %v122, %v1411
    %v1413 = vsel %vm1412, 1, 0
    %v1414 = vcvt.s32.f32 %v1413
    %s1415 = scalar_lea.vmem [#allocation6], 6
    %v1416 = vld [vmem:[%s1415] sm:$0x3]
    %1417 = vset.pattern.permute.xlu0 0
    %1418 = vperm.xlu0 %1417, %v1416
    %v1419 = vpop.permute.xlu0 %1418
    %vm1420 = vcmp.eq.s32.totalorder %v122, %v1419
    %v1421 = vsel %vm1420, 1, 0
    %v1422 = vcvt.s32.f32 %v1421
    %s1423 = sadd.s32 %s454, 3
    %s1424 = sld [smem:[#allocation5 + %s1423]]
    %p1425 = scmp.gt.s32.totalorder %s1424, 0
    %s1426 = scalar_select %p1425, 1, 0
    %s1427 = scvt.s32.f32 %s1426
    %v1428 = vstv %s1427
    %v1429 = vmul.f32 %v1428, %v1414
    %s1430 = ssub.f32 1.0, %s1427
    %v1431 = vstv %s1430
    %v1432 = vmul.f32 %v1431, %v1422
    %v1433 = vadd.f32 %v1429, %v1432
    %v1434 = vld [vmem:[#allocation9] sm:$0xff]
    %v1435 = vld [vmem:[#allocation9 + $0x8] sm:$0xff]
    %v1436 = vld [vmem:[#allocation9 + $0x10] sm:$0xff]
    %v1437 = vld [vmem:[#allocation9 + $0x18] sm:$0xff]
    %v1438 = vld [vmem:[#allocation9 + $0x20] sm:$0xff]
    %v1439 = vld [vmem:[#allocation9 + $0x28] sm:$0xff]
    %v1440 = vld [vmem:[#allocation9 + $0x30] sm:$0xff]
    %v1441 = vld [vmem:[#allocation9 + $0x38] sm:$0xff]
    %v1442 = vld [vmem:[#allocation9 + $0x40] sm:$0xff]
    %v1443 = vld [vmem:[#allocation9 + $0x48] sm:$0xff]
    %v1444 = vld [vmem:[#allocation9 + $0x50] sm:$0xff]
    %v1445 = vld [vmem:[#allocation9 + $0x58] sm:$0xff]
    %v1446 = vld [vmem:[#allocation9 + $0x60] sm:$0xff]
    %v1447 = vld [vmem:[#allocation9 + $0x68] sm:$0xff]
    %v1448 = vld [vmem:[#allocation9 + $0x70] sm:$0xff]
    %v1449 = vld [vmem:[#allocation9 + $0x78] sm:$0xff]
    %1450 = vmatprep.subr.mxu0 0.0
    %1451 = vmatpush1.msra.mxu0 %v1434
    %1452 = vmatprep.subr.mxu0 0.0
    %1453 = vmatpush1.msra.mxu0 %v1435
    %1454 = vmatprep.subr.mxu0 0.0
    %1455 = vmatpush1.msra.mxu0 %v1436
    %1456 = vmatprep.subr.mxu0 0.0
    %1457 = vmatpush1.msra.mxu0 %v1437
    %1458 = vmatprep.subr.mxu0 0.0
    %1459 = vmatpush1.msra.mxu0 %v1438
    %1460 = vmatprep.subr.mxu0 0.0
    %1461 = vmatpush1.msra.mxu0 %v1439
    %1462 = vmatprep.subr.mxu0 0.0
    %1463 = vmatpush1.msra.mxu0 %v1440
    %1464 = vmatprep.subr.mxu0 0.0
    %1465 = vmatpush1.msra.mxu0 %v1441
    %1466 = vmatprep.subr.mxu0 0.0
    %1467 = vmatpush1.msra.mxu0 %v1442
    %1468 = vmatprep.subr.mxu0 0.0
    %1469 = vmatpush1.msra.mxu0 %v1443
    %1470 = vmatprep.subr.mxu0 0.0
    %1471 = vmatpush1.msra.mxu0 %v1444
    %1472 = vmatprep.subr.mxu0 0.0
    %1473 = vmatpush1.msra.mxu0 %v1445
    %1474 = vmatprep.subr.mxu0 0.0
    %1475 = vmatpush1.msra.mxu0 %v1446
    %1476 = vmatprep.subr.mxu0 0.0
    %1477 = vmatpush1.msra.mxu0 %v1447
    %1478 = vmatprep.subr.mxu0 0.0
    %1479 = vmatpush1.msra.mxu0 %v1448
    %1480 = vmatprep.subr.mxu0 0.0
    %1481 = vmatpush1.msra.mxu0 %v1449
    %1482 = vmatprep.subr.mxu0 0.0
    %1483 = vmatpush1.msra.mxu0 0.0
    %1484 = vmatprep.subr.mxu0 0.0
    %1485 = vmatpush1.msra.mxu0 0.0
    %1486 = vmatprep.subr.mxu0 0.0
    %1487 = vmatpush1.msra.mxu0 0.0
    %1488 = vmatprep.subr.mxu0 0.0
    %1489 = vmatpush1.msra.mxu0 0.0
    %1490 = vmatprep.subr.mxu0 0.0
    %1491 = vmatpush1.msra.mxu0 0.0
    %1492 = vmatprep.subr.mxu0 0.0
    %1493 = vmatpush1.msra.mxu0 0.0
    %1494 = vmatprep.subr.mxu0 0.0
    %1495 = vmatpush1.msra.mxu0 0.0
    %1496 = vmatprep.subr.mxu0 0.0
    %1497 = vmatpush1.msra.mxu0 0.0
    %1498 = vmatprep.subr.mxu0 0.0
    %1499 = vmatpush1.msra.mxu0 0.0
    %1500 = vmatprep.subr.mxu0 0.0
    %1501 = vmatpush1.msra.mxu0 0.0
    %1502 = vmatprep.subr.mxu0 0.0
    %1503 = vmatpush1.msra.mxu0 0.0
    %1504 = vmatprep.subr.mxu0 0.0
    %1505 = vmatpush1.msra.mxu0 0.0
    %1506 = vmatprep.subr.mxu0 0.0
    %1507 = vmatpush1.msra.mxu0 0.0
    %1508 = vmatprep.subr.mxu0 0.0
    %1509 = vmatpush1.msra.mxu0 0.0
    %1510 = vmatprep.subr.mxu0 0.0
    %1511 = vmatpush1.msra.mxu0 0.0
    %1512 = vmatprep.subr.mxu0 0.0
    %1513 = vmatpush1.msra.mxu0 0.0
    %1514 = vmatprep.mubr.f32.mxu0 0.0
    %1515 = vmatmul.mubr.f32.gmra.mrb[0].mxu0 %v1433
    %v1516 = vpop.f32.mrb[0].mxu0
    %v1517 = vadd.f32 0.0, %v1516
    %v1518 = vpop.f32.mrb[0].mxu0
    %1519 = vdwg.mxu0
    %v1520 = vld [vmem:[#allocation12] sm:$0xff]
    %v1521 = vld [vmem:[#allocation12 + $0x8] sm:$0xff]
    %v1522 = vld [vmem:[#allocation12 + $0x10] sm:$0xff]
    %v1523 = vld [vmem:[#allocation12 + $0x18] sm:$0xff]
    %v1524 = vld [vmem:[#allocation14] sm:$0x1]
    %v1526 = vlaneseq
    %v1527 = vshrl.u32 %v1526, 7
    %v1528 = vsub.s32 0, %v1527
    %v1529 = vrot.slane %v1524, %v1528
    %1531 = vmatprep.subr.mxu0 0.0
    %1532 = vmatpush1.msra.mxu0 %v1520
    %1533 = vmatprep.subr.mxu0 0.0
    %1534 = vmatpush1.msra.mxu0 %v1521
    %1535 = vmatprep.subr.mxu0 0.0
    %1536 = vmatpush1.msra.mxu0 %v1522
    %1537 = vmatprep.subr.mxu0 0.0
    %1538 = vmatpush1.msra.mxu0 %v1523
    %1539 = vmatprep.subr.mxu0 0.0
    %1540 = vmatpush1.msra.mxu0 0.0
    %1541 = vmatprep.subr.mxu0 0.0
    %1542 = vmatpush1.msra.mxu0 0.0
    %1543 = vmatprep.subr.mxu0 0.0
    %1544 = vmatpush1.msra.mxu0 0.0
    %1545 = vmatprep.subr.mxu0 0.0
    %1546 = vmatpush1.msra.mxu0 0.0
    %1547 = vmatprep.subr.mxu0 0.0
    %1548 = vmatpush1.msra.mxu0 0.0
    %1549 = vmatprep.subr.mxu0 0.0
    %1550 = vmatpush1.msra.mxu0 0.0
    %1551 = vmatprep.subr.mxu0 0.0
    %1552 = vmatpush1.msra.mxu0 0.0
    %1553 = vmatprep.subr.mxu0 0.0
    %1554 = vmatpush1.msra.mxu0 0.0
    %1555 = vmatprep.subr.mxu0 0.0
    %1556 = vmatpush1.msra.mxu0 0.0
    %1557 = vmatprep.subr.mxu0 0.0
    %1558 = vmatpush1.msra.mxu0 0.0
    %1559 = vmatprep.subr.mxu0 0.0
    %1560 = vmatpush1.msra.mxu0 0.0
    %1561 = vmatprep.subr.mxu0 0.0
    %1562 = vmatpush1.msra.mxu0 0.0
    %1563 = vmatprep.subr.mxu0 0.0
    %1564 = vmatpush1.msra.mxu0 0.0
    %1565 = vmatprep.subr.mxu0 0.0
    %1566 = vmatpush1.msra.mxu0 0.0
    %1567 = vmatprep.subr.mxu0 0.0
    %1568 = vmatpush1.msra.mxu0 0.0
    %1569 = vmatprep.subr.mxu0 0.0
    %1570 = vmatpush1.msra.mxu0 0.0
    %1571 = vmatprep.subr.mxu0 0.0
    %1572 = vmatpush1.msra.mxu0 0.0
    %1573 = vmatprep.subr.mxu0 0.0
    %1574 = vmatpush1.msra.mxu0 0.0
    %1575 = vmatprep.subr.mxu0 0.0
    %1576 = vmatpush1.msra.mxu0 0.0
    %1577 = vmatprep.subr.mxu0 0.0
    %1578 = vmatpush1.msra.mxu0 0.0
    %1579 = vmatprep.subr.mxu0 0.0
    %1580 = vmatpush1.msra.mxu0 0.0
    %1581 = vmatprep.subr.mxu0 0.0
    %1582 = vmatpush1.msra.mxu0 0.0
    %1583 = vmatprep.subr.mxu0 0.0
    %1584 = vmatpush1.msra.mxu0 0.0
    %1585 = vmatprep.subr.mxu0 0.0
    %1586 = vmatpush1.msra.mxu0 0.0
    %1587 = vmatprep.subr.mxu0 0.0
    %1588 = vmatpush1.msra.mxu0 0.0
    %1589 = vmatprep.subr.mxu0 0.0
    %1590 = vmatpush1.msra.mxu0 0.0
    %1591 = vmatprep.subr.mxu0 0.0
    %1592 = vmatpush1.msra.mxu0 0.0
    %1593 = vmatprep.subr.mxu0 0.0
    %1594 = vmatpush1.msra.mxu0 0.0
    %1595 = vmatprep.mubr.f32.mxu0 0.0
    %1596 = vmatmul.mubr.f32.gmra.mrb[0].mxu0 %v1318
    %v1597 = vpop.f32.mrb[0].mxu0
    %v1598 = vadd.f32 %v1529, %v1597
    %v1599 = vpop.f32.mrb[0].mxu0
    %1600 = vdwg.mxu0
    %v1601 = vadd.f32 %v1517, %v1598
    %v1602 = vxor.u32 %v1601, 2147483648
    %v1603 = vmul.f32 %v1602, 1.442695
    %v1604 = vpow.pop %v1603
    %v1605 = vadd.f32 %v1604, 1.0
    %v1606 = vrcp.pop %v1605
    %v1607 = vmul.f32 1.0, %v1606
    %1609 = vrot.lane.b32.xlu0 %v1598, 64
    %v1610 = vpop.permute.xlu0 %1609
    %v1612 = vmul.f32 %v1607, %v1610
    %1614 = vrot.lane.b32.xlu0 %v1612, 64
    %v1615 = vpop.permute.xlu0 %1614
    %v1617 = vadd.f32 %v1517, %v1615
    %v1618 = vtanh.pop %v1617
    %v1619 = vsub.f32 1.0, %v1607
    %1621 = vrot.lane.b32.xlu0 %v1618, 96
    %v1622 = vpop.permute.xlu0 %1621
    %v1624 = vmul.f32 %v1619, %v1622
    %v1625 = vmul.f32 %v1607, %v1303
    %v1626 = vadd.f32 %v1624, %v1625
    %v1627 = vld [vmem:[#allocation15] sm:$0xff]
    %v1628 = vld [vmem:[#allocation15 + $0x8] sm:$0xff]
    %v1629 = vld [vmem:[#allocation15 + $0x10] sm:$0xff]
    %v1630 = vld [vmem:[#allocation15 + $0x18] sm:$0xff]
    %v1631 = vld [vmem:[#allocation17] sm:$0x1]
    %v1633 = vlaneseq
    %v1634 = vshrl.u32 %v1633, 7
    %v1635 = vsub.s32 0, %v1634
    %v1636 = vrot.slane %v1631, %v1635
    %1639 = vrot.lane.b32.xlu0 %v1626, 96
    %v1640 = vpop.permute.xlu0 %1639
    %v1641 = vsel %vm233, %v1640, 0
    %1643 = vmatprep.subr.mxu0 0.0
    %1644 = vmatpush1.msra.mxu0 %v1627
    %1645 = vmatprep.subr.mxu0 0.0
    %1646 = vmatpush1.msra.mxu0 %v1628
    %1647 = vmatprep.subr.mxu0 0.0
    %1648 = vmatpush1.msra.mxu0 %v1629
    %1649 = vmatprep.subr.mxu0 0.0
    %1650 = vmatpush1.msra.mxu0 %v1630
    %1651 = vmatprep.subr.mxu0 0.0
    %1652 = vmatpush1.msra.mxu0 0.0
    %1653 = vmatprep.subr.mxu0 0.0
    %1654 = vmatpush1.msra.mxu0 0.0
    %1655 = vmatprep.subr.mxu0 0.0
    %1656 = vmatpush1.msra.mxu0 0.0
    %1657 = vmatprep.subr.mxu0 0.0
    %1658 = vmatpush1.msra.mxu0 0.0
    %1659 = vmatprep.subr.mxu0 0.0
    %1660 = vmatpush1.msra.mxu0 0.0
    %1661 = vmatprep.subr.mxu0 0.0
    %1662 = vmatpush1.msra.mxu0 0.0
    %1663 = vmatprep.subr.mxu0 0.0
    %1664 = vmatpush1.msra.mxu0 0.0
    %1665 = vmatprep.subr.mxu0 0.0
    %1666 = vmatpush1.msra.mxu0 0.0
    %1667 = vmatprep.subr.mxu0 0.0
    %1668 = vmatpush1.msra.mxu0 0.0
    %1669 = vmatprep.subr.mxu0 0.0
    %1670 = vmatpush1.msra.mxu0 0.0
    %1671 = vmatprep.subr.mxu0 0.0
    %1672 = vmatpush1.msra.mxu0 0.0
    %1673 = vmatprep.subr.mxu0 0.0
    %1674 = vmatpush1.msra.mxu0 0.0
    %1675 = vmatprep.subr.mxu0 0.0
    %1676 = vmatpush1.msra.mxu0 0.0
    %1677 = vmatprep.subr.mxu0 0.0
    %1678 = vmatpush1.msra.mxu0 0.0
    %1679 = vmatprep.subr.mxu0 0.0
    %1680 = vmatpush1.msra.mxu0 0.0
    %1681 = vmatprep.subr.mxu0 0.0
    %1682 = vmatpush1.msra.mxu0 0.0
    %1683 = vmatprep.subr.mxu0 0.0
    %1684 = vmatpush1.msra.mxu0 0.0
    %1685 = vmatprep.subr.mxu0 0.0
    %1686 = vmatpush1.msra.mxu0 0.0
    %1687 = vmatprep.subr.mxu0 0.0
    %1688 = vmatpush1.msra.mxu0 0.0
    %1689 = vmatprep.subr.mxu0 0.0
    %1690 = vmatpush1.msra.mxu0 0.0
    %1691 = vmatprep.subr.mxu0 0.0
    %1692 = vmatpush1.msra.mxu0 0.0
    %1693 = vmatprep.subr.mxu0 0.0
    %1694 = vmatpush1.msra.mxu0 0.0
    %1695 = vmatprep.subr.mxu0 0.0
    %1696 = vmatpush1.msra.mxu0 0.0
    %1697 = vmatprep.subr.mxu0 0.0
    %1698 = vmatpush1.msra.mxu0 0.0
    %1699 = vmatprep.subr.mxu0 0.0
    %1700 = vmatpush1.msra.mxu0 0.0
    %1701 = vmatprep.subr.mxu0 0.0
    %1702 = vmatpush1.msra.mxu0 0.0
    %1703 = vmatprep.subr.mxu0 0.0
    %1704 = vmatpush1.msra.mxu0 0.0
    %1705 = vmatprep.subr.mxu0 0.0
    %1706 = vmatpush1.msra.mxu0 0.0
    %1707 = vmatprep.mubr.f32.mxu0 0.0
    %1708 = vmatmul.mubr.f32.gmra.mrb[0].mxu0 %v1641
    %v1709 = vpop.f32.mrb[0].mxu0
    %v1710 = vadd.f32 %v1636, %v1709
    %v1711 = vpop.f32.mrb[0].mxu0
    %1712 = vdwg.mxu0
    %s1713 = scalar_lea.vmem [#allocation18], 8
    %1714 = vst [vmem:[%s1713] sm:$0x3] %v1710
    %v1715 = vsel %vm423, %v1710, -inf
    %1716 = vmax.xlane.f32.xlu0 %v1715
    %v1717 = vpop.xlane.xlu0 %1716
    %vm1718 = vcmp.eq.f32.partialorder %v1710, %v1717
    %v1719 = vsel %vm1718, %v122, 128
    %v1720 = vsel %vm423, %v1719, 2147483647
    %v1721 = vand.u32 %v1720, 65535
    %v1722 = vshra.s32 %v1720, 16
    %v1723 = vcvt.s32.f32 %v1721
    %v1724 = vcvt.s32.f32 %v1722
    %1725 = vmin.xlane.f32.xlu0 %v1724
    %v1726 = vpop.xlane.xlu0 %1725
    %vm1727 = vcmp.eq.f32.partialorder %v1724, %v1726
    %v1728 = vsel %vm1727, %v1723, inf
    %1729 = vmin.xlane.f32.xlu0 %v1728
    %v1730 = vpop.xlane.xlu0 %1729
    %v1731 = vcvt.f32.s32 %v1730
    %v1732 = vcvt.f32.s32 %v1726
    %v1733 = vshll.u32 %v1732, 16
    %v1734 = vadd.s32 %v1733, %v1731
    %vm1735 = vcmp.eq.s32.totalorder %v122, %v1734
    %v1736 = vsel %vm1735, 1, 0
    %v1737 = vcvt.s32.f32 %v1736
    %s1738 = scalar_lea.vmem [#allocation6], 8
    %v1739 = vld [vmem:[%s1738] sm:$0x3]
    %1740 = vset.pattern.permute.xlu0 0
    %1741 = vperm.xlu0 %1740, %v1739
    %v1742 = vpop.permute.xlu0 %1741
    %vm1743 = vcmp.eq.s32.totalorder %v122, %v1742
    %v1744 = vsel %vm1743, 1, 0
    %v1745 = vcvt.s32.f32 %v1744
    %s1746 = sadd.s32 %s454, 4
    %s1747 = sld [smem:[#allocation5 + %s1746]]
    %p1748 = scmp.gt.s32.totalorder %s1747, 0
    %s1749 = scalar_select %p1748, 1, 0
    %s1750 = scvt.s32.f32 %s1749
    %v1751 = vstv %s1750
    %v1752 = vmul.f32 %v1751, %v1737
    %s1753 = ssub.f32 1.0, %s1750
    %v1754 = vstv %s1753
    %v1755 = vmul.f32 %v1754, %v1745
    %v1756 = vadd.f32 %v1752, %v1755
    %v1757 = vld [vmem:[#allocation9] sm:$0xff]
    %v1758 = vld [vmem:[#allocation9 + $0x8] sm:$0xff]
    %v1759 = vld [vmem:[#allocation9 + $0x10] sm:$0xff]
    %v1760 = vld [vmem:[#allocation9 + $0x18] sm:$0xff]
    %v1761 = vld [vmem:[#allocation9 + $0x20] sm:$0xff]
    %v1762 = vld [vmem:[#allocation9 + $0x28] sm:$0xff]
    %v1763 = vld [vmem:[#allocation9 + $0x30] sm:$0xff]
    %v1764 = vld [vmem:[#allocation9 + $0x38] sm:$0xff]
    %v1765 = vld [vmem:[#allocation9 + $0x40] sm:$0xff]
    %v1766 = vld [vmem:[#allocation9 + $0x48] sm:$0xff]
    %v1767 = vld [vmem:[#allocation9 + $0x50] sm:$0xff]
    %v1768 = vld [vmem:[#allocation9 + $0x58] sm:$0xff]
    %v1769 = vld [vmem:[#allocation9 + $0x60] sm:$0xff]
    %v1770 = vld [vmem:[#allocation9 + $0x68] sm:$0xff]
    %v1771 = vld [vmem:[#allocation9 + $0x70] sm:$0xff]
    %v1772 = vld [vmem:[#allocation9 + $0x78] sm:$0xff]
    %1773 = vmatprep.subr.mxu0 0.0
    %1774 = vmatpush1.msra.mxu0 %v1757
    %1775 = vmatprep.subr.mxu0 0.0
    %1776 = vmatpush1.msra.mxu0 %v1758
    %1777 = vmatprep.subr.mxu0 0.0
    %1778 = vmatpush1.msra.mxu0 %v1759
    %1779 = vmatprep.subr.mxu0 0.0
    %1780 = vmatpush1.msra.mxu0 %v1760
    %1781 = vmatprep.subr.mxu0 0.0
    %1782 = vmatpush1.msra.mxu0 %v1761
    %1783 = vmatprep.subr.mxu0 0.0
    %1784 = vmatpush1.msra.mxu0 %v1762
    %1785 = vmatprep.subr.mxu0 0.0
    %1786 = vmatpush1.msra.mxu0 %v1763
    %1787 = vmatprep.subr.mxu0 0.0
    %1788 = vmatpush1.msra.mxu0 %v1764
    %1789 = vmatprep.subr.mxu0 0.0
    %1790 = vmatpush1.msra.mxu0 %v1765
    %1791 = vmatprep.subr.mxu0 0.0
    %1792 = vmatpush1.msra.mxu0 %v1766
    %1793 = vmatprep.subr.mxu0 0.0
    %1794 = vmatpush1.msra.mxu0 %v1767
    %1795 = vmatprep.subr.mxu0 0.0
    %1796 = vmatpush1.msra.mxu0 %v1768
    %1797 = vmatprep.subr.mxu0 0.0
    %1798 = vmatpush1.msra.mxu0 %v1769
    %1799 = vmatprep.subr.mxu0 0.0
    %1800 = vmatpush1.msra.mxu0 %v1770
    %1801 = vmatprep.subr.mxu0 0.0
    %1802 = vmatpush1.msra.mxu0 %v1771
    %1803 = vmatprep.subr.mxu0 0.0
    %1804 = vmatpush1.msra.mxu0 %v1772
    %1805 = vmatprep.subr.mxu0 0.0
    %1806 = vmatpush1.msra.mxu0 0.0
    %1807 = vmatprep.subr.mxu0 0.0
    %1808 = vmatpush1.msra.mxu0 0.0
    %1809 = vmatprep.subr.mxu0 0.0
    %1810 = vmatpush1.msra.mxu0 0.0
    %1811 = vmatprep.subr.mxu0 0.0
    %1812 = vmatpush1.msra.mxu0 0.0
    %1813 = vmatprep.subr.mxu0 0.0
    %1814 = vmatpush1.msra.mxu0 0.0
    %1815 = vmatprep.subr.mxu0 0.0
    %1816 = vmatpush1.msra.mxu0 0.0
    %1817 = vmatprep.subr.mxu0 0.0
    %1818 = vmatpush1.msra.mxu0 0.0
    %1819 = vmatprep.subr.mxu0 0.0
    %1820 = vmatpush1.msra.mxu0 0.0
    %1821 = vmatprep.subr.mxu0 0.0
    %1822 = vmatpush1.msra.mxu0 0.0
    %1823 = vmatprep.subr.mxu0 0.0
    %1824 = vmatpush1.msra.mxu0 0.0
    %1825 = vmatprep.subr.mxu0 0.0
    %1826 = vmatpush1.msra.mxu0 0.0
    %1827 = vmatprep.subr.mxu0 0.0
    %1828 = vmatpush1.msra.mxu0 0.0
    %1829 = vmatprep.subr.mxu0 0.0
    %1830 = vmatpush1.msra.mxu0 0.0
    %1831 = vmatprep.subr.mxu0 0.0
    %1832 = vmatpush1.msra.mxu0 0.0
    %1833 = vmatprep.subr.mxu0 0.0
    %1834 = vmatpush1.msra.mxu0 0.0
    %1835 = vmatprep.subr.mxu0 0.0
    %1836 = vmatpush1.msra.mxu0 0.0
    %1837 = vmatprep.mubr.f32.mxu0 0.0
    %1838 = vmatmul.mubr.f32.gmra.mrb[0].mxu0 %v1756
    %v1839 = vpop.f32.mrb[0].mxu0
    %v1840 = vadd.f32 0.0, %v1839
    %v1841 = vpop.f32.mrb[0].mxu0
    %1842 = vdwg.mxu0
    %v1843 = vld [vmem:[#allocation12] sm:$0xff]
    %v1844 = vld [vmem:[#allocation12 + $0x8] sm:$0xff]
    %v1845 = vld [vmem:[#allocation12 + $0x10] sm:$0xff]
    %v1846 = vld [vmem:[#allocation12 + $0x18] sm:$0xff]
    %v1847 = vld [vmem:[#allocation14] sm:$0x1]
    %v1849 = vlaneseq
    %v1850 = vshrl.u32 %v1849, 7
    %v1851 = vsub.s32 0, %v1850
    %v1852 = vrot.slane %v1847, %v1851
    %1854 = vmatprep.subr.mxu0 0.0
    %1855 = vmatpush1.msra.mxu0 %v1843
    %1856 = vmatprep.subr.mxu0 0.0
    %1857 = vmatpush1.msra.mxu0 %v1844
    %1858 = vmatprep.subr.mxu0 0.0
    %1859 = vmatpush1.msra.mxu0 %v1845
    %1860 = vmatprep.subr.mxu0 0.0
    %1861 = vmatpush1.msra.mxu0 %v1846
    %1862 = vmatprep.subr.mxu0 0.0
    %1863 = vmatpush1.msra.mxu0 0.0
    %1864 = vmatprep.subr.mxu0 0.0
    %1865 = vmatpush1.msra.mxu0 0.0
    %1866 = vmatprep.subr.mxu0 0.0
    %1867 = vmatpush1.msra.mxu0 0.0
    %1868 = vmatprep.subr.mxu0 0.0
    %1869 = vmatpush1.msra.mxu0 0.0
    %1870 = vmatprep.subr.mxu0 0.0
    %1871 = vmatpush1.msra.mxu0 0.0
    %1872 = vmatprep.subr.mxu0 0.0
    %1873 = vmatpush1.msra.mxu0 0.0
    %1874 = vmatprep.subr.mxu0 0.0
    %1875 = vmatpush1.msra.mxu0 0.0
    %1876 = vmatprep.subr.mxu0 0.0
    %1877 = vmatpush1.msra.mxu0 0.0
    %1878 = vmatprep.subr.mxu0 0.0
    %1879 = vmatpush1.msra.mxu0 0.0
    %1880 = vmatprep.subr.mxu0 0.0
    %1881 = vmatpush1.msra.mxu0 0.0
    %1882 = vmatprep.subr.mxu0 0.0
    %1883 = vmatpush1.msra.mxu0 0.0
    %1884 = vmatprep.subr.mxu0 0.0
    %1885 = vmatpush1.msra.mxu0 0.0
    %1886 = vmatprep.subr.mxu0 0.0
    %1887 = vmatpush1.msra.mxu0 0.0
    %1888 = vmatprep.subr.mxu0 0.0
    %1889 = vmatpush1.msra.mxu0 0.0
    %1890 = vmatprep.subr.mxu0 0.0
    %1891 = vmatpush1.msra.mxu0 0.0
    %1892 = vmatprep.subr.mxu0 0.0
    %1893 = vmatpush1.msra.mxu0 0.0
    %1894 = vmatprep.subr.mxu0 0.0
    %1895 = vmatpush1.msra.mxu0 0.0
    %1896 = vmatprep.subr.mxu0 0.0
    %1897 = vmatpush1.msra.mxu0 0.0
    %1898 = vmatprep.subr.mxu0 0.0
    %1899 = vmatpush1.msra.mxu0 0.0
    %1900 = vmatprep.subr.mxu0 0.0
    %1901 = vmatpush1.msra.mxu0 0.0
    %1902 = vmatprep.subr.mxu0 0.0
    %1903 = vmatpush1.msra.mxu0 0.0
    %1904 = vmatprep.subr.mxu0 0.0
    %1905 = vmatpush1.msra.mxu0 0.0
    %1906 = vmatprep.subr.mxu0 0.0
    %1907 = vmatpush1.msra.mxu0 0.0
    %1908 = vmatprep.subr.mxu0 0.0
    %1909 = vmatpush1.msra.mxu0 0.0
    %1910 = vmatprep.subr.mxu0 0.0
    %1911 = vmatpush1.msra.mxu0 0.0
    %1912 = vmatprep.subr.mxu0 0.0
    %1913 = vmatpush1.msra.mxu0 0.0
    %1914 = vmatprep.subr.mxu0 0.0
    %1915 = vmatpush1.msra.mxu0 0.0
    %1916 = vmatprep.subr.mxu0 0.0
    %1917 = vmatpush1.msra.mxu0 0.0
    %1918 = vmatprep.mubr.f32.mxu0 0.0
    %1919 = vmatmul.mubr.f32.gmra.mrb[0].mxu0 %v1641
    %v1920 = vpop.f32.mrb[0].mxu0
    %v1921 = vadd.f32 %v1852, %v1920
    %v1922 = vpop.f32.mrb[0].mxu0
    %1923 = vdwg.mxu0
    %v1924 = vadd.f32 %v1840, %v1921
    %v1925 = vxor.u32 %v1924, 2147483648
    %v1926 = vmul.f32 %v1925, 1.442695
    %v1927 = vpow.pop %v1926
    %v1928 = vadd.f32 %v1927, 1.0
    %v1929 = vrcp.pop %v1928
    %v1930 = vmul.f32 1.0, %v1929
    %1932 = vrot.lane.b32.xlu0 %v1921, 64
    %v1933 = vpop.permute.xlu0 %1932
    %v1935 = vmul.f32 %v1930, %v1933
    %1937 = vrot.lane.b32.xlu0 %v1935, 64
    %v1938 = vpop.permute.xlu0 %1937
    %v1940 = vadd.f32 %v1840, %v1938
    %v1941 = vtanh.pop %v1940
    %v1942 = vsub.f32 1.0, %v1930
    %1944 = vrot.lane.b32.xlu0 %v1941, 96
    %v1945 = vpop.permute.xlu0 %1944
    %v1947 = vmul.f32 %v1942, %v1945
    %v1948 = vmul.f32 %v1930, %v1626
    %v1949 = vadd.f32 %v1947, %v1948
    %v1950 = vld [vmem:[#allocation15] sm:$0xff]
    %v1951 = vld [vmem:[#allocation15 + $0x8] sm:$0xff]
    %v1952 = vld [vmem:[#allocation15 + $0x10] sm:$0xff]
    %v1953 = vld [vmem:[#allocation15 + $0x18] sm:$0xff]
    %v1954 = vld [vmem:[#allocation17] sm:$0x1]
    %v1956 = vlaneseq
    %v1957 = vshrl.u32 %v1956, 7
    %v1958 = vsub.s32 0, %v1957
    %v1959 = vrot.slane %v1954, %v1958
    %1962 = vrot.lane.b32.xlu0 %v1949, 96
    %v1963 = vpop.permute.xlu0 %1962
    %v1964 = vsel %vm233, %v1963, 0
    %1966 = vmatprep.subr.mxu0 0.0
    %1967 = vmatpush1.msra.mxu0 %v1950
    %1968 = vmatprep.subr.mxu0 0.0
    %1969 = vmatpush1.msra.mxu0 %v1951
    %1970 = vmatprep.subr.mxu0 0.0
    %1971 = vmatpush1.msra.mxu0 %v1952
    %1972 = vmatprep.subr.mxu0 0.0
    %1973 = vmatpush1.msra.mxu0 %v1953
    %1974 = vmatprep.subr.mxu0 0.0
    %1975 = vmatpush1.msra.mxu0 0.0
    %1976 = vmatprep.subr.mxu0 0.0
    %1977 = vmatpush1.msra.mxu0 0.0
    %1978 = vmatprep.subr.mxu0 0.0
    %1979 = vmatpush1.msra.mxu0 0.0
    %1980 = vmatprep.subr.mxu0 0.0
    %1981 = vmatpush1.msra.mxu0 0.0
    %1982 = vmatprep.subr.mxu0 0.0
    %1983 = vmatpush1.msra.mxu0 0.0
    %1984 = vmatprep.subr.mxu0 0.0
    %1985 = vmatpush1.msra.mxu0 0.0
    %1986 = vmatprep.subr.mxu0 0.0
    %1987 = vmatpush1.msra.mxu0 0.0
    %1988 = vmatprep.subr.mxu0 0.0
    %1989 = vmatpush1.msra.mxu0 0.0
    %1990 = vmatprep.subr.mxu0 0.0
    %1991 = vmatpush1.msra.mxu0 0.0
    %1992 = vmatprep.subr.mxu0 0.0
    %1993 = vmatpush1.msra.mxu0 0.0
    %1994 = vmatprep.subr.mxu0 0.0
    %1995 = vmatpush1.msra.mxu0 0.0
    %1996 = vmatprep.subr.mxu0 0.0
    %1997 = vmatpush1.msra.mxu0 0.0
    %1998 = vmatprep.subr.mxu0 0.0
    %1999 = vmatpush1.msra.mxu0 0.0
    %2000 = vmatprep.subr.mxu0 0.0
    %2001 = vmatpush1.msra.mxu0 0.0
    %2002 = vmatprep.subr.mxu0 0.0
    %2003 = vmatpush1.msra.mxu0 0.0
    %2004 = vmatprep.subr.mxu0 0.0
    %2005 = vmatpush1.msra.mxu0 0.0
    %2006 = vmatprep.subr.mxu0 0.0
    %2007 = vmatpush1.msra.mxu0 0.0
    %2008 = vmatprep.subr.mxu0 0.0
    %2009 = vmatpush1.msra.mxu0 0.0
    %2010 = vmatprep.subr.mxu0 0.0
    %2011 = vmatpush1.msra.mxu0 0.0
    %2012 = vmatprep.subr.mxu0 0.0
    %2013 = vmatpush1.msra.mxu0 0.0
    %2014 = vmatprep.subr.mxu0 0.0
    %2015 = vmatpush1.msra.mxu0 0.0
    %2016 = vmatprep.subr.mxu0 0.0
    %2017 = vmatpush1.msra.mxu0 0.0
    %2018 = vmatprep.subr.mxu0 0.0
    %2019 = vmatpush1.msra.mxu0 0.0
    %2020 = vmatprep.subr.mxu0 0.0
    %2021 = vmatpush1.msra.mxu0 0.0
    %2022 = vmatprep.subr.mxu0 0.0
    %2023 = vmatpush1.msra.mxu0 0.0
    %2024 = vmatprep.subr.mxu0 0.0
    %2025 = vmatpush1.msra.mxu0 0.0
    %2026 = vmatprep.subr.mxu0 0.0
    %2027 = vmatpush1.msra.mxu0 0.0
    %2028 = vmatprep.subr.mxu0 0.0
    %2029 = vmatpush1.msra.mxu0 0.0
    %2030 = vmatprep.mubr.f32.mxu0 0.0
    %2031 = vmatmul.mubr.f32.gmra.mrb[0].mxu0 %v1964
    %v2032 = vpop.f32.mrb[0].mxu0
    %v2033 = vadd.f32 %v1959, %v2032
    %v2034 = vpop.f32.mrb[0].mxu0
    %2035 = vdwg.mxu0
    %s2036 = scalar_lea.vmem [#allocation18], 10
    %2037 = vst [vmem:[%s2036] sm:$0x3] %v2033
    %v2038 = vsel %vm423, %v2033, -inf
    %2039 = vmax.xlane.f32.xlu0 %v2038
    %v2040 = vpop.xlane.xlu0 %2039
    %vm2041 = vcmp.eq.f32.partialorder %v2033, %v2040
    %v2042 = vsel %vm2041, %v122, 128
    %v2043 = vsel %vm423, %v2042, 2147483647
    %v2044 = vand.u32 %v2043, 65535
    %v2045 = vshra.s32 %v2043, 16
    %v2046 = vcvt.s32.f32 %v2044
    %v2047 = vcvt.s32.f32 %v2045
    %2048 = vmin.xlane.f32.xlu0 %v2047
    %v2049 = vpop.xlane.xlu0 %2048
    %vm2050 = vcmp.eq.f32.partialorder %v2047, %v2049
    %v2051 = vsel %vm2050, %v2046, inf
    %2052 = vmin.xlane.f32.xlu0 %v2051
    %v2053 = vpop.xlane.xlu0 %2052
    %v2054 = vcvt.f32.s32 %v2053
    %v2055 = vcvt.f32.s32 %v2049
    %v2056 = vshll.u32 %v2055, 16
    %v2057 = vadd.s32 %v2056, %v2054
    %vm2058 = vcmp.eq.s32.totalorder %v122, %v2057
    %v2059 = vsel %vm2058, 1, 0
    %v2060 = vcvt.s32.f32 %v2059
    %s2061 = scalar_lea.vmem [#allocation6], 10
    %v2062 = vld [vmem:[%s2061] sm:$0x3]
    %2063 = vset.pattern.permute.xlu0 0
    %2064 = vperm.xlu0 %2063, %v2062
    %v2065 = vpop.permute.xlu0 %2064
    %vm2066 = vcmp.eq.s32.totalorder %v122, %v2065
    %v2067 = vsel %vm2066, 1, 0
    %v2068 = vcvt.s32.f32 %v2067
    %s2069 = sadd.s32 %s454, 5
    %s2070 = sld [smem:[#allocation5 + %s2069]]
    %p2071 = scmp.gt.s32.totalorder %s2070, 0
    %s2072 = scalar_select %p2071, 1, 0
    %s2073 = scvt.s32.f32 %s2072
    %v2074 = vstv %s2073
    %v2075 = vmul.f32 %v2074, %v2060
    %s2076 = ssub.f32 1.0, %s2073
    %v2077 = vstv %s2076
    %v2078 = vmul.f32 %v2077, %v2068
    %v2079 = vadd.f32 %v2075, %v2078
    %vm2081 = vcmask 254976
    %2082 = vst.msk [vmem:[#allocation2] sm:$0x3] %vm2081, %v1963
    %2083 = vst [vmem:[#allocation3] sm:$0x3] %v2079
    // Predicated region
    $region62: #{seq2seq_forward.9} parent=1 // pred_check
      _
    $region63: #{seq2seq_forward.9} parent=1 // pred_check_branch
      %2085 = sbr.rel (0) target = $region65
    $region64: #{seq2seq_forward.9} parent=1 // pred_region
      %s2087 = ssub.s32 192, 192
      %2088 = vsyncadd [#allocation8], %s2087
      %s2089 = sshll.u32 [#allocation18], 4
      %s2090 = int_to_ptr.vmem [resolvable:$true] %s2089
      %2095 = dma.vmem_to_hbm [thread:$0]  %s2090, 192, %s8, [#allocation8], 32, 32, 2
    $region65: #{seq2seq_forward.9} parent=1 // pred_fallthru
      _
    // Predicated region
    $region66: #{seq2seq_forward.9} parent=1 // pred_check
      _
    $region67: #{seq2seq_forward.9} parent=1 // pred_check_branch
      %2097 = sbr.rel (0) target = $region69
    $region68: #{seq2seq_forward.9} parent=1 // pred_region
      %2098 = dma.done [#allocation8], 192
    $region69: #{seq2seq_forward.9} parent=1 // pred_fallthru
      _
    %2099 = vsyncpa [#allocation7], 1
    %2100 = vsyncpa [#allocation10], 1
    %2101 = vsyncpa [#allocation13], 1
    %2102 = vsyncpa [#allocation16], 1
    %2103 = vsyncpa [#allocation8], 1

</llo_original>
